<compile_context>
chip_gen: v6e
topology: v6e:2x2x1
jax: 0.10.0
libtpu: 0.0.40
codegen_flags: <defaults>
</compile_context>

<pallas_src>
import math

import jax
import jax.numpy as jnp
from jax import lax
from jax.experimental import pallas as pl
from jax.experimental.pallas import tpu as pltpu


def _make_kernel(L: int, H: int, NH: int, BT: int):
    DH = H // NH
    M = BT * L

    def _softmax(s):
        m = jnp.max(s, axis=-1, keepdims=True)
        e = jnp.exp(s - m)
        return e * pl.reciprocal(jnp.sum(e, axis=-1, keepdims=True), approx=True)

    def _attend(q, k, v, wo, bo_row):
        # q/k/v: (M, H); wo: (H, H) input-major; bo_row: (1, H).
        outs = []
        for bt in range(BT):                      # static unrolled batch-group loop
            r = slice(bt * L, (bt + 1) * L)       # sublane-aligned row slice (L=8k)
            qb, kb, vb = q[r], k[r], v[r]
            acc = jnp.zeros((L, H), jnp.float32)
            for h in range(NH):                   # static unrolled head loop
                c = slice(h * DH, (h + 1) * DH)
                s = lax.dot_general(qb[:, c], kb[:, c],
                                    dimension_numbers=(((1,), (1,)), ((), ())),
                                    preferred_element_type=jnp.float32)   # (L, L)
                p = _softmax(s)
                o = jnp.dot(p, vb[:, c], preferred_element_type=jnp.float32)  # (L, DH)
                # Fold the output projection into the head loop -> no lane concat.
                acc = acc + jnp.dot(o, wo[c, :], preferred_element_type=jnp.float32)
            outs.append(acc)
        attn = outs[0] if BT == 1 else jnp.concatenate(outs, axis=0)
        return attn + bo_row

    def _mha_self(x, wqkv, bqkv_row, wo, bo_row):
        # Single fused (M,H)@(H,3H) projection; Q columns/bias pre-scaled by 1/sqrt(DH).
        qkv = jnp.dot(x, wqkv, preferred_element_type=jnp.float32) + bqkv_row  # (M, 3H)
        return _attend(qkv[:, :H], qkv[:, H:2 * H], qkv[:, 2 * H:], wo, bo_row)

    def _mha_cross(q_in, kv_in, wqkv, bqkv_row, wo, bo_row):
        q = jnp.dot(q_in, wqkv[:, :H],
                    preferred_element_type=jnp.float32) + bqkv_row[:, :H]
        kv = jnp.dot(kv_in, wqkv[:, H:],
                     preferred_element_type=jnp.float32) + bqkv_row[:, H:]
        return _attend(q, kv[:, :H], kv[:, H:], wo, bo_row)

    def _gate(x, w1, b1_row, w2_row, b2_11):
        # Linear(H,H)+ReLU+Linear(H,1)+sigmoid; width-1 head as VPU mul + lane reduce.
        hid = jnp.maximum(
            jnp.dot(x, w1, preferred_element_type=jnp.float32) + b1_row, 0.0)
        logit = jnp.sum(hid * w2_row, axis=-1, keepdims=True) + b2_11        # (M, 1)
        return jax.nn.sigmoid(logit)

    def kernel(img_ref, pc_ref, wqkv_ref, wsq_ref, b_ref, out_ref):
        img = img_ref[...]                        # (M, H)
        pc = pc_ref[...]                          # (M, H)
        b = b_ref[...]                            # (13, 3H) packed bias rows

        img_sa = _mha_self(img, wqkv_ref[0], b[0:1, :], wsq_ref[0], b[3:4, :H])
        pc_sa = _mha_self(pc, wqkv_ref[1], b[1:2, :], wsq_ref[1], b[4:5, :H])
        cross = _mha_cross(img_sa, pc_sa, wqkv_ref[2], b[2:3, :],
                           wsq_ref[2], b[5:6, :H])

        # fc over concat([cross, pc_sa]) == cross @ Wc + pc_sa @ Wp + b
        fused = (jnp.dot(cross, wsq_ref[3], preferred_element_type=jnp.float32)
                 + jnp.dot(pc_sa, wsq_ref[4], preferred_element_type=jnp.float32)
                 + b[6:7, :H])

        iw = _gate(img, wsq_ref[5], b[7:8, :H], b[9:10, :H], b[11:12, 0:1])
        pw = _gate(pc, wsq_ref[6], b[8:9, :H], b[10:11, :H], b[12:13, 0:1])

        out_ref[...] = fused + iw * img + pw * pc

    return kernel


def adaptive_fusion_forward_batch_first(image_feats, pointcloud_feats, params, *,
                                        num_heads, batch_tile=None):
    """image_feats / pointcloud_feats: (B, L, H) float32 (batch-first)."""
    B, L, H = image_feats.shape
    assert H % num_heads == 0
    DH = H // num_heads
    if batch_tile is None:
        # >= 2 parallel grid steps whenever B >= 2 (keeps both v7x TensorCores busy);
        # pass batch_tile=B on v5e/v6e to do the whole batch in one step.
        batch_tile = max(1, B // 2)
    assert B % batch_tile == 0
    assert batch_tile == B or (batch_tile * L) % 8 == 0, "row block must be 8-aligned"
    M = batch_tile * L
    f32 = jnp.float32
    scale = 1.0 / math.sqrt(DH)

    # Batch-major token rows (free, contiguous reshape of batch-first input).
    img2 = image_feats.astype(f32).reshape(B * L, H)
    pc2 = pointcloud_feats.astype(f32).reshape(B * L, H)

    def prep_qkv(p):
        wqkv, bqkv, _, _ = p                       # (3H, H), (3H,)
        w = jnp.asarray(wqkv, f32).T               # (H, 3H) columns [Q | K | V]
        w = w.at[:, :H].multiply(scale)            # fold 1/sqrt(DH) into Q weights
        bias = jnp.asarray(bqkv, f32)
        bias = bias.at[:H].multiply(scale)         # ... and into the Q bias
        return w, bias

    def wo_bo(p):
        return jnp.asarray(p[2], f32).T, jnp.asarray(p[3], f32)

    wq_i, bq_i = prep_qkv(params["image_attn"])
    wq_p, bq_p = prep_qkv(params["pointcloud_attn"])
    wq_x, bq_x = prep_qkv(params["cross_attn"])
    w_qkv = jnp.stack([wq_i, wq_p, wq_x], axis=0)                      # (3, H, 3H)

    wo_i, bo_i = wo_bo(params["image_attn"])
    wo_p, bo_p = wo_bo(params["pointcloud_attn"])
    wo_x, bo_x = wo_bo(params["cross_attn"])
    fc_w, fc_b = params["fc"]                                          # (H, 2H), (H,)
    fc_c = jnp.asarray(fc_w, f32)[:, :H].T                             # cross half
    fc_p = jnp.asarray(fc_w, f32)[:, H:].T                             # pointcloud half
    gi_w1, gi_b1, gi_w2, gi_b2 = [jnp.asarray(a, f32) for a in params["image_weighting"]]
    gp_w1, gp_b1, gp_w2, gp_b2 = [jnp.asarray(a, f32)
                                  for a in params["pointcloud_weighting"]]
    w_sq = jnp.stack([wo_i, wo_p, wo_x, fc_c, fc_p, gi_w1.T, gp_w1.T], axis=0)  # (7,H,H)

    def row(v):                                    # (H,) -> zero-padded (3H,) row
        return jnp.concatenate([jnp.asarray(v, f32), jnp.zeros((2 * H,), f32)])

    def srow(s):                                   # scalar -> (3H,) row, value at lane 0
        return jnp.concatenate([jnp.ravel(jnp.asarray(s, f32))[:1],
                                jnp.zeros((3 * H - 1,), f32)])

    b_all = jnp.stack([
        bq_i, bq_p, bq_x,                          # rows 0..2: fused qkv biases
        row(bo_i), row(bo_p), row(bo_x),           # rows 3..5: out-proj biases
        row(fc_b),                                 # row 6: fc bias
        row(gi_b1), row(gp_b1),                    # rows 7..8: gate hidden biases
        row(gi_w2.reshape(H)), row(gp_w2.reshape(H)),   # rows 9..10: gate head weights
        srow(gi_b2), srow(gp_b2),                  # rows 11..12: gate head biases
    ], axis=0)                                     # (13, 3H)

    kernel = _make_kernel(L, H, num_heads, batch_tile)
    out2 = pl.pallas_call(
        kernel,
        out_shape=jax.ShapeDtypeStruct((B * L, H), f32),
        grid=(B // batch_tile,),
        in_specs=[
            pl.BlockSpec((M, H), lambda b: (b, 0)),            # image rows
            pl.BlockSpec((M, H), lambda b: (b, 0)),            # pointcloud rows
            pl.BlockSpec(w_qkv.shape, lambda b: (0, 0, 0)),    # resident weight slabs
            pl.BlockSpec(w_sq.shape, lambda b: (0, 0, 0)),
            pl.BlockSpec(b_all.shape, lambda b: (0, 0)),
        ],
        out_specs=pl.BlockSpec((M, H), lambda b: (b, 0)),
        compiler_params=pltpu.CompilerParams(
            dimension_semantics=("parallel",)),
    )(img2, pc2, w_qkv, w_sq, b_all)
    return out2.reshape(B, L, H)


def adaptive_fusion_forward(image_feats, pointcloud_feats, params, *, num_heads,
                            batch_tile=None):
    """Seq-first (L, B, H) layout, matching nn.MultiheadAttention's default."""
    out_bf = adaptive_fusion_forward_batch_first(
        jnp.transpose(image_feats, (1, 0, 2)),
        jnp.transpose(pointcloud_feats, (1, 0, 2)),
        params, num_heads=num_heads, batch_tile=batch_tile)
    return jnp.transpose(out_bf, (1, 0, 2))


# ----------------------------- pure-JAX reference -----------------------------

def _mha_ref(q_in, kv_in, wqkv, bqkv, wo, bo, nh):
    Lq, B, H = q_in.shape
    Lk = kv_in.shape[0]
    dh = H // nh
    q = q_in @ wqkv[:H].T + bqkv[:H]
    k = kv_in @ wqkv[H:2 * H].T + bqkv[H:2 * H]
    v = kv_in @ wqkv[2 * H:].T + bqkv[2 * H:]

    def heads(x, Lx):
        return x.reshape(Lx, B, nh, dh).transpose(1, 2, 0, 3)   # (B, nh, L, dh)

    qh, kh, vh = heads(q, Lq), heads(k, Lk), heads(v, Lk)
    s = jnp.einsum("bhqd,bhkd->bhqk", qh, kh) / math.sqrt(dh)
    p = jax.nn.softmax(s, axis=-1)
    o = jnp.einsum("bhqk,bhkd->bhqd", p, vh)
    o = o.transpose(2, 0, 1, 3).reshape(Lq, B, H)
    return o @ wo.T + bo


def _reference(img, pc, params, nh):
    img_sa = _mha_ref(img, img, *params["image_attn"], nh)
    pc_sa = _mha_ref(pc, pc, *params["pointcloud_attn"], nh)
    cross = _mha_ref(img_sa, pc_sa, *params["cross_attn"], nh)
    fc_w, fc_b = params["fc"]
    fused = jnp.concatenate([cross, pc_sa], axis=-1) @ fc_w.T + fc_b
    iw1, ib1, iw2, ib2 = params["image_weighting"]
    pw1, pb1, pw2, pb2 = params["pointcloud_weighting"]
    iw = jax.nn.sigmoid(jnp.maximum(img @ iw1.T + ib1, 0.0) @ iw2.T + ib2)
    pw = jax.nn.sigmoid(jnp.maximum(pc @ pw1.T + pb1, 0.0) @ pw2.T + pb2)
    adaptive = iw * img + pw * pc
    return fused + adaptive


def _init_params(key, H):
    ks = list(jax.random.split(key, 24))
    it = iter(ks)

    def unif(shape, fan_in):
        bound = 1.0 / math.sqrt(fan_in)
        return jax.random.uniform(next(it), shape, jnp.float32, -bound, bound)

    def attn_params():
        return (unif((3 * H, H), H), unif((3 * H,), H),
                unif((H, H), H), unif((H,), H))

    def gate_params():
        return (unif((H, H), H), unif((H,), H),
                unif((1, H), H), unif((1,), H))

    return {
        "image_attn": attn_params(),
        "pointcloud_attn": attn_params(),
        "cross_attn": attn_params(),
        "fc": (unif((H, 2 * H), 2 * H), unif((H,), 2 * H)),
        "image_weighting": gate_params(),
        "pointcloud_weighting": gate_params(),
    }


if __name__ == "__main__":
    L, B, H, NH = 8, 2, 32, 4   # seq=8, batch=2, hidden=32, heads=4

    key = jax.random.PRNGKey(0)
    k_img, k_pc, k_par = jax.random.split(key, 3)
    image_feats = jax.random.normal(k_img, (L, B, H), dtype=jnp.float32)
    pointcloud_feats = jax.random.normal(k_pc, (L, B, H), dtype=jnp.float32)
    params = _init_params(k_par, H)

    out = adaptive_fusion_forward(image_feats, pointcloud_feats, params, num_heads=NH)
    out = jax.block_until_ready(out)

    # Reference in f32-exact matmul precision (scoped here only, no global override).
    with jax.default_matmul_precision("highest"):
        ref = jax.block_until_ready(
            _reference(image_feats, pointcloud_feats, params, NH))

    assert out.shape == (L, B, H)
    # Tolerance loosened from 3e-4 to 2e-3 because the kernel's softmax uses the
    # approximate EUP reciprocal (pl.reciprocal(approx=True)).
    assert jnp.allclose(out, ref, atol=2e-3, rtol=2e-3), "mismatch vs reference"

    print("KERNEL_OK")
</pallas_src>

<mosaic_0001>
module attributes {stable_mosaic.version = 11 : i64} {
  func.func @kernel(%arg0: i32, %arg1: memref<8x32xf32, #tpu.memory_space<vmem>>, %arg2: memref<8x32xf32, #tpu.memory_space<vmem>>, %arg3: memref<3x32x96xf32, #tpu.memory_space<vmem>>, %arg4: memref<7x32x32xf32, #tpu.memory_space<vmem>>, %arg5: memref<13x96xf32, #tpu.memory_space<vmem>>, %arg6: memref<8x32xf32, #tpu.memory_space<vmem>>) attributes {dimension_semantics = [#tpu.dimension_semantics<parallel>], iteration_bounds = array<i64: 2>, scalar_prefetch = 0 : i64, scratch_operands = 0 : i64, tpu.core_type = #tpu.core_type<tc>, window_params = [{transform_indices = @transform_0, window_bounds = array<i64: 8, 32>}, {transform_indices = @transform_1, window_bounds = array<i64: 8, 32>}, {pipeline_mode = #tpu.pipeline_mode<synchronous>, transform_indices = @transform_2, window_bounds = array<i64: 3, 32, 96>}, {pipeline_mode = #tpu.pipeline_mode<synchronous>, transform_indices = @transform_3, window_bounds = array<i64: 7, 32, 32>}, {pipeline_mode = #tpu.pipeline_mode<synchronous>, transform_indices = @transform_4, window_bounds = array<i64: 13, 96>}, {transform_indices = @transform_5, window_bounds = array<i64: 8, 32>}]} {
    %c0 = arith.constant 0 : index
    %c0_0 = arith.constant 0 : index
    %0 = vector.load %arg1[%c0, %c0_0] : memref<8x32xf32, #tpu.memory_space<vmem>>, vector<8x32xf32>
    %c0_1 = arith.constant 0 : index
    %c0_2 = arith.constant 0 : index
    %1 = vector.load %arg2[%c0_1, %c0_2] : memref<8x32xf32, #tpu.memory_space<vmem>>, vector<8x32xf32>
    %c0_3 = arith.constant 0 : index
    %c0_4 = arith.constant 0 : index
    %2 = vector.load %arg5[%c0_3, %c0_4] : memref<13x96xf32, #tpu.memory_space<vmem>>, vector<13x96xf32>
    %c0_5 = arith.constant 0 : index
    %c0_6 = arith.constant 0 : index
    %c0_7 = arith.constant 0 : index
    %3 = vector.load %arg3[%c0_5, %c0_6, %c0_7] : memref<3x32x96xf32, #tpu.memory_space<vmem>>, vector<1x32x96xf32>
    %4 = vector.shape_cast %3 : vector<1x32x96xf32> to vector<32x96xf32>
    %5 = vector.extract_strided_slice %2 {offsets = [0, 0], sizes = [1, 96], strides = [1, 1]} : vector<13x96xf32> to vector<1x96xf32>
    %c0_8 = arith.constant 0 : index
    %c0_9 = arith.constant 0 : index
    %c0_10 = arith.constant 0 : index
    %6 = vector.load %arg4[%c0_8, %c0_9, %c0_10] : memref<7x32x32xf32, #tpu.memory_space<vmem>>, vector<1x32x32xf32>
    %7 = vector.shape_cast %6 : vector<1x32x32xf32> to vector<32x32xf32>
    %8 = vector.extract_strided_slice %2 {offsets = [3, 0], sizes = [1, 32], strides = [1, 1]} : vector<13x96xf32> to vector<1x32xf32>
    %cst = arith.constant dense<0.000000e+00> : vector<8x96xf32>
    %9 = tpu.matmul %0, %4, %cst {dimension_numbers = #tpu.dot_dimension_numbers<[1], [0], [0], [1], [0, 0, 1, 1], [], []>} : vector<8x32xf32>, vector<32x96xf32>, vector<8x96xf32> -> vector<8x96xf32>
    %10 = vector.broadcast %5 : vector<1x96xf32> to vector<8x96xf32>
    %11 = arith.addf %9, %10 : vector<8x96xf32>
    %12 = vector.extract_strided_slice %11 {offsets = [0, 0], sizes = [8, 32], strides = [1, 1]} : vector<8x96xf32> to vector<8x32xf32>
    %13 = vector.extract_strided_slice %11 {offsets = [0, 32], sizes = [8, 32], strides = [1, 1]} : vector<8x96xf32> to vector<8x32xf32>
    %14 = vector.extract_strided_slice %11 {offsets = [0, 64], sizes = [8, 32], strides = [1, 1]} : vector<8x96xf32> to vector<8x32xf32>
    %cst_11 = arith.constant 0.000000e+00 : f32
    %15 = vector.broadcast %cst_11 : f32 to vector<8x32xf32>
    %16 = vector.extract_strided_slice %12 {offsets = [0, 0], sizes = [8, 8], strides = [1, 1]} : vector<8x32xf32> to vector<8x8xf32>
    %17 = vector.extract_strided_slice %13 {offsets = [0, 0], sizes = [8, 8], strides = [1, 1]} : vector<8x32xf32> to vector<8x8xf32>
    %cst_12 = arith.constant dense<0.000000e+00> : vector<8x8xf32>
    %18 = tpu.matmul %16, %17, %cst_12 {dimension_numbers = #tpu.dot_dimension_numbers<[1], [1], [0], [0], [0, 0, 1, 0], [], []>} : vector<8x8xf32>, vector<8x8xf32>, vector<8x8xf32> -> vector<8x8xf32>
    %cst_13 = arith.constant dense<0xFF800000> : vector<8xf32>
    %19 = vector.multi_reduction <maximumf>, %18, %cst_13 [1] : vector<8x8xf32> to vector<8xf32>
    %20 = vector.shape_cast %19 : vector<8xf32> to vector<8x1xf32>
    %21 = vector.broadcast %20 : vector<8x1xf32> to vector<8x8xf32>
    %22 = arith.subf %18, %21 : vector<8x8xf32>
    %23 = math.exp %22 : vector<8x8xf32>
    %cst_14 = arith.constant dense<0.000000e+00> : vector<8xf32>
    %24 = vector.multi_reduction <add>, %23, %cst_14 [1] : vector<8x8xf32> to vector<8xf32>
    %25 = vector.shape_cast %24 : vector<8xf32> to vector<8x1xf32>
    %26 = tpu.reciprocal %25 {approx = true} : vector<8x1xf32> -> vector<8x1xf32>
    %27 = vector.broadcast %26 : vector<8x1xf32> to vector<8x8xf32>
    %28 = arith.mulf %23, %27 : vector<8x8xf32>
    %29 = vector.extract_strided_slice %14 {offsets = [0, 0], sizes = [8, 8], strides = [1, 1]} : vector<8x32xf32> to vector<8x8xf32>
    %cst_15 = arith.constant dense<0.000000e+00> : vector<8x8xf32>
    %30 = tpu.matmul %28, %29, %cst_15 {dimension_numbers = #tpu.dot_dimension_numbers<[1], [0], [0], [1], [0, 0, 1, 1], [], []>} : vector<8x8xf32>, vector<8x8xf32>, vector<8x8xf32> -> vector<8x8xf32>
    %31 = vector.extract_strided_slice %7 {offsets = [0, 0], sizes = [8, 32], strides = [1, 1]} : vector<32x32xf32> to vector<8x32xf32>
    %cst_16 = arith.constant dense<0.000000e+00> : vector<8x32xf32>
    %32 = tpu.matmul %30, %31, %cst_16 {dimension_numbers = #tpu.dot_dimension_numbers<[1], [0], [0], [1], [0, 0, 1, 1], [], []>} : vector<8x8xf32>, vector<8x32xf32>, vector<8x32xf32> -> vector<8x32xf32>
    %33 = arith.addf %15, %32 : vector<8x32xf32>
    %34 = vector.extract_strided_slice %12 {offsets = [0, 8], sizes = [8, 8], strides = [1, 1]} : vector<8x32xf32> to vector<8x8xf32>
    %35 = vector.extract_strided_slice %13 {offsets = [0, 8], sizes = [8, 8], strides = [1, 1]} : vector<8x32xf32> to vector<8x8xf32>
    %cst_17 = arith.constant dense<0.000000e+00> : vector<8x8xf32>
    %36 = tpu.matmul %34, %35, %cst_17 {dimension_numbers = #tpu.dot_dimension_numbers<[1], [1], [0], [0], [0, 0, 1, 0], [], []>} : vector<8x8xf32>, vector<8x8xf32>, vector<8x8xf32> -> vector<8x8xf32>
    %cst_18 = arith.constant dense<0xFF800000> : vector<8xf32>
    %37 = vector.multi_reduction <maximumf>, %36, %cst_18 [1] : vector<8x8xf32> to vector<8xf32>
    %38 = vector.shape_cast %37 : vector<8xf32> to vector<8x1xf32>
    %39 = vector.broadcast %38 : vector<8x1xf32> to vector<8x8xf32>
    %40 = arith.subf %36, %39 : vector<8x8xf32>
    %41 = math.exp %40 : vector<8x8xf32>
    %cst_19 = arith.constant dense<0.000000e+00> : vector<8xf32>
    %42 = vector.multi_reduction <add>, %41, %cst_19 [1] : vector<8x8xf32> to vector<8xf32>
    %43 = vector.shape_cast %42 : vector<8xf32> to vector<8x1xf32>
    %44 = tpu.reciprocal %43 {approx = true} : vector<8x1xf32> -> vector<8x1xf32>
    %45 = vector.broadcast %44 : vector<8x1xf32> to vector<8x8xf32>
    %46 = arith.mulf %41, %45 : vector<8x8xf32>
    %47 = vector.extract_strided_slice %14 {offsets = [0, 8], sizes = [8, 8], strides = [1, 1]} : vector<8x32xf32> to vector<8x8xf32>
    %cst_20 = arith.constant dense<0.000000e+00> : vector<8x8xf32>
    %48 = tpu.matmul %46, %47, %cst_20 {dimension_numbers = #tpu.dot_dimension_numbers<[1], [0], [0], [1], [0, 0, 1, 1], [], []>} : vector<8x8xf32>, vector<8x8xf32>, vector<8x8xf32> -> vector<8x8xf32>
    %49 = vector.extract_strided_slice %7 {offsets = [8, 0], sizes = [8, 32], strides = [1, 1]} : vector<32x32xf32> to vector<8x32xf32>
    %cst_21 = arith.constant dense<0.000000e+00> : vector<8x32xf32>
    %50 = tpu.matmul %48, %49, %cst_21 {dimension_numbers = #tpu.dot_dimension_numbers<[1], [0], [0], [1], [0, 0, 1, 1], [], []>} : vector<8x8xf32>, vector<8x32xf32>, vector<8x32xf32> -> vector<8x32xf32>
    %51 = arith.addf %33, %50 : vector<8x32xf32>
    %52 = vector.extract_strided_slice %12 {offsets = [0, 16], sizes = [8, 8], strides = [1, 1]} : vector<8x32xf32> to vector<8x8xf32>
    %53 = vector.extract_strided_slice %13 {offsets = [0, 16], sizes = [8, 8], strides = [1, 1]} : vector<8x32xf32> to vector<8x8xf32>
    %cst_22 = arith.constant dense<0.000000e+00> : vector<8x8xf32>
    %54 = tpu.matmul %52, %53, %cst_22 {dimension_numbers = #tpu.dot_dimension_numbers<[1], [1], [0], [0], [0, 0, 1, 0], [], []>} : vector<8x8xf32>, vector<8x8xf32>, vector<8x8xf32> -> vector<8x8xf32>
    %cst_23 = arith.constant dense<0xFF800000> : vector<8xf32>
    %55 = vector.multi_reduction <maximumf>, %54, %cst_23 [1] : vector<8x8xf32> to vector<8xf32>
    %56 = vector.shape_cast %55 : vector<8xf32> to vector<8x1xf32>
    %57 = vector.broadcast %56 : vector<8x1xf32> to vector<8x8xf32>
    %58 = arith.subf %54, %57 : vector<8x8xf32>
    %59 = math.exp %58 : vector<8x8xf32>
    %cst_24 = arith.constant dense<0.000000e+00> : vector<8xf32>
    %60 = vector.multi_reduction <add>, %59, %cst_24 [1] : vector<8x8xf32> to vector<8xf32>
    %61 = vector.shape_cast %60 : vector<8xf32> to vector<8x1xf32>
    %62 = tpu.reciprocal %61 {approx = true} : vector<8x1xf32> -> vector<8x1xf32>
    %63 = vector.broadcast %62 : vector<8x1xf32> to vector<8x8xf32>
    %64 = arith.mulf %59, %63 : vector<8x8xf32>
    %65 = vector.extract_strided_slice %14 {offsets = [0, 16], sizes = [8, 8], strides = [1, 1]} : vector<8x32xf32> to vector<8x8xf32>
    %cst_25 = arith.constant dense<0.000000e+00> : vector<8x8xf32>
    %66 = tpu.matmul %64, %65, %cst_25 {dimension_numbers = #tpu.dot_dimension_numbers<[1], [0], [0], [1], [0, 0, 1, 1], [], []>} : vector<8x8xf32>, vector<8x8xf32>, vector<8x8xf32> -> vector<8x8xf32>
    %67 = vector.extract_strided_slice %7 {offsets = [16, 0], sizes = [8, 32], strides = [1, 1]} : vector<32x32xf32> to vector<8x32xf32>
    %cst_26 = arith.constant dense<0.000000e+00> : vector<8x32xf32>
    %68 = tpu.matmul %66, %67, %cst_26 {dimension_numbers = #tpu.dot_dimension_numbers<[1], [0], [0], [1], [0, 0, 1, 1], [], []>} : vector<8x8xf32>, vector<8x32xf32>, vector<8x32xf32> -> vector<8x32xf32>
    %69 = arith.addf %51, %68 : vector<8x32xf32>
    %70 = vector.extract_strided_slice %12 {offsets = [0, 24], sizes = [8, 8], strides = [1, 1]} : vector<8x32xf32> to vector<8x8xf32>
    %71 = vector.extract_strided_slice %13 {offsets = [0, 24], sizes = [8, 8], strides = [1, 1]} : vector<8x32xf32> to vector<8x8xf32>
    %cst_27 = arith.constant dense<0.000000e+00> : vector<8x8xf32>
    %72 = tpu.matmul %70, %71, %cst_27 {dimension_numbers = #tpu.dot_dimension_numbers<[1], [1], [0], [0], [0, 0, 1, 0], [], []>} : vector<8x8xf32>, vector<8x8xf32>, vector<8x8xf32> -> vector<8x8xf32>
    %cst_28 = arith.constant dense<0xFF800000> : vector<8xf32>
    %73 = vector.multi_reduction <maximumf>, %72, %cst_28 [1] : vector<8x8xf32> to vector<8xf32>
    %74 = vector.shape_cast %73 : vector<8xf32> to vector<8x1xf32>
    %75 = vector.broadcast %74 : vector<8x1xf32> to vector<8x8xf32>
    %76 = arith.subf %72, %75 : vector<8x8xf32>
    %77 = math.exp %76 : vector<8x8xf32>
    %cst_29 = arith.constant dense<0.000000e+00> : vector<8xf32>
    %78 = vector.multi_reduction <add>, %77, %cst_29 [1] : vector<8x8xf32> to vector<8xf32>
    %79 = vector.shape_cast %78 : vector<8xf32> to vector<8x1xf32>
    %80 = tpu.reciprocal %79 {approx = true} : vector<8x1xf32> -> vector<8x1xf32>
    %81 = vector.broadcast %80 : vector<8x1xf32> to vector<8x8xf32>
    %82 = arith.mulf %77, %81 : vector<8x8xf32>
    %83 = vector.extract_strided_slice %14 {offsets = [0, 24], sizes = [8, 8], strides = [1, 1]} : vector<8x32xf32> to vector<8x8xf32>
    %cst_30 = arith.constant dense<0.000000e+00> : vector<8x8xf32>
    %84 = tpu.matmul %82, %83, %cst_30 {dimension_numbers = #tpu.dot_dimension_numbers<[1], [0], [0], [1], [0, 0, 1, 1], [], []>} : vector<8x8xf32>, vector<8x8xf32>, vector<8x8xf32> -> vector<8x8xf32>
    %85 = vector.extract_strided_slice %7 {offsets = [24, 0], sizes = [8, 32], strides = [1, 1]} : vector<32x32xf32> to vector<8x32xf32>
    %cst_31 = arith.constant dense<0.000000e+00> : vector<8x32xf32>
    %86 = tpu.matmul %84, %85, %cst_31 {dimension_numbers = #tpu.dot_dimension_numbers<[1], [0], [0], [1], [0, 0, 1, 1], [], []>} : vector<8x8xf32>, vector<8x32xf32>, vector<8x32xf32> -> vector<8x32xf32>
    %87 = arith.addf %69, %86 : vector<8x32xf32>
    %88 = vector.broadcast %8 : vector<1x32xf32> to vector<8x32xf32>
    %89 = arith.addf %87, %88 : vector<8x32xf32>
    %c1 = arith.constant 1 : index
    %c0_32 = arith.constant 0 : index
    %c0_33 = arith.constant 0 : index
    %90 = vector.load %arg3[%c1, %c0_32, %c0_33] : memref<3x32x96xf32, #tpu.memory_space<vmem>>, vector<1x32x96xf32>
    %91 = vector.shape_cast %90 : vector<1x32x96xf32> to vector<32x96xf32>
    %92 = vector.extract_strided_slice %2 {offsets = [1, 0], sizes = [1, 96], strides = [1, 1]} : vector<13x96xf32> to vector<1x96xf32>
    %c1_34 = arith.constant 1 : index
    %c0_35 = arith.constant 0 : index
    %c0_36 = arith.constant 0 : index
    %93 = vector.load %arg4[%c1_34, %c0_35, %c0_36] : memref<7x32x32xf32, #tpu.memory_space<vmem>>, vector<1x32x32xf32>
    %94 = vector.shape_cast %93 : vector<1x32x32xf32> to vector<32x32xf32>
    %95 = vector.extract_strided_slice %2 {offsets = [4, 0], sizes = [1, 32], strides = [1, 1]} : vector<13x96xf32> to vector<1x32xf32>
    %cst_37 = arith.constant dense<0.000000e+00> : vector<8x96xf32>
    %96 = tpu.matmul %1, %91, %cst_37 {dimension_numbers = #tpu.dot_dimension_numbers<[1], [0], [0], [1], [0, 0, 1, 1], [], []>} : vector<8x32xf32>, vector<32x96xf32>, vector<8x96xf32> -> vector<8x96xf32>
    %97 = vector.broadcast %92 : vector<1x96xf32> to vector<8x96xf32>
    %98 = arith.addf %96, %97 : vector<8x96xf32>
    %99 = vector.extract_strided_slice %98 {offsets = [0, 0], sizes = [8, 32], strides = [1, 1]} : vector<8x96xf32> to vector<8x32xf32>
    %100 = vector.extract_strided_slice %98 {offsets = [0, 32], sizes = [8, 32], strides = [1, 1]} : vector<8x96xf32> to vector<8x32xf32>
    %101 = vector.extract_strided_slice %98 {offsets = [0, 64], sizes = [8, 32], strides = [1, 1]} : vector<8x96xf32> to vector<8x32xf32>
    %cst_38 = arith.constant 0.000000e+00 : f32
    %102 = vector.broadcast %cst_38 : f32 to vector<8x32xf32>
    %103 = vector.extract_strided_slice %99 {offsets = [0, 0], sizes = [8, 8], strides = [1, 1]} : vector<8x32xf32> to vector<8x8xf32>
    %104 = vector.extract_strided_slice %100 {offsets = [0, 0], sizes = [8, 8], strides = [1, 1]} : vector<8x32xf32> to vector<8x8xf32>
    %cst_39 = arith.constant dense<0.000000e+00> : vector<8x8xf32>
    %105 = tpu.matmul %103, %104, %cst_39 {dimension_numbers = #tpu.dot_dimension_numbers<[1], [1], [0], [0], [0, 0, 1, 0], [], []>} : vector<8x8xf32>, vector<8x8xf32>, vector<8x8xf32> -> vector<8x8xf32>
    %cst_40 = arith.constant dense<0xFF800000> : vector<8xf32>
    %106 = vector.multi_reduction <maximumf>, %105, %cst_40 [1] : vector<8x8xf32> to vector<8xf32>
    %107 = vector.shape_cast %106 : vector<8xf32> to vector<8x1xf32>
    %108 = vector.broadcast %107 : vector<8x1xf32> to vector<8x8xf32>
    %109 = arith.subf %105, %108 : vector<8x8xf32>
    %110 = math.exp %109 : vector<8x8xf32>
    %cst_41 = arith.constant dense<0.000000e+00> : vector<8xf32>
    %111 = vector.multi_reduction <add>, %110, %cst_41 [1] : vector<8x8xf32> to vector<8xf32>
    %112 = vector.shape_cast %111 : vector<8xf32> to vector<8x1xf32>
    %113 = tpu.reciprocal %112 {approx = true} : vector<8x1xf32> -> vector<8x1xf32>
    %114 = vector.broadcast %113 : vector<8x1xf32> to vector<8x8xf32>
    %115 = arith.mulf %110, %114 : vector<8x8xf32>
    %116 = vector.extract_strided_slice %101 {offsets = [0, 0], sizes = [8, 8], strides = [1, 1]} : vector<8x32xf32> to vector<8x8xf32>
    %cst_42 = arith.constant dense<0.000000e+00> : vector<8x8xf32>
    %117 = tpu.matmul %115, %116, %cst_42 {dimension_numbers = #tpu.dot_dimension_numbers<[1], [0], [0], [1], [0, 0, 1, 1], [], []>} : vector<8x8xf32>, vector<8x8xf32>, vector<8x8xf32> -> vector<8x8xf32>
    %118 = vector.extract_strided_slice %94 {offsets = [0, 0], sizes = [8, 32], strides = [1, 1]} : vector<32x32xf32> to vector<8x32xf32>
    %cst_43 = arith.constant dense<0.000000e+00> : vector<8x32xf32>
    %119 = tpu.matmul %117, %118, %cst_43 {dimension_numbers = #tpu.dot_dimension_numbers<[1], [0], [0], [1], [0, 0, 1, 1], [], []>} : vector<8x8xf32>, vector<8x32xf32>, vector<8x32xf32> -> vector<8x32xf32>
    %120 = arith.addf %102, %119 : vector<8x32xf32>
    %121 = vector.extract_strided_slice %99 {offsets = [0, 8], sizes = [8, 8], strides = [1, 1]} : vector<8x32xf32> to vector<8x8xf32>
    %122 = vector.extract_strided_slice %100 {offsets = [0, 8], sizes = [8, 8], strides = [1, 1]} : vector<8x32xf32> to vector<8x8xf32>
    %cst_44 = arith.constant dense<0.000000e+00> : vector<8x8xf32>
    %123 = tpu.matmul %121, %122, %cst_44 {dimension_numbers = #tpu.dot_dimension_numbers<[1], [1], [0], [0], [0, 0, 1, 0], [], []>} : vector<8x8xf32>, vector<8x8xf32>, vector<8x8xf32> -> vector<8x8xf32>
    %cst_45 = arith.constant dense<0xFF800000> : vector<8xf32>
    %124 = vector.multi_reduction <maximumf>, %123, %cst_45 [1] : vector<8x8xf32> to vector<8xf32>
    %125 = vector.shape_cast %124 : vector<8xf32> to vector<8x1xf32>
    %126 = vector.broadcast %125 : vector<8x1xf32> to vector<8x8xf32>
    %127 = arith.subf %123, %126 : vector<8x8xf32>
    %128 = math.exp %127 : vector<8x8xf32>
    %cst_46 = arith.constant dense<0.000000e+00> : vector<8xf32>
    %129 = vector.multi_reduction <add>, %128, %cst_46 [1] : vector<8x8xf32> to vector<8xf32>
    %130 = vector.shape_cast %129 : vector<8xf32> to vector<8x1xf32>
    %131 = tpu.reciprocal %130 {approx = true} : vector<8x1xf32> -> vector<8x1xf32>
    %132 = vector.broadcast %131 : vector<8x1xf32> to vector<8x8xf32>
    %133 = arith.mulf %128, %132 : vector<8x8xf32>
    %134 = vector.extract_strided_slice %101 {offsets = [0, 8], sizes = [8, 8], strides = [1, 1]} : vector<8x32xf32> to vector<8x8xf32>
    %cst_47 = arith.constant dense<0.000000e+00> : vector<8x8xf32>
    %135 = tpu.matmul %133, %134, %cst_47 {dimension_numbers = #tpu.dot_dimension_numbers<[1], [0], [0], [1], [0, 0, 1, 1], [], []>} : vector<8x8xf32>, vector<8x8xf32>, vector<8x8xf32> -> vector<8x8xf32>
    %136 = vector.extract_strided_slice %94 {offsets = [8, 0], sizes = [8, 32], strides = [1, 1]} : vector<32x32xf32> to vector<8x32xf32>
    %cst_48 = arith.constant dense<0.000000e+00> : vector<8x32xf32>
    %137 = tpu.matmul %135, %136, %cst_48 {dimension_numbers = #tpu.dot_dimension_numbers<[1], [0], [0], [1], [0, 0, 1, 1], [], []>} : vector<8x8xf32>, vector<8x32xf32>, vector<8x32xf32> -> vector<8x32xf32>
    %138 = arith.addf %120, %137 : vector<8x32xf32>
    %139 = vector.extract_strided_slice %99 {offsets = [0, 16], sizes = [8, 8], strides = [1, 1]} : vector<8x32xf32> to vector<8x8xf32>
    %140 = vector.extract_strided_slice %100 {offsets = [0, 16], sizes = [8, 8], strides = [1, 1]} : vector<8x32xf32> to vector<8x8xf32>
    %cst_49 = arith.constant dense<0.000000e+00> : vector<8x8xf32>
    %141 = tpu.matmul %139, %140, %cst_49 {dimension_numbers = #tpu.dot_dimension_numbers<[1], [1], [0], [0], [0, 0, 1, 0], [], []>} : vector<8x8xf32>, vector<8x8xf32>, vector<8x8xf32> -> vector<8x8xf32>
    %cst_50 = arith.constant dense<0xFF800000> : vector<8xf32>
    %142 = vector.multi_reduction <maximumf>, %141, %cst_50 [1] : vector<8x8xf32> to vector<8xf32>
    %143 = vector.shape_cast %142 : vector<8xf32> to vector<8x1xf32>
    %144 = vector.broadcast %143 : vector<8x1xf32> to vector<8x8xf32>
    %145 = arith.subf %141, %144 : vector<8x8xf32>
    %146 = math.exp %145 : vector<8x8xf32>
    %cst_51 = arith.constant dense<0.000000e+00> : vector<8xf32>
    %147 = vector.multi_reduction <add>, %146, %cst_51 [1] : vector<8x8xf32> to vector<8xf32>
    %148 = vector.shape_cast %147 : vector<8xf32> to vector<8x1xf32>
    %149 = tpu.reciprocal %148 {approx = true} : vector<8x1xf32> -> vector<8x1xf32>
    %150 = vector.broadcast %149 : vector<8x1xf32> to vector<8x8xf32>
    %151 = arith.mulf %146, %150 : vector<8x8xf32>
    %152 = vector.extract_strided_slice %101 {offsets = [0, 16], sizes = [8, 8], strides = [1, 1]} : vector<8x32xf32> to vector<8x8xf32>
    %cst_52 = arith.constant dense<0.000000e+00> : vector<8x8xf32>
    %153 = tpu.matmul %151, %152, %cst_52 {dimension_numbers = #tpu.dot_dimension_numbers<[1], [0], [0], [1], [0, 0, 1, 1], [], []>} : vector<8x8xf32>, vector<8x8xf32>, vector<8x8xf32> -> vector<8x8xf32>
    %154 = vector.extract_strided_slice %94 {offsets = [16, 0], sizes = [8, 32], strides = [1, 1]} : vector<32x32xf32> to vector<8x32xf32>
    %cst_53 = arith.constant dense<0.000000e+00> : vector<8x32xf32>
    %155 = tpu.matmul %153, %154, %cst_53 {dimension_numbers = #tpu.dot_dimension_numbers<[1], [0], [0], [1], [0, 0, 1, 1], [], []>} : vector<8x8xf32>, vector<8x32xf32>, vector<8x32xf32> -> vector<8x32xf32>
    %156 = arith.addf %138, %155 : vector<8x32xf32>
    %157 = vector.extract_strided_slice %99 {offsets = [0, 24], sizes = [8, 8], strides = [1, 1]} : vector<8x32xf32> to vector<8x8xf32>
    %158 = vector.extract_strided_slice %100 {offsets = [0, 24], sizes = [8, 8], strides = [1, 1]} : vector<8x32xf32> to vector<8x8xf32>
    %cst_54 = arith.constant dense<0.000000e+00> : vector<8x8xf32>
    %159 = tpu.matmul %157, %158, %cst_54 {dimension_numbers = #tpu.dot_dimension_numbers<[1], [1], [0], [0], [0, 0, 1, 0], [], []>} : vector<8x8xf32>, vector<8x8xf32>, vector<8x8xf32> -> vector<8x8xf32>
    %cst_55 = arith.constant dense<0xFF800000> : vector<8xf32>
    %160 = vector.multi_reduction <maximumf>, %159, %cst_55 [1] : vector<8x8xf32> to vector<8xf32>
    %161 = vector.shape_cast %160 : vector<8xf32> to vector<8x1xf32>
    %162 = vector.broadcast %161 : vector<8x1xf32> to vector<8x8xf32>
    %163 = arith.subf %159, %162 : vector<8x8xf32>
    %164 = math.exp %163 : vector<8x8xf32>
    %cst_56 = arith.constant dense<0.000000e+00> : vector<8xf32>
    %165 = vector.multi_reduction <add>, %164, %cst_56 [1] : vector<8x8xf32> to vector<8xf32>
    %166 = vector.shape_cast %165 : vector<8xf32> to vector<8x1xf32>
    %167 = tpu.reciprocal %166 {approx = true} : vector<8x1xf32> -> vector<8x1xf32>
    %168 = vector.broadcast %167 : vector<8x1xf32> to vector<8x8xf32>
    %169 = arith.mulf %164, %168 : vector<8x8xf32>
    %170 = vector.extract_strided_slice %101 {offsets = [0, 24], sizes = [8, 8], strides = [1, 1]} : vector<8x32xf32> to vector<8x8xf32>
    %cst_57 = arith.constant dense<0.000000e+00> : vector<8x8xf32>
    %171 = tpu.matmul %169, %170, %cst_57 {dimension_numbers = #tpu.dot_dimension_numbers<[1], [0], [0], [1], [0, 0, 1, 1], [], []>} : vector<8x8xf32>, vector<8x8xf32>, vector<8x8xf32> -> vector<8x8xf32>
    %172 = vector.extract_strided_slice %94 {offsets = [24, 0], sizes = [8, 32], strides = [1, 1]} : vector<32x32xf32> to vector<8x32xf32>
    %cst_58 = arith.constant dense<0.000000e+00> : vector<8x32xf32>
    %173 = tpu.matmul %171, %172, %cst_58 {dimension_numbers = #tpu.dot_dimension_numbers<[1], [0], [0], [1], [0, 0, 1, 1], [], []>} : vector<8x8xf32>, vector<8x32xf32>, vector<8x32xf32> -> vector<8x32xf32>
    %174 = arith.addf %156, %173 : vector<8x32xf32>
    %175 = vector.broadcast %95 : vector<1x32xf32> to vector<8x32xf32>
    %176 = arith.addf %174, %175 : vector<8x32xf32>
    %c2 = arith.constant 2 : index
    %c0_59 = arith.constant 0 : index
    %c0_60 = arith.constant 0 : index
    %177 = vector.load %arg3[%c2, %c0_59, %c0_60] : memref<3x32x96xf32, #tpu.memory_space<vmem>>, vector<1x32x96xf32>
    %178 = vector.shape_cast %177 : vector<1x32x96xf32> to vector<32x96xf32>
    %179 = vector.extract_strided_slice %2 {offsets = [2, 0], sizes = [1, 96], strides = [1, 1]} : vector<13x96xf32> to vector<1x96xf32>
    %c2_61 = arith.constant 2 : index
    %c0_62 = arith.constant 0 : index
    %c0_63 = arith.constant 0 : index
    %180 = vector.load %arg4[%c2_61, %c0_62, %c0_63] : memref<7x32x32xf32, #tpu.memory_space<vmem>>, vector<1x32x32xf32>
    %181 = vector.shape_cast %180 : vector<1x32x32xf32> to vector<32x32xf32>
    %182 = vector.extract_strided_slice %2 {offsets = [5, 0], sizes = [1, 32], strides = [1, 1]} : vector<13x96xf32> to vector<1x32xf32>
    %183 = vector.extract_strided_slice %178 {offsets = [0, 0], sizes = [32, 32], strides = [1, 1]} : vector<32x96xf32> to vector<32x32xf32>
    %cst_64 = arith.constant dense<0.000000e+00> : vector<8x32xf32>
    %184 = tpu.matmul %89, %183, %cst_64 {dimension_numbers = #tpu.dot_dimension_numbers<[1], [0], [0], [1], [0, 0, 1, 1], [], []>} : vector<8x32xf32>, vector<32x32xf32>, vector<8x32xf32> -> vector<8x32xf32>
    %185 = vector.extract_strided_slice %179 {offsets = [0, 0], sizes = [1, 32], strides = [1, 1]} : vector<1x96xf32> to vector<1x32xf32>
    %186 = vector.broadcast %185 : vector<1x32xf32> to vector<8x32xf32>
    %187 = arith.addf %184, %186 : vector<8x32xf32>
    %188 = vector.extract_strided_slice %178 {offsets = [0, 32], sizes = [32, 64], strides = [1, 1]} : vector<32x96xf32> to vector<32x64xf32>
    %cst_65 = arith.constant dense<0.000000e+00> : vector<8x64xf32>
    %189 = tpu.matmul %176, %188, %cst_65 {dimension_numbers = #tpu.dot_dimension_numbers<[1], [0], [0], [1], [0, 0, 1, 1], [], []>} : vector<8x32xf32>, vector<32x64xf32>, vector<8x64xf32> -> vector<8x64xf32>
    %190 = vector.extract_strided_slice %179 {offsets = [0, 32], sizes = [1, 64], strides = [1, 1]} : vector<1x96xf32> to vector<1x64xf32>
    %191 = vector.broadcast %190 : vector<1x64xf32> to vector<8x64xf32>
    %192 = arith.addf %189, %191 : vector<8x64xf32>
    %193 = vector.extract_strided_slice %192 {offsets = [0, 0], sizes = [8, 32], strides = [1, 1]} : vector<8x64xf32> to vector<8x32xf32>
    %194 = vector.extract_strided_slice %192 {offsets = [0, 32], sizes = [8, 32], strides = [1, 1]} : vector<8x64xf32> to vector<8x32xf32>
    %cst_66 = arith.constant 0.000000e+00 : f32
    %195 = vector.broadcast %cst_66 : f32 to vector<8x32xf32>
    %196 = vector.extract_strided_slice %187 {offsets = [0, 0], sizes = [8, 8], strides = [1, 1]} : vector<8x32xf32> to vector<8x8xf32>
    %197 = vector.extract_strided_slice %193 {offsets = [0, 0], sizes = [8, 8], strides = [1, 1]} : vector<8x32xf32> to vector<8x8xf32>
    %cst_67 = arith.constant dense<0.000000e+00> : vector<8x8xf32>
    %198 = tpu.matmul %196, %197, %cst_67 {dimension_numbers = #tpu.dot_dimension_numbers<[1], [1], [0], [0], [0, 0, 1, 0], [], []>} : vector<8x8xf32>, vector<8x8xf32>, vector<8x8xf32> -> vector<8x8xf32>
    %cst_68 = arith.constant dense<0xFF800000> : vector<8xf32>
    %199 = vector.multi_reduction <maximumf>, %198, %cst_68 [1] : vector<8x8xf32> to vector<8xf32>
    %200 = vector.shape_cast %199 : vector<8xf32> to vector<8x1xf32>
    %201 = vector.broadcast %200 : vector<8x1xf32> to vector<8x8xf32>
    %202 = arith.subf %198, %201 : vector<8x8xf32>
    %203 = math.exp %202 : vector<8x8xf32>
    %cst_69 = arith.constant dense<0.000000e+00> : vector<8xf32>
    %204 = vector.multi_reduction <add>, %203, %cst_69 [1] : vector<8x8xf32> to vector<8xf32>
    %205 = vector.shape_cast %204 : vector<8xf32> to vector<8x1xf32>
    %206 = tpu.reciprocal %205 {approx = true} : vector<8x1xf32> -> vector<8x1xf32>
    %207 = vector.broadcast %206 : vector<8x1xf32> to vector<8x8xf32>
    %208 = arith.mulf %203, %207 : vector<8x8xf32>
    %209 = vector.extract_strided_slice %194 {offsets = [0, 0], sizes = [8, 8], strides = [1, 1]} : vector<8x32xf32> to vector<8x8xf32>
    %cst_70 = arith.constant dense<0.000000e+00> : vector<8x8xf32>
    %210 = tpu.matmul %208, %209, %cst_70 {dimension_numbers = #tpu.dot_dimension_numbers<[1], [0], [0], [1], [0, 0, 1, 1], [], []>} : vector<8x8xf32>, vector<8x8xf32>, vector<8x8xf32> -> vector<8x8xf32>
    %211 = vector.extract_strided_slice %181 {offsets = [0, 0], sizes = [8, 32], strides = [1, 1]} : vector<32x32xf32> to vector<8x32xf32>
    %cst_71 = arith.constant dense<0.000000e+00> : vector<8x32xf32>
    %212 = tpu.matmul %210, %211, %cst_71 {dimension_numbers = #tpu.dot_dimension_numbers<[1], [0], [0], [1], [0, 0, 1, 1], [], []>} : vector<8x8xf32>, vector<8x32xf32>, vector<8x32xf32> -> vector<8x32xf32>
    %213 = arith.addf %195, %212 : vector<8x32xf32>
    %214 = vector.extract_strided_slice %187 {offsets = [0, 8], sizes = [8, 8], strides = [1, 1]} : vector<8x32xf32> to vector<8x8xf32>
    %215 = vector.extract_strided_slice %193 {offsets = [0, 8], sizes = [8, 8], strides = [1, 1]} : vector<8x32xf32> to vector<8x8xf32>
    %cst_72 = arith.constant dense<0.000000e+00> : vector<8x8xf32>
    %216 = tpu.matmul %214, %215, %cst_72 {dimension_numbers = #tpu.dot_dimension_numbers<[1], [1], [0], [0], [0, 0, 1, 0], [], []>} : vector<8x8xf32>, vector<8x8xf32>, vector<8x8xf32> -> vector<8x8xf32>
    %cst_73 = arith.constant dense<0xFF800000> : vector<8xf32>
    %217 = vector.multi_reduction <maximumf>, %216, %cst_73 [1] : vector<8x8xf32> to vector<8xf32>
    %218 = vector.shape_cast %217 : vector<8xf32> to vector<8x1xf32>
    %219 = vector.broadcast %218 : vector<8x1xf32> to vector<8x8xf32>
    %220 = arith.subf %216, %219 : vector<8x8xf32>
    %221 = math.exp %220 : vector<8x8xf32>
    %cst_74 = arith.constant dense<0.000000e+00> : vector<8xf32>
    %222 = vector.multi_reduction <add>, %221, %cst_74 [1] : vector<8x8xf32> to vector<8xf32>
    %223 = vector.shape_cast %222 : vector<8xf32> to vector<8x1xf32>
    %224 = tpu.reciprocal %223 {approx = true} : vector<8x1xf32> -> vector<8x1xf32>
    %225 = vector.broadcast %224 : vector<8x1xf32> to vector<8x8xf32>
    %226 = arith.mulf %221, %225 : vector<8x8xf32>
    %227 = vector.extract_strided_slice %194 {offsets = [0, 8], sizes = [8, 8], strides = [1, 1]} : vector<8x32xf32> to vector<8x8xf32>
    %cst_75 = arith.constant dense<0.000000e+00> : vector<8x8xf32>
    %228 = tpu.matmul %226, %227, %cst_75 {dimension_numbers = #tpu.dot_dimension_numbers<[1], [0], [0], [1], [0, 0, 1, 1], [], []>} : vector<8x8xf32>, vector<8x8xf32>, vector<8x8xf32> -> vector<8x8xf32>
    %229 = vector.extract_strided_slice %181 {offsets = [8, 0], sizes = [8, 32], strides = [1, 1]} : vector<32x32xf32> to vector<8x32xf32>
    %cst_76 = arith.constant dense<0.000000e+00> : vector<8x32xf32>
    %230 = tpu.matmul %228, %229, %cst_76 {dimension_numbers = #tpu.dot_dimension_numbers<[1], [0], [0], [1], [0, 0, 1, 1], [], []>} : vector<8x8xf32>, vector<8x32xf32>, vector<8x32xf32> -> vector<8x32xf32>
    %231 = arith.addf %213, %230 : vector<8x32xf32>
    %232 = vector.extract_strided_slice %187 {offsets = [0, 16], sizes = [8, 8], strides = [1, 1]} : vector<8x32xf32> to vector<8x8xf32>
    %233 = vector.extract_strided_slice %193 {offsets = [0, 16], sizes = [8, 8], strides = [1, 1]} : vector<8x32xf32> to vector<8x8xf32>
    %cst_77 = arith.constant dense<0.000000e+00> : vector<8x8xf32>
    %234 = tpu.matmul %232, %233, %cst_77 {dimension_numbers = #tpu.dot_dimension_numbers<[1], [1], [0], [0], [0, 0, 1, 0], [], []>} : vector<8x8xf32>, vector<8x8xf32>, vector<8x8xf32> -> vector<8x8xf32>
    %cst_78 = arith.constant dense<0xFF800000> : vector<8xf32>
    %235 = vector.multi_reduction <maximumf>, %234, %cst_78 [1] : vector<8x8xf32> to vector<8xf32>
    %236 = vector.shape_cast %235 : vector<8xf32> to vector<8x1xf32>
    %237 = vector.broadcast %236 : vector<8x1xf32> to vector<8x8xf32>
    %238 = arith.subf %234, %237 : vector<8x8xf32>
    %239 = math.exp %238 : vector<8x8xf32>
    %cst_79 = arith.constant dense<0.000000e+00> : vector<8xf32>
    %240 = vector.multi_reduction <add>, %239, %cst_79 [1] : vector<8x8xf32> to vector<8xf32>
    %241 = vector.shape_cast %240 : vector<8xf32> to vector<8x1xf32>
    %242 = tpu.reciprocal %241 {approx = true} : vector<8x1xf32> -> vector<8x1xf32>
    %243 = vector.broadcast %242 : vector<8x1xf32> to vector<8x8xf32>
    %244 = arith.mulf %239, %243 : vector<8x8xf32>
    %245 = vector.extract_strided_slice %194 {offsets = [0, 16], sizes = [8, 8], strides = [1, 1]} : vector<8x32xf32> to vector<8x8xf32>
    %cst_80 = arith.constant dense<0.000000e+00> : vector<8x8xf32>
    %246 = tpu.matmul %244, %245, %cst_80 {dimension_numbers = #tpu.dot_dimension_numbers<[1], [0], [0], [1], [0, 0, 1, 1], [], []>} : vector<8x8xf32>, vector<8x8xf32>, vector<8x8xf32> -> vector<8x8xf32>
    %247 = vector.extract_strided_slice %181 {offsets = [16, 0], sizes = [8, 32], strides = [1, 1]} : vector<32x32xf32> to vector<8x32xf32>
    %cst_81 = arith.constant dense<0.000000e+00> : vector<8x32xf32>
    %248 = tpu.matmul %246, %247, %cst_81 {dimension_numbers = #tpu.dot_dimension_numbers<[1], [0], [0], [1], [0, 0, 1, 1], [], []>} : vector<8x8xf32>, vector<8x32xf32>, vector<8x32xf32> -> vector<8x32xf32>
    %249 = arith.addf %231, %248 : vector<8x32xf32>
    %250 = vector.extract_strided_slice %187 {offsets = [0, 24], sizes = [8, 8], strides = [1, 1]} : vector<8x32xf32> to vector<8x8xf32>
    %251 = vector.extract_strided_slice %193 {offsets = [0, 24], sizes = [8, 8], strides = [1, 1]} : vector<8x32xf32> to vector<8x8xf32>
    %cst_82 = arith.constant dense<0.000000e+00> : vector<8x8xf32>
    %252 = tpu.matmul %250, %251, %cst_82 {dimension_numbers = #tpu.dot_dimension_numbers<[1], [1], [0], [0], [0, 0, 1, 0], [], []>} : vector<8x8xf32>, vector<8x8xf32>, vector<8x8xf32> -> vector<8x8xf32>
    %cst_83 = arith.constant dense<0xFF800000> : vector<8xf32>
    %253 = vector.multi_reduction <maximumf>, %252, %cst_83 [1] : vector<8x8xf32> to vector<8xf32>
    %254 = vector.shape_cast %253 : vector<8xf32> to vector<8x1xf32>
    %255 = vector.broadcast %254 : vector<8x1xf32> to vector<8x8xf32>
    %256 = arith.subf %252, %255 : vector<8x8xf32>
    %257 = math.exp %256 : vector<8x8xf32>
    %cst_84 = arith.constant dense<0.000000e+00> : vector<8xf32>
    %258 = vector.multi_reduction <add>, %257, %cst_84 [1] : vector<8x8xf32> to vector<8xf32>
    %259 = vector.shape_cast %258 : vector<8xf32> to vector<8x1xf32>
    %260 = tpu.reciprocal %259 {approx = true} : vector<8x1xf32> -> vector<8x1xf32>
    %261 = vector.broadcast %260 : vector<8x1xf32> to vector<8x8xf32>
    %262 = arith.mulf %257, %261 : vector<8x8xf32>
    %263 = vector.extract_strided_slice %194 {offsets = [0, 24], sizes = [8, 8], strides = [1, 1]} : vector<8x32xf32> to vector<8x8xf32>
    %cst_85 = arith.constant dense<0.000000e+00> : vector<8x8xf32>
    %264 = tpu.matmul %262, %263, %cst_85 {dimension_numbers = #tpu.dot_dimension_numbers<[1], [0], [0], [1], [0, 0, 1, 1], [], []>} : vector<8x8xf32>, vector<8x8xf32>, vector<8x8xf32> -> vector<8x8xf32>
    %265 = vector.extract_strided_slice %181 {offsets = [24, 0], sizes = [8, 32], strides = [1, 1]} : vector<32x32xf32> to vector<8x32xf32>
    %cst_86 = arith.constant dense<0.000000e+00> : vector<8x32xf32>
    %266 = tpu.matmul %264, %265, %cst_86 {dimension_numbers = #tpu.dot_dimension_numbers<[1], [0], [0], [1], [0, 0, 1, 1], [], []>} : vector<8x8xf32>, vector<8x32xf32>, vector<8x32xf32> -> vector<8x32xf32>
    %267 = arith.addf %249, %266 : vector<8x32xf32>
    %268 = vector.broadcast %182 : vector<1x32xf32> to vector<8x32xf32>
    %269 = arith.addf %267, %268 : vector<8x32xf32>
    %c3 = arith.constant 3 : index
    %c0_87 = arith.constant 0 : index
    %c0_88 = arith.constant 0 : index
    %270 = vector.load %arg4[%c3, %c0_87, %c0_88] : memref<7x32x32xf32, #tpu.memory_space<vmem>>, vector<1x32x32xf32>
    %271 = vector.shape_cast %270 : vector<1x32x32xf32> to vector<32x32xf32>
    %cst_89 = arith.constant dense<0.000000e+00> : vector<8x32xf32>
    %272 = tpu.matmul %269, %271, %cst_89 {dimension_numbers = #tpu.dot_dimension_numbers<[1], [0], [0], [1], [0, 0, 1, 1], [], []>} : vector<8x32xf32>, vector<32x32xf32>, vector<8x32xf32> -> vector<8x32xf32>
    %c4 = arith.constant 4 : index
    %c0_90 = arith.constant 0 : index
    %c0_91 = arith.constant 0 : index
    %273 = vector.load %arg4[%c4, %c0_90, %c0_91] : memref<7x32x32xf32, #tpu.memory_space<vmem>>, vector<1x32x32xf32>
    %274 = vector.shape_cast %273 : vector<1x32x32xf32> to vector<32x32xf32>
    %cst_92 = arith.constant dense<0.000000e+00> : vector<8x32xf32>
    %275 = tpu.matmul %176, %274, %cst_92 {dimension_numbers = #tpu.dot_dimension_numbers<[1], [0], [0], [1], [0, 0, 1, 1], [], []>} : vector<8x32xf32>, vector<32x32xf32>, vector<8x32xf32> -> vector<8x32xf32>
    %276 = arith.addf %272, %275 : vector<8x32xf32>
    %277 = vector.extract_strided_slice %2 {offsets = [6, 0], sizes = [1, 32], strides = [1, 1]} : vector<13x96xf32> to vector<1x32xf32>
    %278 = vector.broadcast %277 : vector<1x32xf32> to vector<8x32xf32>
    %279 = arith.addf %276, %278 : vector<8x32xf32>
    %c5 = arith.constant 5 : index
    %c0_93 = arith.constant 0 : index
    %c0_94 = arith.constant 0 : index
    %280 = vector.load %arg4[%c5, %c0_93, %c0_94] : memref<7x32x32xf32, #tpu.memory_space<vmem>>, vector<1x32x32xf32>
    %281 = vector.shape_cast %280 : vector<1x32x32xf32> to vector<32x32xf32>
    %282 = vector.extract_strided_slice %2 {offsets = [7, 0], sizes = [1, 32], strides = [1, 1]} : vector<13x96xf32> to vector<1x32xf32>
    %283 = vector.extract_strided_slice %2 {offsets = [9, 0], sizes = [1, 32], strides = [1, 1]} : vector<13x96xf32> to vector<1x32xf32>
    %284 = vector.extract_strided_slice %2 {offsets = [11, 0], sizes = [1, 1], strides = [1, 1]} : vector<13x96xf32> to vector<1x1xf32>
    %cst_95 = arith.constant dense<0.000000e+00> : vector<8x32xf32>
    %285 = tpu.matmul %0, %281, %cst_95 {dimension_numbers = #tpu.dot_dimension_numbers<[1], [0], [0], [1], [0, 0, 1, 1], [], []>} : vector<8x32xf32>, vector<32x32xf32>, vector<8x32xf32> -> vector<8x32xf32>
    %286 = vector.broadcast %282 : vector<1x32xf32> to vector<8x32xf32>
    %287 = arith.addf %285, %286 : vector<8x32xf32>
    %cst_96 = arith.constant 0.000000e+00 : f32
    %288 = vector.broadcast %cst_96 : f32 to vector<8x32xf32>
    %289 = arith.maximumf %287, %288 : vector<8x32xf32>
    %290 = vector.broadcast %283 : vector<1x32xf32> to vector<8x32xf32>
    %291 = arith.mulf %289, %290 : vector<8x32xf32>
    %cst_97 = arith.constant dense<0.000000e+00> : vector<8xf32>
    %292 = vector.multi_reduction <add>, %291, %cst_97 [1] : vector<8x32xf32> to vector<8xf32>
    %293 = vector.shape_cast %292 : vector<8xf32> to vector<8x1xf32>
    %294 = vector.broadcast %284 : vector<1x1xf32> to vector<8x1xf32>
    %295 = arith.addf %293, %294 : vector<8x1xf32>
    %296 = arith.negf %295 : vector<8x1xf32>
    %297 = math.exp %296 : vector<8x1xf32>
    %cst_98 = arith.constant 1.000000e+00 : f32
    %298 = vector.broadcast %cst_98 : f32 to vector<8x1xf32>
    %299 = arith.addf %298, %297 : vector<8x1xf32>
    %300 = arith.divf %298, %299 : vector<8x1xf32>
    %c6 = arith.constant 6 : index
    %c0_99 = arith.constant 0 : index
    %c0_100 = arith.constant 0 : index
    %301 = vector.load %arg4[%c6, %c0_99, %c0_100] : memref<7x32x32xf32, #tpu.memory_space<vmem>>, vector<1x32x32xf32>
    %302 = vector.shape_cast %301 : vector<1x32x32xf32> to vector<32x32xf32>
    %303 = vector.extract_strided_slice %2 {offsets = [8, 0], sizes = [1, 32], strides = [1, 1]} : vector<13x96xf32> to vector<1x32xf32>
    %304 = vector.extract_strided_slice %2 {offsets = [10, 0], sizes = [1, 32], strides = [1, 1]} : vector<13x96xf32> to vector<1x32xf32>
    %305 = vector.extract_strided_slice %2 {offsets = [12, 0], sizes = [1, 1], strides = [1, 1]} : vector<13x96xf32> to vector<1x1xf32>
    %cst_101 = arith.constant dense<0.000000e+00> : vector<8x32xf32>
    %306 = tpu.matmul %1, %302, %cst_101 {dimension_numbers = #tpu.dot_dimension_numbers<[1], [0], [0], [1], [0, 0, 1, 1], [], []>} : vector<8x32xf32>, vector<32x32xf32>, vector<8x32xf32> -> vector<8x32xf32>
    %307 = vector.broadcast %303 : vector<1x32xf32> to vector<8x32xf32>
    %308 = arith.addf %306, %307 : vector<8x32xf32>
    %cst_102 = arith.constant 0.000000e+00 : f32
    %309 = vector.broadcast %cst_102 : f32 to vector<8x32xf32>
    %310 = arith.maximumf %308, %309 : vector<8x32xf32>
    %311 = vector.broadcast %304 : vector<1x32xf32> to vector<8x32xf32>
    %312 = arith.mulf %310, %311 : vector<8x32xf32>
    %cst_103 = arith.constant dense<0.000000e+00> : vector<8xf32>
    %313 = vector.multi_reduction <add>, %312, %cst_103 [1] : vector<8x32xf32> to vector<8xf32>
    %314 = vector.shape_cast %313 : vector<8xf32> to vector<8x1xf32>
    %315 = vector.broadcast %305 : vector<1x1xf32> to vector<8x1xf32>
    %316 = arith.addf %314, %315 : vector<8x1xf32>
    %317 = arith.negf %316 : vector<8x1xf32>
    %318 = math.exp %317 : vector<8x1xf32>
    %cst_104 = arith.constant 1.000000e+00 : f32
    %319 = vector.broadcast %cst_104 : f32 to vector<8x1xf32>
    %320 = arith.addf %319, %318 : vector<8x1xf32>
    %321 = arith.divf %319, %320 : vector<8x1xf32>
    %322 = vector.broadcast %300 : vector<8x1xf32> to vector<8x32xf32>
    %323 = arith.mulf %322, %0 : vector<8x32xf32>
    %324 = arith.addf %279, %323 : vector<8x32xf32>
    %325 = vector.broadcast %321 : vector<8x1xf32> to vector<8x32xf32>
    %326 = arith.mulf %325, %1 : vector<8x32xf32>
    %327 = arith.addf %324, %326 : vector<8x32xf32>
    %c0_105 = arith.constant 0 : index
    %c0_106 = arith.constant 0 : index
    %328 = vector.load %arg6[%c0_105, %c0_106] : memref<8x32xf32, #tpu.memory_space<vmem>>, vector<8x32xf32>
    tpu.vector_store %arg6[%c0_105, %c0_106], %327 {strides = array<i32>} : memref<8x32xf32, #tpu.memory_space<vmem>>, vector<8x32xf32>,
    return
  }
  func.func @transform_0(%arg0: i32) -> (i32, i32) {
    %c0_i32 = arith.constant 0 : i32
    %c0_i32_0 = arith.constant 0 : i32
    return %arg0, %c0_i32 : i32, i32
  }
  func.func @transform_1(%arg0: i32) -> (i32, i32) {
    %c0_i32 = arith.constant 0 : i32
    %c0_i32_0 = arith.constant 0 : i32
    return %arg0, %c0_i32 : i32, i32
  }
  func.func @transform_2(%arg0: i32) -> (i32, i32, i32) {
    %c0_i32 = arith.constant 0 : i32
    %c0_i32_0 = arith.constant 0 : i32
    %c0_i32_1 = arith.constant 0 : i32
    %c0_i32_2 = arith.constant 0 : i32
    return %c0_i32, %c0_i32_0, %c0_i32_1 : i32, i32, i32
  }
  func.func @transform_3(%arg0: i32) -> (i32, i32, i32) {
    %c0_i32 = arith.constant 0 : i32
    %c0_i32_0 = arith.constant 0 : i32
    %c0_i32_1 = arith.constant 0 : i32
    %c0_i32_2 = arith.constant 0 : i32
    return %c0_i32, %c0_i32_0, %c0_i32_1 : i32, i32, i32
  }
  func.func @transform_4(%arg0: i32) -> (i32, i32) {
    %c0_i32 = arith.constant 0 : i32
    %c0_i32_0 = arith.constant 0 : i32
    %c0_i32_1 = arith.constant 0 : i32
    return %c0_i32, %c0_i32_0 : i32, i32
  }
  func.func @transform_5(%arg0: i32) -> (i32, i32) {
    %c0_i32 = arith.constant 0 : i32
    %c0_i32_0 = arith.constant 0 : i32
    return %arg0, %c0_i32 : i32, i32
  }
}

</mosaic_0001>

<llo_original>
// kernel: tpu_custom_call.1
$region0: #{tpu_custom_call.1}
  #allocation0 [shape = 'u32[]', space=smem, size = 0x4, offset = 0x4, fixed_abs, tag = 'smem constant byte address 0x4 - core index']
  #allocation1 [shape = 'u32[144,128]{1,0:T(1,128)}', space=vmem, size = 0x12000, scoped, tag = 'internal scratch']
  %s0 = inlined_call_operand.hbm [shape: f32[16,32], index: 0, kind: input, shape index: {}]
  %s1 = inlined_call_operand.hbm [shape: f32[16,32], index: 1, kind: input, shape index: {}]
  %s2 = inlined_call_operand.hbm [shape: f32[3,32,96], index: 2, kind: input, shape index: {}]
  %s3 = inlined_call_operand.hbm [shape: f32[7,32,32], index: 3, kind: input, shape index: {}]
  %s4 = inlined_call_operand.hbm [shape: f32[13,96], index: 4, kind: input, shape index: {}]
  %s5 = inlined_call_operand.hbm [shape: f32[16,32], index: 5, kind: output, shape index: {}]
  %s6 = sld [smem:[#allocation0]]
  $region73: #{tpu_custom_call.1} parent=0
    _
  %s8 = ssub.s32 1, %s6
  %s9 = scalar_select 0, %s8, %s6
  $region1: #{tpu_custom_call.1} parent=0
    #allocation2 [shape = 'u8[8192]{0}', space=vmem, size = 0x2000, scoped, tag = 'input window, operand 0']
    #allocation3 [shape = 's32[2]{0}', space=sflag, size = 0x8, scoped, tag = 'scoped memory for tpu_custom_call.1']
    #allocation4 [shape = 's32[2]{0}', space=sflag, size = 0x8, scoped, tag = 'scoped memory for tpu_custom_call.1']
    #allocation5 [shape = 'u8[8192]{0}', space=vmem, size = 0x2000, scoped, tag = 'input window, operand 1']
    #allocation6 [shape = 's32[2]{0}', space=sflag, size = 0x8, scoped, tag = 'scoped memory for tpu_custom_call.1']
    #allocation7 [shape = 'u8[49152]{0}', space=vmem, size = 0xc000, scoped, tag = 'input window, operand 2, single buffered']
    #allocation8 [shape = 'u8[114688]{0}', space=vmem, size = 0x1c000, scoped, tag = 'input window, operand 3, single buffered']
    #allocation9 [shape = 's32[1]{0}', space=sflag, size = 0x4, scoped, tag = 'scoped memory for tpu_custom_call.1']
    #allocation10 [shape = 'u8[8192]{0}', space=vmem, size = 0x2000, scoped, tag = 'input window, operand 4, single buffered']
    #allocation11 [shape = 'u8[8192]{0}', space=vmem, size = 0x2000, scoped, tag = 'output window, operand 0']
    %10 = vsyncpa [#allocation3], 0
    %s11 = scalar_lea.sflag [#allocation3], 1
    %12 = vsyncpa %s11, 0
    %13 = vsyncpa [#allocation6], 0
    %s14 = scalar_lea.sflag [#allocation6], 1
    %15 = vsyncpa %s14, 0
    %16 = vsyncpa [#allocation9], 0
    %17 = vsyncpa [#allocation4], 0
    %s18 = scalar_lea.sflag [#allocation4], 1
    %19 = vsyncpa %s18, 0
    loop: start=0, step=1, limit=4
    $region2: #{tpu_custom_call.1} parent=1 // loop_pre_header
      _
    $region3: #{tpu_custom_call.1} parent=1 // loop_header
      %s21 = sphi 0, %s25
      %p22 = scmp.ge.s32.totalorder %s21, 4
      %s31 = sphi 0, %s33
      %s34 = sphi 0, %s31
      %s35 = sphi 0, %s34
      %s51 = sphi 0, %s35
      %s57 = sphi 0, %s59
      %s60 = sphi 0, %s57
      %s61 = sphi 0, %s60
      %s77 = sphi 0, %s61
      %s81 = sphi 0, %s81
      %s83 = sphi 0, %s81
      %s84 = sphi 0, %s83
      %s98 = sphi 0, %s84
      %s102 = sphi 0, %s102
      %s104 = sphi 0, %s102
      %s105 = sphi 0, %s104
      %s119 = sphi 0, %s105
      %s123 = sphi 0, %s123
      %s125 = sphi 0, %s123
      %s126 = sphi 0, %s125
      %s140 = sphi 0, %s126
      %s146 = sphi 0, %s148
      %s149 = sphi 0, %s146
      %s150 = sphi 0, %s149
      %s166 = sphi 0, %s150
    $region4: #{tpu_custom_call.1} parent=1 // loop_header_branch
      %24 = sbr.rel (%p22) target = $region8
    $region5: #{tpu_custom_call.1} parent=1 // loop_body
      %s26 = ssub.s32 %s21, 1
      %s27 = ssub.s32 %s21, 2
      %s28 = sadd.s32 %s21, 1
      %s29 = ssub.s32 %s21, %s28
      %p30 = scmp.eq.s32.totalorder %s29, 0
      %s32 = sadd.s32 %s31, 1
      %s33 = scalar_select %p30, %s31, %s32
      %p36 = pneg %p30
      %p37 = scmp.eq.s32.totalorder %s21, 1
      %p38 = por %p36, %p37
      %p39 = scmp.ne.s32.totalorder %s31, %s34
      %p40 = scmp.eq.s32.totalorder %s21, 0
      %p41 = por %p39, %p40
      %p42 = scmp.ne.s32.totalorder %s31, %s34
      %p43 = scmp.eq.s32.totalorder %s26, 1
      %p44 = por %p42, %p43
      %p45 = scmp.ne.s32.totalorder %s34, %s35
      %p46 = scmp.eq.s32.totalorder %s26, 0
      %p47 = por %p45, %p46
      %p48 = scmp.ne.s32.totalorder %s34, %s35
      %p49 = scmp.eq.s32.totalorder %s27, 1
      %p50 = por %p48, %p49
      %p52 = scmp.ne.s32.totalorder %s35, %s51
      %p53 = scmp.eq.s32.totalorder %s27, 0
      %p54 = por %p52, %p53
      %s55 = ssub.s32 %s21, %s28
      %p56 = scmp.eq.s32.totalorder %s55, 0
      %s58 = sadd.s32 %s57, 1
      %s59 = scalar_select %p56, %s57, %s58
      %p62 = pneg %p56
      %p63 = scmp.eq.s32.totalorder %s21, 1
      %p64 = por %p62, %p63
      %p65 = scmp.ne.s32.totalorder %s57, %s60
      %p66 = scmp.eq.s32.totalorder %s21, 0
      %p67 = por %p65, %p66
      %p68 = scmp.ne.s32.totalorder %s57, %s60
      %p69 = scmp.eq.s32.totalorder %s26, 1
      %p70 = por %p68, %p69
      %p71 = scmp.ne.s32.totalorder %s60, %s61
      %p72 = scmp.eq.s32.totalorder %s26, 0
      %p73 = por %p71, %p72
      %p74 = scmp.ne.s32.totalorder %s60, %s61
      %p75 = scmp.eq.s32.totalorder %s27, 1
      %p76 = por %p74, %p75
      %p78 = scmp.ne.s32.totalorder %s61, %s77
      %p79 = scmp.eq.s32.totalorder %s27, 0
      %p80 = por %p78, %p79
      %s82 = sadd.s32 %s81, 1
      %p85 = scmp.eq.s32.totalorder %s21, 1
      %p86 = scmp.ne.s32.totalorder %s81, %s83
      %p87 = scmp.eq.s32.totalorder %s21, 0
      %p88 = por %p86, %p87
      %p89 = scmp.ne.s32.totalorder %s81, %s83
      %p90 = scmp.eq.s32.totalorder %s26, 1
      %p91 = por %p89, %p90
      %p92 = scmp.ne.s32.totalorder %s83, %s84
      %p93 = scmp.eq.s32.totalorder %s26, 0
      %p94 = por %p92, %p93
      %p95 = scmp.ne.s32.totalorder %s83, %s84
      %p96 = scmp.eq.s32.totalorder %s27, 1
      %p97 = por %p95, %p96
      %p99 = scmp.ne.s32.totalorder %s84, %s98
      %p100 = scmp.eq.s32.totalorder %s27, 0
      %p101 = por %p99, %p100
      %s103 = sadd.s32 %s102, 1
      %p106 = scmp.eq.s32.totalorder %s21, 1
      %p107 = scmp.ne.s32.totalorder %s102, %s104
      %p108 = scmp.eq.s32.totalorder %s21, 0
      %p109 = por %p107, %p108
      %p110 = scmp.ne.s32.totalorder %s102, %s104
      %p111 = scmp.eq.s32.totalorder %s26, 1
      %p112 = por %p110, %p111
      %p113 = scmp.ne.s32.totalorder %s104, %s105
      %p114 = scmp.eq.s32.totalorder %s26, 0
      %p115 = por %p113, %p114
      %p116 = scmp.ne.s32.totalorder %s104, %s105
      %p117 = scmp.eq.s32.totalorder %s27, 1
      %p118 = por %p116, %p117
      %p120 = scmp.ne.s32.totalorder %s105, %s119
      %p121 = scmp.eq.s32.totalorder %s27, 0
      %p122 = por %p120, %p121
      %s124 = sadd.s32 %s123, 1
      %p127 = scmp.eq.s32.totalorder %s21, 1
      %p128 = scmp.ne.s32.totalorder %s123, %s125
      %p129 = scmp.eq.s32.totalorder %s21, 0
      %p130 = por %p128, %p129
      %p131 = scmp.ne.s32.totalorder %s123, %s125
      %p132 = scmp.eq.s32.totalorder %s26, 1
      %p133 = por %p131, %p132
      %p134 = scmp.ne.s32.totalorder %s125, %s126
      %p135 = scmp.eq.s32.totalorder %s26, 0
      %p136 = por %p134, %p135
      %p137 = scmp.ne.s32.totalorder %s125, %s126
      %p138 = scmp.eq.s32.totalorder %s27, 1
      %p139 = por %p137, %p138
      %p141 = scmp.ne.s32.totalorder %s126, %s140
      %p142 = scmp.eq.s32.totalorder %s27, 0
      %p143 = por %p141, %p142
      %s144 = ssub.s32 %s21, %s28
      %p145 = scmp.eq.s32.totalorder %s144, 0
      %s147 = sadd.s32 %s146, 1
      %s148 = scalar_select %p145, %s146, %s147
      %p151 = pneg %p145
      %p152 = scmp.eq.s32.totalorder %s21, 1
      %p153 = por %p151, %p152
      %p154 = scmp.ne.s32.totalorder %s146, %s149
      %p155 = scmp.eq.s32.totalorder %s21, 0
      %p156 = por %p154, %p155
      %p157 = scmp.ne.s32.totalorder %s146, %s149
      %p158 = scmp.eq.s32.totalorder %s26, 1
      %p159 = por %p157, %p158
      %p160 = scmp.ne.s32.totalorder %s149, %s150
      %p161 = scmp.eq.s32.totalorder %s26, 0
      %p162 = por %p160, %p161
      %p163 = scmp.ne.s32.totalorder %s149, %s150
      %p164 = scmp.eq.s32.totalorder %s27, 1
      %p165 = por %p163, %p164
      %p167 = scmp.ne.s32.totalorder %s150, %s166
      %p168 = scmp.eq.s32.totalorder %s27, 0
      %p169 = por %p167, %p168
      %p170 = scmp.le.s32.totalorder 1, %s21
      %p171 = scmp.lt.s32.totalorder %s21, 3
      %p172 = pnand %p170, %p171
      %p173 = pneg %p172
      // Predicated region
      $region9: #{tpu_custom_call.1} parent=5 // pred_check
        _
      $region10: #{tpu_custom_call.1} parent=5 // pred_check_branch
        %175 = sbr.rel (%p172) target = $region12
      $region11: #{tpu_custom_call.1} parent=5 // pred_region
        %s176 = ssub.s32 %s21, 1
        // Predicated region
        $region13: #{tpu_custom_call.1} parent=11 // pred_check
          %p177 = pneg %p94
        $region14: #{tpu_custom_call.1} parent=11 // pred_check_branch
          %179 = sbr.rel (%p177) target = $region16
        $region15: #{tpu_custom_call.1} parent=11 // pred_region
          %s181 = ssub.s32 1536, 1536
          %182 = vsyncadd [#allocation6], %s181
          %s183 = sshll.u32 [#allocation7], 4
          %s184 = int_to_ptr.vmem [resolvable:$true] %s183
          %189 = dma.hbm_to_vmem [thread:$0]  %s2, 1536, %s184, [#allocation6], 128, 128, 8
        $region16: #{tpu_custom_call.1} parent=11 // pred_fallthru
          _
        // Predicated region
        $region17: #{tpu_custom_call.1} parent=11 // pred_check
          %p190 = pneg %p115
        $region18: #{tpu_custom_call.1} parent=11 // pred_check_branch
          %192 = sbr.rel (%p190) target = $region20
        $region19: #{tpu_custom_call.1} parent=11 // pred_region
          %s194 = ssub.s32 3584, 3584
          %195 = vsyncadd [#allocation9], %s194
          %s196 = sshll.u32 [#allocation8], 4
          %s197 = int_to_ptr.vmem [resolvable:$true] %s196
          %202 = dma.hbm_to_vmem [thread:$0]  %s3, 3584, %s197, [#allocation9], 128, 128, 8
        $region20: #{tpu_custom_call.1} parent=11 // pred_fallthru
          _
        // Predicated region
        $region21: #{tpu_custom_call.1} parent=11 // pred_check
          %p203 = pneg %p136
        $region22: #{tpu_custom_call.1} parent=11 // pred_check_branch
          %205 = sbr.rel (%p203) target = $region24
        $region23: #{tpu_custom_call.1} parent=11 // pred_region
          %s207 = ssub.s32 256, 256
          %208 = vsyncadd [#allocation9], %s207
          %s209 = sshll.u32 [#allocation10], 4
          %s210 = int_to_ptr.vmem [resolvable:$true] %s209
          %215 = dma.hbm_to_vmem [thread:$0]  %s4, 256, %s210, [#allocation9], 128, 128, 8
        $region24: #{tpu_custom_call.1} parent=11 // pred_fallthru
          _
      $region12: #{tpu_custom_call.1} parent=5 // pred_fallthru
        _
      %p216 = scmp.lt.s32.totalorder %s21, 2
      // Predicated region
      $region25: #{tpu_custom_call.1} parent=5 // pred_check
        %p217 = pneg %p216
      $region26: #{tpu_custom_call.1} parent=5 // pred_check_branch
        %219 = sbr.rel (%p217) target = $region28
      $region27: #{tpu_custom_call.1} parent=5 // pred_region
        // Predicated region
        $region29: #{tpu_custom_call.1} parent=27 // pred_check
          %p220 = pneg %p41
        $region30: #{tpu_custom_call.1} parent=27 // pred_check_branch
          %222 = sbr.rel (%p220) target = $region32
        $region31: #{tpu_custom_call.1} parent=27 // pred_region
          %s223 = sand.u32 %s31, 1
          %s224 = scalar_lea.sflag [#allocation3], %s223
          %s225 = sand.u32 %s31, 1
          %s226 = smul.addr %s225, 8
          %s227 = scalar_lea.vmem [#allocation2], %s226
          %s229 = ssub.s32 128, 128
          %230 = vsyncadd %s224, %s229
          %s231 = smul.addr %s21, 128
          %s232 = scalar_lea.hbm %s0, %s231
          %s234 = sshll.u32 %s227, 4
          %s235 = int_to_ptr.vmem [resolvable:$true] %s234
          %237 = dma.hbm_to_vmem [thread:$0]  %s232, 128, %s235, %s224
        $region32: #{tpu_custom_call.1} parent=27 // pred_fallthru
          _
        // Predicated region
        $region33: #{tpu_custom_call.1} parent=27 // pred_check
          %p238 = pneg %p67
        $region34: #{tpu_custom_call.1} parent=27 // pred_check_branch
          %240 = sbr.rel (%p238) target = $region36
        $region35: #{tpu_custom_call.1} parent=27 // pred_region
          %s241 = sand.u32 %s21, 1
          %s242 = scalar_lea.sflag [#allocation6], %s241
          %s243 = sand.u32 %s57, 1
          %s244 = smul.addr %s243, 8
          %s245 = scalar_lea.vmem [#allocation5], %s244
          %s247 = ssub.s32 128, 128
          %248 = vsyncadd %s242, %s247
          %s249 = smul.addr %s21, 128
          %s250 = scalar_lea.hbm %s1, %s249
          %s252 = sshll.u32 %s245, 4
          %s253 = int_to_ptr.vmem [resolvable:$true] %s252
          %255 = dma.hbm_to_vmem [thread:$0]  %s250, 128, %s253, %s242
        $region36: #{tpu_custom_call.1} parent=27 // pred_fallthru
          _
      $region28: #{tpu_custom_call.1} parent=5 // pred_fallthru
        _
      %p256 = scmp.le.s32.totalorder 1, %s21
      %p257 = scmp.lt.s32.totalorder %s21, 3
      %p258 = pnand %p256, %p257
      %p259 = pneg %p258
      // Predicated region
      $region37: #{tpu_custom_call.1} parent=5 // pred_check
        _
      $region38: #{tpu_custom_call.1} parent=5 // pred_check_branch
        %261 = sbr.rel (%p258) target = $region40
      $region39: #{tpu_custom_call.1} parent=5 // pred_region
        %s262 = ssub.s32 %s21, 1
        %s263 = sand.u32 %s34, 1
        %s264 = scalar_lea.sflag [#allocation3], %s263
        %s265 = sand.u32 %s34, 1
        %s266 = smul.addr %s265, 8
        %s267 = scalar_lea.vmem [#allocation2], %s266
        // Predicated region
        $region41: #{tpu_custom_call.1} parent=39 // pred_check
          %p268 = pneg %p47
        $region42: #{tpu_custom_call.1} parent=39 // pred_check_branch
          %270 = sbr.rel (%p268) target = $region44
        $region43: #{tpu_custom_call.1} parent=39 // pred_region
          %271 = dma.done %s264, 128
        $region44: #{tpu_custom_call.1} parent=39 // pred_fallthru
          _
        %s272 = sand.u32 %s26, 1
        %s273 = scalar_lea.sflag [#allocation6], %s272
        %s274 = sand.u32 %s60, 1
        %s275 = smul.addr %s274, 8
        %s276 = scalar_lea.vmem [#allocation5], %s275
        // Predicated region
        $region45: #{tpu_custom_call.1} parent=39 // pred_check
          %p277 = pneg %p73
        $region46: #{tpu_custom_call.1} parent=39 // pred_check_branch
          %279 = sbr.rel (%p277) target = $region48
        $region47: #{tpu_custom_call.1} parent=39 // pred_region
          %280 = dma.done %s273, 128
        $region48: #{tpu_custom_call.1} parent=39 // pred_fallthru
          _
        // Predicated region
        $region49: #{tpu_custom_call.1} parent=39 // pred_check
          %p281 = pneg %p94
        $region50: #{tpu_custom_call.1} parent=39 // pred_check_branch
          %283 = sbr.rel (%p281) target = $region52
        $region51: #{tpu_custom_call.1} parent=39 // pred_region
          %284 = dma.done [#allocation6], 1536
        $region52: #{tpu_custom_call.1} parent=39 // pred_fallthru
          _
        // Predicated region
        $region53: #{tpu_custom_call.1} parent=39 // pred_check
          %p285 = pneg %p115
        $region54: #{tpu_custom_call.1} parent=39 // pred_check_branch
          %287 = sbr.rel (%p285) target = $region56
        $region55: #{tpu_custom_call.1} parent=39 // pred_region
          %288 = dma.done [#allocation9], 3584
        $region56: #{tpu_custom_call.1} parent=39 // pred_fallthru
          _
        // Predicated region
        $region57: #{tpu_custom_call.1} parent=39 // pred_check
          %p289 = pneg %p136
        $region58: #{tpu_custom_call.1} parent=39 // pred_check_branch
          %291 = sbr.rel (%p289) target = $region60
        $region59: #{tpu_custom_call.1} parent=39 // pred_region
          %292 = dma.done [#allocation9], 256
        $region60: #{tpu_custom_call.1} parent=39 // pred_fallthru
          _
        %s293 = sand.u32 %s34, 1
        %s294 = scalar_lea.sflag [#allocation3], %s293
        %s295 = sand.u32 %s34, 1
        %s296 = smul.addr %s295, 8
        %s297 = scalar_lea.vmem [#allocation2], %s296
        %p298 = pneg %p47
        %p299 = pneg %p44
        %s300 = sand.u32 %s26, 1
        %s301 = scalar_lea.sflag [#allocation6], %s300
        %s302 = sand.u32 %s60, 1
        %s303 = smul.addr %s302, 8
        %s304 = scalar_lea.vmem [#allocation5], %s303
        %p305 = pneg %p73
        %p306 = pneg %p70
        %p307 = pneg %p94
        %p308 = pneg %p91
        %p309 = pneg %p115
        %p310 = pneg %p112
        %p311 = pneg %p136
        %p312 = pneg %p133
        %p313 = pneg %p162
        %p314 = pneg %p159
        %s315 = sand.u32 %s149, 1
        %s316 = scalar_lea.sflag [#allocation4], %s315
        %s317 = sand.u32 %s149, 1
        %s318 = smul.addr %s317, 8
        %s319 = scalar_lea.vmem [#allocation11], %s318
        %v320 = vld [vmem:[%s267] sm:$0xff]
        %v321 = vld [vmem:[%s276] sm:$0xff]
        %v322 = vld [vmem:[#allocation10] sm:$0xff]
        %v323 = vld [vmem:[#allocation10 + $0x8] sm:$0x1f]
        %v324 = vld [vmem:[#allocation7] sm:$0xff]
        %v325 = vld [vmem:[#allocation7 + $0x8] sm:$0xff]
        %v326 = vld [vmem:[#allocation7 + $0x10] sm:$0xff]
        %v327 = vld [vmem:[#allocation7 + $0x18] sm:$0xff]
        %v328 = vld [vmem:[#allocation8] sm:$0xff]
        %v329 = vld [vmem:[#allocation8 + $0x8] sm:$0xff]
        %v330 = vld [vmem:[#allocation8 + $0x10] sm:$0xff]
        %v331 = vld [vmem:[#allocation8 + $0x18] sm:$0xff]
        %v332 = vlaneseq
        %v333 = vshrl.u32 %v332, 7
        %v334 = vsub.s32 0, %v333
        %v335 = vrot.slane %v322, %v334
        %vm336 = vcmask 261120
        %v338 = vsel %vm336, %v320, 0
        %340 = vmatprep.subr.mxu0 0.0
        %341 = vmatpush1.msra.mxu0 0.0
        %342 = vmatprep.subr.mxu0 0.0
        %343 = vmatpush1.msra.mxu0 0.0
        %344 = vmatprep.subr.mxu0 0.0
        %345 = vmatpush1.msra.mxu0 0.0
        %346 = vmatprep.subr.mxu0 0.0
        %347 = vmatpush1.msra.mxu0 0.0
        %348 = vmatprep.subr.mxu0 0.0
        %349 = vmatpush1.msra.mxu0 0.0
        %350 = vmatprep.subr.mxu0 0.0
        %351 = vmatpush1.msra.mxu0 0.0
        %352 = vmatprep.subr.mxu0 0.0
        %353 = vmatpush1.msra.mxu0 0.0
        %354 = vmatprep.subr.mxu0 0.0
        %355 = vmatpush1.msra.mxu0 0.0
        %356 = vmatprep.subr.mxu0 0.0
        %357 = vmatpush1.msra.mxu0 0.0
        %358 = vmatprep.subr.mxu0 0.0
        %359 = vmatpush1.msra.mxu0 0.0
        %360 = vmatprep.subr.mxu0 0.0
        %361 = vmatpush1.msra.mxu0 0.0
        %362 = vmatprep.subr.mxu0 0.0
        %363 = vmatpush1.msra.mxu0 0.0
        %364 = vmatprep.subr.mxu0 0.0
        %365 = vmatpush1.msra.mxu0 %v327
        %366 = vmatprep.subr.mxu0 0.0
        %367 = vmatpush1.msra.mxu0 %v326
        %368 = vmatprep.subr.mxu0 0.0
        %369 = vmatpush1.msra.mxu0 %v325
        %370 = vmatprep.subr.mxu0 0.0
        %371 = vmatpush1.msra.mxu0 %v324
        %372 = vmatprep.subr.mxu0 0.0
        %373 = vmatpush2.msra.mxu0 0.0
        %374 = vmatprep.subr.mxu0 0.0
        %375 = vmatpush2.msra.mxu0 0.0
        %376 = vmatprep.subr.mxu0 0.0
        %377 = vmatpush2.msra.mxu0 0.0
        %378 = vmatprep.subr.mxu0 0.0
        %379 = vmatpush2.msra.mxu0 0.0
        %380 = vmatprep.subr.mxu0 0.0
        %381 = vmatpush2.msra.mxu0 0.0
        %382 = vmatprep.subr.mxu0 0.0
        %383 = vmatpush2.msra.mxu0 0.0
        %384 = vmatprep.subr.mxu0 0.0
        %385 = vmatpush2.msra.mxu0 0.0
        %386 = vmatprep.subr.mxu0 0.0
        %387 = vmatpush2.msra.mxu0 0.0
        %388 = vmatprep.subr.mxu0 0.0
        %389 = vmatpush2.msra.mxu0 0.0
        %390 = vmatprep.subr.mxu0 0.0
        %391 = vmatpush2.msra.mxu0 0.0
        %392 = vmatprep.subr.mxu0 0.0
        %393 = vmatpush2.msra.mxu0 0.0
        %394 = vmatprep.subr.mxu0 0.0
        %395 = vmatpush2.msra.mxu0 0.0
        %396 = vmatprep.subr.mxu0 0.0
        %397 = vmatpush2.msra.mxu0 0.0
        %398 = vmatprep.subr.mxu0 0.0
        %399 = vmatpush2.msra.mxu0 0.0
        %400 = vmatprep.subr.mxu0 0.0
        %401 = vmatpush2.msra.mxu0 0.0
        %402 = vmatprep.subr.mxu0 0.0
        %403 = vmatpush2.msra.mxu0 0.0
        %404 = vmatprep.mubr.f32.mxu0 0.0
        %405 = vmatmul.mubr.f32.gmra.mxu0 %v338
        %v406 = vpop.f32.mrf.mxu0
        %v407 = vadd.f32 %v335, %v406
        %v408 = vpop.f32.mrf.mxu0
        %409 = vdwg.mxu0
        %411 = vrot.lane.b32.xlu0 %v407, 96
        %v412 = vpop.permute.xlu0 %411
        %vm413 = vcmask 64512
        %v414 = vsel %vm413, %v407, 0
        %v416 = vsel %vm413, %v412, 0
        %418 = vmatprep.subr.mxu0 0.0
        %419 = vmatpush1.xpose.msra.mxu0 0.0
        %420 = vmatprep.subr.mxu0 0.0
        %421 = vmatpush1.xpose.msra.mxu0 0.0
        %422 = vmatprep.subr.mxu0 0.0
        %423 = vmatpush1.xpose.msra.mxu0 0.0
        %424 = vmatprep.subr.mxu0 0.0
        %425 = vmatpush1.xpose.msra.mxu0 0.0
        %426 = vmatprep.subr.mxu0 0.0
        %427 = vmatpush1.xpose.msra.mxu0 0.0
        %428 = vmatprep.subr.mxu0 0.0
        %429 = vmatpush1.xpose.msra.mxu0 0.0
        %430 = vmatprep.subr.mxu0 0.0
        %431 = vmatpush1.xpose.msra.mxu0 0.0
        %432 = vmatprep.subr.mxu0 0.0
        %433 = vmatpush1.xpose.msra.mxu0 0.0
        %434 = vmatprep.subr.mxu0 0.0
        %435 = vmatpush1.xpose.msra.mxu0 0.0
        %436 = vmatprep.subr.mxu0 0.0
        %437 = vmatpush1.xpose.msra.mxu0 0.0
        %438 = vmatprep.subr.mxu0 0.0
        %439 = vmatpush1.xpose.msra.mxu0 0.0
        %440 = vmatprep.subr.mxu0 0.0
        %441 = vmatpush1.xpose.msra.mxu0 0.0
        %442 = vmatprep.subr.mxu0 0.0
        %443 = vmatpush1.xpose.msra.mxu0 0.0
        %444 = vmatprep.subr.mxu0 0.0
        %445 = vmatpush1.xpose.msra.mxu0 0.0
        %446 = vmatprep.subr.mxu0 0.0
        %447 = vmatpush1.xpose.msra.mxu0 0.0
        %448 = vmatprep.subr.mxu0 0.0
        %449 = vmatpush1.xpose.msra.mxu0 %v416
        %450 = vmatprep.subr.mxu0 0.0
        %451 = vmatpush2.xpose.msra.mxu0 0.0
        %452 = vmatprep.subr.mxu0 0.0
        %453 = vmatpush2.xpose.msra.mxu0 0.0
        %454 = vmatprep.subr.mxu0 0.0
        %455 = vmatpush2.xpose.msra.mxu0 0.0
        %456 = vmatprep.subr.mxu0 0.0
        %457 = vmatpush2.xpose.msra.mxu0 0.0
        %458 = vmatprep.subr.mxu0 0.0
        %459 = vmatpush2.xpose.msra.mxu0 0.0
        %460 = vmatprep.subr.mxu0 0.0
        %461 = vmatpush2.xpose.msra.mxu0 0.0
        %462 = vmatprep.subr.mxu0 0.0
        %463 = vmatpush2.xpose.msra.mxu0 0.0
        %464 = vmatprep.subr.mxu0 0.0
        %465 = vmatpush2.xpose.msra.mxu0 0.0
        %466 = vmatprep.subr.mxu0 0.0
        %467 = vmatpush2.xpose.msra.mxu0 0.0
        %468 = vmatprep.subr.mxu0 0.0
        %469 = vmatpush2.xpose.msra.mxu0 0.0
        %470 = vmatprep.subr.mxu0 0.0
        %471 = vmatpush2.xpose.msra.mxu0 0.0
        %472 = vmatprep.subr.mxu0 0.0
        %473 = vmatpush2.xpose.msra.mxu0 0.0
        %474 = vmatprep.subr.mxu0 0.0
        %475 = vmatpush2.xpose.msra.mxu0 0.0
        %476 = vmatprep.subr.mxu0 0.0
        %477 = vmatpush2.xpose.msra.mxu0 0.0
        %478 = vmatprep.subr.mxu0 0.0
        %479 = vmatpush2.xpose.msra.mxu0 0.0
        %480 = vmatprep.subr.mxu0 0.0
        %481 = vmatpush2.xpose.msra.mxu0 0.0
        %482 = vmatprep.mubr.f32.mxu0 0.0
        %483 = vmatmul.mubr.f32.gmra.mxu0 %v414
        %v484 = vpop.f32.mrf.mxu0
        %v485 = vadd.f32 0.0, %v484
        %v486 = vpop.f32.mrf.mxu0
        %487 = vdwg.mxu0
        %v488 = vsel %vm413, %v485, -inf
        %489 = vmax.xlane.f32.xlu0 %v488
        %v490 = vpop.xlane.xlu0 %489
        %v491 = vsub.f32 %v485, %v490
        %v492 = vmul.f32 %v491, 1.442695
        %v493 = vpow.pop %v492
        %v494 = vsel %vm413, %v493, 0.0
        %495 = vadd.xlane.f32.xlu0 %v494
        %v496 = vpop.xlane.xlu0 %495
        %v497 = vrcp.pop %v496
        %v498 = vmul.f32 %v493, %v497
        %499 = vrot.lane.b32.xlu0 %v407, 64
        %v500 = vpop.permute.xlu0 %499
        %v503 = vsel %vm413, %v498, 0
        %505 = vmatprep.subr.mxu0 0.0
        %506 = vmatpush1.msra.mxu0 0.0
        %507 = vmatprep.subr.mxu0 0.0
        %508 = vmatpush1.msra.mxu0 0.0
        %509 = vmatprep.subr.mxu0 0.0
        %510 = vmatpush1.msra.mxu0 0.0
        %511 = vmatprep.subr.mxu0 0.0
        %512 = vmatpush1.msra.mxu0 0.0
        %513 = vmatprep.subr.mxu0 0.0
        %514 = vmatpush1.msra.mxu0 0.0
        %515 = vmatprep.subr.mxu0 0.0
        %516 = vmatpush1.msra.mxu0 0.0
        %517 = vmatprep.subr.mxu0 0.0
        %518 = vmatpush1.msra.mxu0 0.0
        %519 = vmatprep.subr.mxu0 0.0
        %520 = vmatpush1.msra.mxu0 0.0
        %521 = vmatprep.subr.mxu0 0.0
        %522 = vmatpush1.msra.mxu0 0.0
        %523 = vmatprep.subr.mxu0 0.0
        %524 = vmatpush1.msra.mxu0 0.0
        %525 = vmatprep.subr.mxu0 0.0
        %526 = vmatpush1.msra.mxu0 0.0
        %527 = vmatprep.subr.mxu0 0.0
        %528 = vmatpush1.msra.mxu0 0.0
        %529 = vmatprep.subr.mxu0 0.0
        %530 = vmatpush1.msra.mxu0 0.0
        %531 = vmatprep.subr.mxu0 0.0
        %532 = vmatpush1.msra.mxu0 0.0
        %533 = vmatprep.subr.mxu0 0.0
        %534 = vmatpush1.msra.mxu0 0.0
        %535 = vmatprep.subr.mxu0 0.0
        %536 = vmatpush1.msra.mxu0 %v500
        %537 = vmatprep.subr.mxu0 0.0
        %538 = vmatpush2.msra.mxu0 0.0
        %539 = vmatprep.subr.mxu0 0.0
        %540 = vmatpush2.msra.mxu0 0.0
        %541 = vmatprep.subr.mxu0 0.0
        %542 = vmatpush2.msra.mxu0 0.0
        %543 = vmatprep.subr.mxu0 0.0
        %544 = vmatpush2.msra.mxu0 0.0
        %545 = vmatprep.subr.mxu0 0.0
        %546 = vmatpush2.msra.mxu0 0.0
        %547 = vmatprep.subr.mxu0 0.0
        %548 = vmatpush2.msra.mxu0 0.0
        %549 = vmatprep.subr.mxu0 0.0
        %550 = vmatpush2.msra.mxu0 0.0
        %551 = vmatprep.subr.mxu0 0.0
        %552 = vmatpush2.msra.mxu0 0.0
        %553 = vmatprep.subr.mxu0 0.0
        %554 = vmatpush2.msra.mxu0 0.0
        %555 = vmatprep.subr.mxu0 0.0
        %556 = vmatpush2.msra.mxu0 0.0
        %557 = vmatprep.subr.mxu0 0.0
        %558 = vmatpush2.msra.mxu0 0.0
        %559 = vmatprep.subr.mxu0 0.0
        %560 = vmatpush2.msra.mxu0 0.0
        %561 = vmatprep.subr.mxu0 0.0
        %562 = vmatpush2.msra.mxu0 0.0
        %563 = vmatprep.subr.mxu0 0.0
        %564 = vmatpush2.msra.mxu0 0.0
        %565 = vmatprep.subr.mxu0 0.0
        %566 = vmatpush2.msra.mxu0 0.0
        %567 = vmatprep.subr.mxu0 0.0
        %568 = vmatpush2.msra.mxu0 0.0
        %569 = vmatprep.mubr.f32.mxu0 0.0
        %570 = vmatmul.mubr.f32.gmra.mxu0 %v503
        %v571 = vpop.f32.mrf.mxu0
        %v572 = vadd.f32 0.0, %v571
        %v573 = vpop.f32.mrf.mxu0
        %574 = vdwg.mxu0
        %575 = vrot.lane.b32.xlu0 %v407, 120
        %v576 = vpop.permute.xlu0 %575
        %577 = vrot.lane.b32.xlu0 %v407, 88
        %v578 = vpop.permute.xlu0 %577
        %v579 = vsel %vm413, %v576, 0
        %v581 = vsel %vm413, %v578, 0
        %583 = vmatprep.subr.mxu0 0.0
        %584 = vmatpush1.xpose.msra.mxu0 0.0
        %585 = vmatprep.subr.mxu0 0.0
        %586 = vmatpush1.xpose.msra.mxu0 0.0
        %587 = vmatprep.subr.mxu0 0.0
        %588 = vmatpush1.xpose.msra.mxu0 0.0
        %589 = vmatprep.subr.mxu0 0.0
        %590 = vmatpush1.xpose.msra.mxu0 0.0
        %591 = vmatprep.subr.mxu0 0.0
        %592 = vmatpush1.xpose.msra.mxu0 0.0
        %593 = vmatprep.subr.mxu0 0.0
        %594 = vmatpush1.xpose.msra.mxu0 0.0
        %595 = vmatprep.subr.mxu0 0.0
        %596 = vmatpush1.xpose.msra.mxu0 0.0
        %597 = vmatprep.subr.mxu0 0.0
        %598 = vmatpush1.xpose.msra.mxu0 0.0
        %599 = vmatprep.subr.mxu0 0.0
        %600 = vmatpush1.xpose.msra.mxu0 0.0
        %601 = vmatprep.subr.mxu0 0.0
        %602 = vmatpush1.xpose.msra.mxu0 0.0
        %603 = vmatprep.subr.mxu0 0.0
        %604 = vmatpush1.xpose.msra.mxu0 0.0
        %605 = vmatprep.subr.mxu0 0.0
        %606 = vmatpush1.xpose.msra.mxu0 0.0
        %607 = vmatprep.subr.mxu0 0.0
        %608 = vmatpush1.xpose.msra.mxu0 0.0
        %609 = vmatprep.subr.mxu0 0.0
        %610 = vmatpush1.xpose.msra.mxu0 0.0
        %611 = vmatprep.subr.mxu0 0.0
        %612 = vmatpush1.xpose.msra.mxu0 0.0
        %613 = vmatprep.subr.mxu0 0.0
        %614 = vmatpush1.xpose.msra.mxu0 %v581
        %615 = vmatprep.subr.mxu0 0.0
        %616 = vmatpush2.xpose.msra.mxu0 0.0
        %617 = vmatprep.subr.mxu0 0.0
        %618 = vmatpush2.xpose.msra.mxu0 0.0
        %619 = vmatprep.subr.mxu0 0.0
        %620 = vmatpush2.xpose.msra.mxu0 0.0
        %621 = vmatprep.subr.mxu0 0.0
        %622 = vmatpush2.xpose.msra.mxu0 0.0
        %623 = vmatprep.subr.mxu0 0.0
        %624 = vmatpush2.xpose.msra.mxu0 0.0
        %625 = vmatprep.subr.mxu0 0.0
        %626 = vmatpush2.xpose.msra.mxu0 0.0
        %627 = vmatprep.subr.mxu0 0.0
        %628 = vmatpush2.xpose.msra.mxu0 0.0
        %629 = vmatprep.subr.mxu0 0.0
        %630 = vmatpush2.xpose.msra.mxu0 0.0
        %631 = vmatprep.subr.mxu0 0.0
        %632 = vmatpush2.xpose.msra.mxu0 0.0
        %633 = vmatprep.subr.mxu0 0.0
        %634 = vmatpush2.xpose.msra.mxu0 0.0
        %635 = vmatprep.subr.mxu0 0.0
        %636 = vmatpush2.xpose.msra.mxu0 0.0
        %637 = vmatprep.subr.mxu0 0.0
        %638 = vmatpush2.xpose.msra.mxu0 0.0
        %639 = vmatprep.subr.mxu0 0.0
        %640 = vmatpush2.xpose.msra.mxu0 0.0
        %641 = vmatprep.subr.mxu0 0.0
        %642 = vmatpush2.xpose.msra.mxu0 0.0
        %643 = vmatprep.subr.mxu0 0.0
        %644 = vmatpush2.xpose.msra.mxu0 0.0
        %645 = vmatprep.subr.mxu0 0.0
        %646 = vmatpush2.xpose.msra.mxu0 0.0
        %647 = vmatprep.mubr.f32.mxu0 0.0
        %648 = vmatmul.mubr.f32.gmra.mxu0 %v579
        %v649 = vpop.f32.mrf.mxu0
        %v650 = vadd.f32 0.0, %v649
        %v651 = vpop.f32.mrf.mxu0
        %652 = vdwg.mxu0
        %v653 = vsel %vm413, %v650, -inf
        %654 = vmax.xlane.f32.xlu0 %v653
        %v655 = vpop.xlane.xlu0 %654
        %v656 = vsub.f32 %v650, %v655
        %v657 = vmul.f32 %v656, 1.442695
        %v658 = vpow.pop %v657
        %v659 = vsel %vm413, %v658, 0.0
        %660 = vadd.xlane.f32.xlu0 %v659
        %v661 = vpop.xlane.xlu0 %660
        %v662 = vrcp.pop %v661
        %v663 = vmul.f32 %v658, %v662
        %664 = vrot.lane.b32.xlu0 %v407, 56
        %v665 = vpop.permute.xlu0 %664
        %v668 = vsel %vm413, %v663, 0
        %670 = vmatprep.subr.mxu0 0.0
        %671 = vmatpush1.msra.mxu0 0.0
        %672 = vmatprep.subr.mxu0 0.0
        %673 = vmatpush1.msra.mxu0 0.0
        %674 = vmatprep.subr.mxu0 0.0
        %675 = vmatpush1.msra.mxu0 0.0
        %676 = vmatprep.subr.mxu0 0.0
        %677 = vmatpush1.msra.mxu0 0.0
        %678 = vmatprep.subr.mxu0 0.0
        %679 = vmatpush1.msra.mxu0 0.0
        %680 = vmatprep.subr.mxu0 0.0
        %681 = vmatpush1.msra.mxu0 0.0
        %682 = vmatprep.subr.mxu0 0.0
        %683 = vmatpush1.msra.mxu0 0.0
        %684 = vmatprep.subr.mxu0 0.0
        %685 = vmatpush1.msra.mxu0 0.0
        %686 = vmatprep.subr.mxu0 0.0
        %687 = vmatpush1.msra.mxu0 0.0
        %688 = vmatprep.subr.mxu0 0.0
        %689 = vmatpush1.msra.mxu0 0.0
        %690 = vmatprep.subr.mxu0 0.0
        %691 = vmatpush1.msra.mxu0 0.0
        %692 = vmatprep.subr.mxu0 0.0
        %693 = vmatpush1.msra.mxu0 0.0
        %694 = vmatprep.subr.mxu0 0.0
        %695 = vmatpush1.msra.mxu0 0.0
        %696 = vmatprep.subr.mxu0 0.0
        %697 = vmatpush1.msra.mxu0 0.0
        %698 = vmatprep.subr.mxu0 0.0
        %699 = vmatpush1.msra.mxu0 0.0
        %700 = vmatprep.subr.mxu0 0.0
        %701 = vmatpush1.msra.mxu0 %v665
        %702 = vmatprep.subr.mxu0 0.0
        %703 = vmatpush2.msra.mxu0 0.0
        %704 = vmatprep.subr.mxu0 0.0
        %705 = vmatpush2.msra.mxu0 0.0
        %706 = vmatprep.subr.mxu0 0.0
        %707 = vmatpush2.msra.mxu0 0.0
        %708 = vmatprep.subr.mxu0 0.0
        %709 = vmatpush2.msra.mxu0 0.0
        %710 = vmatprep.subr.mxu0 0.0
        %711 = vmatpush2.msra.mxu0 0.0
        %712 = vmatprep.subr.mxu0 0.0
        %713 = vmatpush2.msra.mxu0 0.0
        %714 = vmatprep.subr.mxu0 0.0
        %715 = vmatpush2.msra.mxu0 0.0
        %716 = vmatprep.subr.mxu0 0.0
        %717 = vmatpush2.msra.mxu0 0.0
        %718 = vmatprep.subr.mxu0 0.0
        %719 = vmatpush2.msra.mxu0 0.0
        %720 = vmatprep.subr.mxu0 0.0
        %721 = vmatpush2.msra.mxu0 0.0
        %722 = vmatprep.subr.mxu0 0.0
        %723 = vmatpush2.msra.mxu0 0.0
        %724 = vmatprep.subr.mxu0 0.0
        %725 = vmatpush2.msra.mxu0 0.0
        %726 = vmatprep.subr.mxu0 0.0
        %727 = vmatpush2.msra.mxu0 0.0
        %728 = vmatprep.subr.mxu0 0.0
        %729 = vmatpush2.msra.mxu0 0.0
        %730 = vmatprep.subr.mxu0 0.0
        %731 = vmatpush2.msra.mxu0 0.0
        %732 = vmatprep.subr.mxu0 0.0
        %733 = vmatpush2.msra.mxu0 0.0
        %734 = vmatprep.mubr.f32.mxu0 0.0
        %735 = vmatmul.mubr.f32.gmra.mxu0 %v668
        %v736 = vpop.f32.mrf.mxu0
        %v737 = vadd.f32 0.0, %v736
        %v738 = vpop.f32.mrf.mxu0
        %739 = vdwg.mxu0
        %v741 = vsel %vm413, %v737, 0
        %743 = vmatprep.subr.mxu0 0.0
        %744 = vmatpush1.msra.mxu0 0.0
        %745 = vmatprep.subr.mxu0 0.0
        %746 = vmatpush1.msra.mxu0 0.0
        %747 = vmatprep.subr.mxu0 0.0
        %748 = vmatpush1.msra.mxu0 0.0
        %749 = vmatprep.subr.mxu0 0.0
        %750 = vmatpush1.msra.mxu0 0.0
        %751 = vmatprep.subr.mxu0 0.0
        %752 = vmatpush1.msra.mxu0 0.0
        %753 = vmatprep.subr.mxu0 0.0
        %754 = vmatpush1.msra.mxu0 0.0
        %755 = vmatprep.subr.mxu0 0.0
        %756 = vmatpush1.msra.mxu0 0.0
        %757 = vmatprep.subr.mxu0 0.0
        %758 = vmatpush1.msra.mxu0 0.0
        %759 = vmatprep.subr.mxu0 0.0
        %760 = vmatpush1.msra.mxu0 0.0
        %761 = vmatprep.subr.mxu0 0.0
        %762 = vmatpush1.msra.mxu0 0.0
        %763 = vmatprep.subr.mxu0 0.0
        %764 = vmatpush1.msra.mxu0 0.0
        %765 = vmatprep.subr.mxu0 0.0
        %766 = vmatpush1.msra.mxu0 0.0
        %767 = vmatprep.subr.mxu0 0.0
        %768 = vmatpush1.msra.mxu0 0.0
        %769 = vmatprep.subr.mxu0 0.0
        %770 = vmatpush1.msra.mxu0 0.0
        %771 = vmatprep.subr.mxu0 0.0
        %772 = vmatpush1.msra.mxu0 0.0
        %773 = vmatprep.subr.mxu0 0.0
        %774 = vmatpush1.msra.mxu0 %v329
        %775 = vmatprep.subr.mxu0 0.0
        %776 = vmatpush2.msra.mxu0 0.0
        %777 = vmatprep.subr.mxu0 0.0
        %778 = vmatpush2.msra.mxu0 0.0
        %779 = vmatprep.subr.mxu0 0.0
        %780 = vmatpush2.msra.mxu0 0.0
        %781 = vmatprep.subr.mxu0 0.0
        %782 = vmatpush2.msra.mxu0 0.0
        %783 = vmatprep.subr.mxu0 0.0
        %784 = vmatpush2.msra.mxu0 0.0
        %785 = vmatprep.subr.mxu0 0.0
        %786 = vmatpush2.msra.mxu0 0.0
        %787 = vmatprep.subr.mxu0 0.0
        %788 = vmatpush2.msra.mxu0 0.0
        %789 = vmatprep.subr.mxu0 0.0
        %790 = vmatpush2.msra.mxu0 0.0
        %791 = vmatprep.subr.mxu0 0.0
        %792 = vmatpush2.msra.mxu0 0.0
        %793 = vmatprep.subr.mxu0 0.0
        %794 = vmatpush2.msra.mxu0 0.0
        %795 = vmatprep.subr.mxu0 0.0
        %796 = vmatpush2.msra.mxu0 0.0
        %797 = vmatprep.subr.mxu0 0.0
        %798 = vmatpush2.msra.mxu0 0.0
        %799 = vmatprep.subr.mxu0 0.0
        %800 = vmatpush2.msra.mxu0 0.0
        %801 = vmatprep.subr.mxu0 0.0
        %802 = vmatpush2.msra.mxu0 0.0
        %803 = vmatprep.subr.mxu0 0.0
        %804 = vmatpush2.msra.mxu0 0.0
        %805 = vmatprep.subr.mxu0 0.0
        %806 = vmatpush2.msra.mxu0 0.0
        %807 = vmatprep.mubr.f32.mxu0 0.0
        %808 = vmatmul.mubr.f32.gmra.mxu0 %v741
        %v809 = vpop.f32.mrf.mxu0
        %v810 = vadd.f32 0.0, %v809
        %v811 = vpop.f32.mrf.mxu0
        %812 = vdwg.mxu0
        %v814 = vsel %vm413, %v572, 0
        %816 = vmatprep.subr.mxu0 0.0
        %817 = vmatpush1.msra.mxu0 0.0
        %818 = vmatprep.subr.mxu0 0.0
        %819 = vmatpush1.msra.mxu0 0.0
        %820 = vmatprep.subr.mxu0 0.0
        %821 = vmatpush1.msra.mxu0 0.0
        %822 = vmatprep.subr.mxu0 0.0
        %823 = vmatpush1.msra.mxu0 0.0
        %824 = vmatprep.subr.mxu0 0.0
        %825 = vmatpush1.msra.mxu0 0.0
        %826 = vmatprep.subr.mxu0 0.0
        %827 = vmatpush1.msra.mxu0 0.0
        %828 = vmatprep.subr.mxu0 0.0
        %829 = vmatpush1.msra.mxu0 0.0
        %830 = vmatprep.subr.mxu0 0.0
        %831 = vmatpush1.msra.mxu0 0.0
        %832 = vmatprep.subr.mxu0 0.0
        %833 = vmatpush1.msra.mxu0 0.0
        %834 = vmatprep.subr.mxu0 0.0
        %835 = vmatpush1.msra.mxu0 0.0
        %836 = vmatprep.subr.mxu0 0.0
        %837 = vmatpush1.msra.mxu0 0.0
        %838 = vmatprep.subr.mxu0 0.0
        %839 = vmatpush1.msra.mxu0 0.0
        %840 = vmatprep.subr.mxu0 0.0
        %841 = vmatpush1.msra.mxu0 0.0
        %842 = vmatprep.subr.mxu0 0.0
        %843 = vmatpush1.msra.mxu0 0.0
        %844 = vmatprep.subr.mxu0 0.0
        %845 = vmatpush1.msra.mxu0 0.0
        %846 = vmatprep.subr.mxu0 0.0
        %847 = vmatpush1.msra.mxu0 %v328
        %848 = vmatprep.subr.mxu0 0.0
        %849 = vmatpush2.msra.mxu0 0.0
        %850 = vmatprep.subr.mxu0 0.0
        %851 = vmatpush2.msra.mxu0 0.0
        %852 = vmatprep.subr.mxu0 0.0
        %853 = vmatpush2.msra.mxu0 0.0
        %854 = vmatprep.subr.mxu0 0.0
        %855 = vmatpush2.msra.mxu0 0.0
        %856 = vmatprep.subr.mxu0 0.0
        %857 = vmatpush2.msra.mxu0 0.0
        %858 = vmatprep.subr.mxu0 0.0
        %859 = vmatpush2.msra.mxu0 0.0
        %860 = vmatprep.subr.mxu0 0.0
        %861 = vmatpush2.msra.mxu0 0.0
        %862 = vmatprep.subr.mxu0 0.0
        %863 = vmatpush2.msra.mxu0 0.0
        %864 = vmatprep.subr.mxu0 0.0
        %865 = vmatpush2.msra.mxu0 0.0
        %866 = vmatprep.subr.mxu0 0.0
        %867 = vmatpush2.msra.mxu0 0.0
        %868 = vmatprep.subr.mxu0 0.0
        %869 = vmatpush2.msra.mxu0 0.0
        %870 = vmatprep.subr.mxu0 0.0
        %871 = vmatpush2.msra.mxu0 0.0
        %872 = vmatprep.subr.mxu0 0.0
        %873 = vmatpush2.msra.mxu0 0.0
        %874 = vmatprep.subr.mxu0 0.0
        %875 = vmatpush2.msra.mxu0 0.0
        %876 = vmatprep.subr.mxu0 0.0
        %877 = vmatpush2.msra.mxu0 0.0
        %878 = vmatprep.subr.mxu0 0.0
        %879 = vmatpush2.msra.mxu0 0.0
        %880 = vmatprep.mubr.f32.mxu0 0.0
        %881 = vmatmul.mubr.f32.gmra.mxu0 %v814
        %v882 = vpop.f32.mrf.mxu0
        %v883 = vadd.f32 %v810, %v882
        %v884 = vpop.f32.mrf.mxu0
        %885 = vdwg.mxu0
        %886 = vrot.lane.b32.xlu0 %v407, 112
        %v887 = vpop.permute.xlu0 %886
        %888 = vrot.lane.b32.xlu0 %v407, 80
        %v889 = vpop.permute.xlu0 %888
        %v890 = vsel %vm413, %v887, 0
        %v892 = vsel %vm413, %v889, 0
        %894 = vmatprep.subr.mxu0 0.0
        %895 = vmatpush1.xpose.msra.mxu0 0.0
        %896 = vmatprep.subr.mxu0 0.0
        %897 = vmatpush1.xpose.msra.mxu0 0.0
        %898 = vmatprep.subr.mxu0 0.0
        %899 = vmatpush1.xpose.msra.mxu0 0.0
        %900 = vmatprep.subr.mxu0 0.0
        %901 = vmatpush1.xpose.msra.mxu0 0.0
        %902 = vmatprep.subr.mxu0 0.0
        %903 = vmatpush1.xpose.msra.mxu0 0.0
        %904 = vmatprep.subr.mxu0 0.0
        %905 = vmatpush1.xpose.msra.mxu0 0.0
        %906 = vmatprep.subr.mxu0 0.0
        %907 = vmatpush1.xpose.msra.mxu0 0.0
        %908 = vmatprep.subr.mxu0 0.0
        %909 = vmatpush1.xpose.msra.mxu0 0.0
        %910 = vmatprep.subr.mxu0 0.0
        %911 = vmatpush1.xpose.msra.mxu0 0.0
        %912 = vmatprep.subr.mxu0 0.0
        %913 = vmatpush1.xpose.msra.mxu0 0.0
        %914 = vmatprep.subr.mxu0 0.0
        %915 = vmatpush1.xpose.msra.mxu0 0.0
        %916 = vmatprep.subr.mxu0 0.0
        %917 = vmatpush1.xpose.msra.mxu0 0.0
        %918 = vmatprep.subr.mxu0 0.0
        %919 = vmatpush1.xpose.msra.mxu0 0.0
        %920 = vmatprep.subr.mxu0 0.0
        %921 = vmatpush1.xpose.msra.mxu0 0.0
        %922 = vmatprep.subr.mxu0 0.0
        %923 = vmatpush1.xpose.msra.mxu0 0.0
        %924 = vmatprep.subr.mxu0 0.0
        %925 = vmatpush1.xpose.msra.mxu0 %v892
        %926 = vmatprep.subr.mxu0 0.0
        %927 = vmatpush2.xpose.msra.mxu0 0.0
        %928 = vmatprep.subr.mxu0 0.0
        %929 = vmatpush2.xpose.msra.mxu0 0.0
        %930 = vmatprep.subr.mxu0 0.0
        %931 = vmatpush2.xpose.msra.mxu0 0.0
        %932 = vmatprep.subr.mxu0 0.0
        %933 = vmatpush2.xpose.msra.mxu0 0.0
        %934 = vmatprep.subr.mxu0 0.0
        %935 = vmatpush2.xpose.msra.mxu0 0.0
        %936 = vmatprep.subr.mxu0 0.0
        %937 = vmatpush2.xpose.msra.mxu0 0.0
        %938 = vmatprep.subr.mxu0 0.0
        %939 = vmatpush2.xpose.msra.mxu0 0.0
        %940 = vmatprep.subr.mxu0 0.0
        %941 = vmatpush2.xpose.msra.mxu0 0.0
        %942 = vmatprep.subr.mxu0 0.0
        %943 = vmatpush2.xpose.msra.mxu0 0.0
        %944 = vmatprep.subr.mxu0 0.0
        %945 = vmatpush2.xpose.msra.mxu0 0.0
        %946 = vmatprep.subr.mxu0 0.0
        %947 = vmatpush2.xpose.msra.mxu0 0.0
        %948 = vmatprep.subr.mxu0 0.0
        %949 = vmatpush2.xpose.msra.mxu0 0.0
        %950 = vmatprep.subr.mxu0 0.0
        %951 = vmatpush2.xpose.msra.mxu0 0.0
        %952 = vmatprep.subr.mxu0 0.0
        %953 = vmatpush2.xpose.msra.mxu0 0.0
        %954 = vmatprep.subr.mxu0 0.0
        %955 = vmatpush2.xpose.msra.mxu0 0.0
        %956 = vmatprep.subr.mxu0 0.0
        %957 = vmatpush2.xpose.msra.mxu0 0.0
        %958 = vmatprep.mubr.f32.mxu0 0.0
        %959 = vmatmul.mubr.f32.gmra.mxu0 %v890
        %v960 = vpop.f32.mrf.mxu0
        %v961 = vadd.f32 0.0, %v960
        %v962 = vpop.f32.mrf.mxu0
        %963 = vdwg.mxu0
        %v964 = vsel %vm413, %v961, -inf
        %965 = vmax.xlane.f32.xlu0 %v964
        %v966 = vpop.xlane.xlu0 %965
        %v967 = vsub.f32 %v961, %v966
        %v968 = vmul.f32 %v967, 1.442695
        %v969 = vpow.pop %v968
        %v970 = vsel %vm413, %v969, 0.0
        %971 = vadd.xlane.f32.xlu0 %v970
        %v972 = vpop.xlane.xlu0 %971
        %v973 = vrcp.pop %v972
        %v974 = vmul.f32 %v969, %v973
        %975 = vrot.lane.b32.xlu0 %v407, 48
        %v976 = vpop.permute.xlu0 %975
        %v979 = vsel %vm413, %v974, 0
        %981 = vmatprep.subr.mxu0 0.0
        %982 = vmatpush1.msra.mxu0 0.0
        %983 = vmatprep.subr.mxu0 0.0
        %984 = vmatpush1.msra.mxu0 0.0
        %985 = vmatprep.subr.mxu0 0.0
        %986 = vmatpush1.msra.mxu0 0.0
        %987 = vmatprep.subr.mxu0 0.0
        %988 = vmatpush1.msra.mxu0 0.0
        %989 = vmatprep.subr.mxu0 0.0
        %990 = vmatpush1.msra.mxu0 0.0
        %991 = vmatprep.subr.mxu0 0.0
        %992 = vmatpush1.msra.mxu0 0.0
        %993 = vmatprep.subr.mxu0 0.0
        %994 = vmatpush1.msra.mxu0 0.0
        %995 = vmatprep.subr.mxu0 0.0
        %996 = vmatpush1.msra.mxu0 0.0
        %997 = vmatprep.subr.mxu0 0.0
        %998 = vmatpush1.msra.mxu0 0.0
        %999 = vmatprep.subr.mxu0 0.0
        %1000 = vmatpush1.msra.mxu0 0.0
        %1001 = vmatprep.subr.mxu0 0.0
        %1002 = vmatpush1.msra.mxu0 0.0
        %1003 = vmatprep.subr.mxu0 0.0
        %1004 = vmatpush1.msra.mxu0 0.0
        %1005 = vmatprep.subr.mxu0 0.0
        %1006 = vmatpush1.msra.mxu0 0.0
        %1007 = vmatprep.subr.mxu0 0.0
        %1008 = vmatpush1.msra.mxu0 0.0
        %1009 = vmatprep.subr.mxu0 0.0
        %1010 = vmatpush1.msra.mxu0 0.0
        %1011 = vmatprep.subr.mxu0 0.0
        %1012 = vmatpush1.msra.mxu0 %v976
        %1013 = vmatprep.subr.mxu0 0.0
        %1014 = vmatpush2.msra.mxu0 0.0
        %1015 = vmatprep.subr.mxu0 0.0
        %1016 = vmatpush2.msra.mxu0 0.0
        %1017 = vmatprep.subr.mxu0 0.0
        %1018 = vmatpush2.msra.mxu0 0.0
        %1019 = vmatprep.subr.mxu0 0.0
        %1020 = vmatpush2.msra.mxu0 0.0
        %1021 = vmatprep.subr.mxu0 0.0
        %1022 = vmatpush2.msra.mxu0 0.0
        %1023 = vmatprep.subr.mxu0 0.0
        %1024 = vmatpush2.msra.mxu0 0.0
        %1025 = vmatprep.subr.mxu0 0.0
        %1026 = vmatpush2.msra.mxu0 0.0
        %1027 = vmatprep.subr.mxu0 0.0
        %1028 = vmatpush2.msra.mxu0 0.0
        %1029 = vmatprep.subr.mxu0 0.0
        %1030 = vmatpush2.msra.mxu0 0.0
        %1031 = vmatprep.subr.mxu0 0.0
        %1032 = vmatpush2.msra.mxu0 0.0
        %1033 = vmatprep.subr.mxu0 0.0
        %1034 = vmatpush2.msra.mxu0 0.0
        %1035 = vmatprep.subr.mxu0 0.0
        %1036 = vmatpush2.msra.mxu0 0.0
        %1037 = vmatprep.subr.mxu0 0.0
        %1038 = vmatpush2.msra.mxu0 0.0
        %1039 = vmatprep.subr.mxu0 0.0
        %1040 = vmatpush2.msra.mxu0 0.0
        %1041 = vmatprep.subr.mxu0 0.0
        %1042 = vmatpush2.msra.mxu0 0.0
        %1043 = vmatprep.subr.mxu0 0.0
        %1044 = vmatpush2.msra.mxu0 0.0
        %1045 = vmatprep.mubr.f32.mxu0 0.0
        %1046 = vmatmul.mubr.f32.gmra.mxu0 %v979
        %v1047 = vpop.f32.mrf.mxu0
        %v1048 = vadd.f32 0.0, %v1047
        %v1049 = vpop.f32.mrf.mxu0
        %1050 = vdwg.mxu0
        %v1052 = vsel %vm413, %v1048, 0
        %1054 = vmatprep.subr.mxu0 0.0
        %1055 = vmatpush1.msra.mxu0 0.0
        %1056 = vmatprep.subr.mxu0 0.0
        %1057 = vmatpush1.msra.mxu0 0.0
        %1058 = vmatprep.subr.mxu0 0.0
        %1059 = vmatpush1.msra.mxu0 0.0
        %1060 = vmatprep.subr.mxu0 0.0
        %1061 = vmatpush1.msra.mxu0 0.0
        %1062 = vmatprep.subr.mxu0 0.0
        %1063 = vmatpush1.msra.mxu0 0.0
        %1064 = vmatprep.subr.mxu0 0.0
        %1065 = vmatpush1.msra.mxu0 0.0
        %1066 = vmatprep.subr.mxu0 0.0
        %1067 = vmatpush1.msra.mxu0 0.0
        %1068 = vmatprep.subr.mxu0 0.0
        %1069 = vmatpush1.msra.mxu0 0.0
        %1070 = vmatprep.subr.mxu0 0.0
        %1071 = vmatpush1.msra.mxu0 0.0
        %1072 = vmatprep.subr.mxu0 0.0
        %1073 = vmatpush1.msra.mxu0 0.0
        %1074 = vmatprep.subr.mxu0 0.0
        %1075 = vmatpush1.msra.mxu0 0.0
        %1076 = vmatprep.subr.mxu0 0.0
        %1077 = vmatpush1.msra.mxu0 0.0
        %1078 = vmatprep.subr.mxu0 0.0
        %1079 = vmatpush1.msra.mxu0 0.0
        %1080 = vmatprep.subr.mxu0 0.0
        %1081 = vmatpush1.msra.mxu0 0.0
        %1082 = vmatprep.subr.mxu0 0.0
        %1083 = vmatpush1.msra.mxu0 0.0
        %1084 = vmatprep.subr.mxu0 0.0
        %1085 = vmatpush1.msra.mxu0 %v330
        %1086 = vmatprep.subr.mxu0 0.0
        %1087 = vmatpush2.msra.mxu0 0.0
        %1088 = vmatprep.subr.mxu0 0.0
        %1089 = vmatpush2.msra.mxu0 0.0
        %1090 = vmatprep.subr.mxu0 0.0
        %1091 = vmatpush2.msra.mxu0 0.0
        %1092 = vmatprep.subr.mxu0 0.0
        %1093 = vmatpush2.msra.mxu0 0.0
        %1094 = vmatprep.subr.mxu0 0.0
        %1095 = vmatpush2.msra.mxu0 0.0
        %1096 = vmatprep.subr.mxu0 0.0
        %1097 = vmatpush2.msra.mxu0 0.0
        %1098 = vmatprep.subr.mxu0 0.0
        %1099 = vmatpush2.msra.mxu0 0.0
        %1100 = vmatprep.subr.mxu0 0.0
        %1101 = vmatpush2.msra.mxu0 0.0
        %1102 = vmatprep.subr.mxu0 0.0
        %1103 = vmatpush2.msra.mxu0 0.0
        %1104 = vmatprep.subr.mxu0 0.0
        %1105 = vmatpush2.msra.mxu0 0.0
        %1106 = vmatprep.subr.mxu0 0.0
        %1107 = vmatpush2.msra.mxu0 0.0
        %1108 = vmatprep.subr.mxu0 0.0
        %1109 = vmatpush2.msra.mxu0 0.0
        %1110 = vmatprep.subr.mxu0 0.0
        %1111 = vmatpush2.msra.mxu0 0.0
        %1112 = vmatprep.subr.mxu0 0.0
        %1113 = vmatpush2.msra.mxu0 0.0
        %1114 = vmatprep.subr.mxu0 0.0
        %1115 = vmatpush2.msra.mxu0 0.0
        %1116 = vmatprep.subr.mxu0 0.0
        %1117 = vmatpush2.msra.mxu0 0.0
        %1118 = vmatprep.mubr.f32.mxu0 0.0
        %1119 = vmatmul.mubr.f32.gmra.mxu0 %v1052
        %v1120 = vpop.f32.mrf.mxu0
        %v1121 = vadd.f32 0.0, %v1120
        %v1122 = vpop.f32.mrf.mxu0
        %1123 = vdwg.mxu0
        %v1124 = vadd.f32 %v883, %v1121
        %1125 = vrot.lane.b32.xlu0 %v407, 104
        %v1126 = vpop.permute.xlu0 %1125
        %1127 = vrot.lane.b32.xlu0 %v407, 72
        %v1128 = vpop.permute.xlu0 %1127
        %v1129 = vsel %vm413, %v1126, 0
        %v1131 = vsel %vm413, %v1128, 0
        %1133 = vmatprep.subr.mxu0 0.0
        %1134 = vmatpush1.xpose.msra.mxu0 0.0
        %1135 = vmatprep.subr.mxu0 0.0
        %1136 = vmatpush1.xpose.msra.mxu0 0.0
        %1137 = vmatprep.subr.mxu0 0.0
        %1138 = vmatpush1.xpose.msra.mxu0 0.0
        %1139 = vmatprep.subr.mxu0 0.0
        %1140 = vmatpush1.xpose.msra.mxu0 0.0
        %1141 = vmatprep.subr.mxu0 0.0
        %1142 = vmatpush1.xpose.msra.mxu0 0.0
        %1143 = vmatprep.subr.mxu0 0.0
        %1144 = vmatpush1.xpose.msra.mxu0 0.0
        %1145 = vmatprep.subr.mxu0 0.0
        %1146 = vmatpush1.xpose.msra.mxu0 0.0
        %1147 = vmatprep.subr.mxu0 0.0
        %1148 = vmatpush1.xpose.msra.mxu0 0.0
        %1149 = vmatprep.subr.mxu0 0.0
        %1150 = vmatpush1.xpose.msra.mxu0 0.0
        %1151 = vmatprep.subr.mxu0 0.0
        %1152 = vmatpush1.xpose.msra.mxu0 0.0
        %1153 = vmatprep.subr.mxu0 0.0
        %1154 = vmatpush1.xpose.msra.mxu0 0.0
        %1155 = vmatprep.subr.mxu0 0.0
        %1156 = vmatpush1.xpose.msra.mxu0 0.0
        %1157 = vmatprep.subr.mxu0 0.0
        %1158 = vmatpush1.xpose.msra.mxu0 0.0
        %1159 = vmatprep.subr.mxu0 0.0
        %1160 = vmatpush1.xpose.msra.mxu0 0.0
        %1161 = vmatprep.subr.mxu0 0.0
        %1162 = vmatpush1.xpose.msra.mxu0 0.0
        %1163 = vmatprep.subr.mxu0 0.0
        %1164 = vmatpush1.xpose.msra.mxu0 %v1131
        %1165 = vmatprep.subr.mxu0 0.0
        %1166 = vmatpush2.xpose.msra.mxu0 0.0
        %1167 = vmatprep.subr.mxu0 0.0
        %1168 = vmatpush2.xpose.msra.mxu0 0.0
        %1169 = vmatprep.subr.mxu0 0.0
        %1170 = vmatpush2.xpose.msra.mxu0 0.0
        %1171 = vmatprep.subr.mxu0 0.0
        %1172 = vmatpush2.xpose.msra.mxu0 0.0
        %1173 = vmatprep.subr.mxu0 0.0
        %1174 = vmatpush2.xpose.msra.mxu0 0.0
        %1175 = vmatprep.subr.mxu0 0.0
        %1176 = vmatpush2.xpose.msra.mxu0 0.0
        %1177 = vmatprep.subr.mxu0 0.0
        %1178 = vmatpush2.xpose.msra.mxu0 0.0
        %1179 = vmatprep.subr.mxu0 0.0
        %1180 = vmatpush2.xpose.msra.mxu0 0.0
        %1181 = vmatprep.subr.mxu0 0.0
        %1182 = vmatpush2.xpose.msra.mxu0 0.0
        %1183 = vmatprep.subr.mxu0 0.0
        %1184 = vmatpush2.xpose.msra.mxu0 0.0
        %1185 = vmatprep.subr.mxu0 0.0
        %1186 = vmatpush2.xpose.msra.mxu0 0.0
        %1187 = vmatprep.subr.mxu0 0.0
        %1188 = vmatpush2.xpose.msra.mxu0 0.0
        %1189 = vmatprep.subr.mxu0 0.0
        %1190 = vmatpush2.xpose.msra.mxu0 0.0
        %1191 = vmatprep.subr.mxu0 0.0
        %1192 = vmatpush2.xpose.msra.mxu0 0.0
        %1193 = vmatprep.subr.mxu0 0.0
        %1194 = vmatpush2.xpose.msra.mxu0 0.0
        %1195 = vmatprep.subr.mxu0 0.0
        %1196 = vmatpush2.xpose.msra.mxu0 0.0
        %1197 = vmatprep.mubr.f32.mxu0 0.0
        %1198 = vmatmul.mubr.f32.gmra.mxu0 %v1129
        %v1199 = vpop.f32.mrf.mxu0
        %v1200 = vadd.f32 0.0, %v1199
        %v1201 = vpop.f32.mrf.mxu0
        %1202 = vdwg.mxu0
        %v1203 = vsel %vm413, %v1200, -inf
        %1204 = vmax.xlane.f32.xlu0 %v1203
        %v1205 = vpop.xlane.xlu0 %1204
        %v1206 = vsub.f32 %v1200, %v1205
        %v1207 = vmul.f32 %v1206, 1.442695
        %v1208 = vpow.pop %v1207
        %v1209 = vsel %vm413, %v1208, 0.0
        %1210 = vadd.xlane.f32.xlu0 %v1209
        %v1211 = vpop.xlane.xlu0 %1210
        %v1212 = vrcp.pop %v1211
        %v1213 = vmul.f32 %v1208, %v1212
        %1214 = vrot.lane.b32.xlu0 %v407, 40
        %v1215 = vpop.permute.xlu0 %1214
        %v1218 = vsel %vm413, %v1213, 0
        %1220 = vmatprep.subr.mxu0 0.0
        %1221 = vmatpush1.msra.mxu0 0.0
        %1222 = vmatprep.subr.mxu0 0.0
        %1223 = vmatpush1.msra.mxu0 0.0
        %1224 = vmatprep.subr.mxu0 0.0
        %1225 = vmatpush1.msra.mxu0 0.0
        %1226 = vmatprep.subr.mxu0 0.0
        %1227 = vmatpush1.msra.mxu0 0.0
        %1228 = vmatprep.subr.mxu0 0.0
        %1229 = vmatpush1.msra.mxu0 0.0
        %1230 = vmatprep.subr.mxu0 0.0
        %1231 = vmatpush1.msra.mxu0 0.0
        %1232 = vmatprep.subr.mxu0 0.0
        %1233 = vmatpush1.msra.mxu0 0.0
        %1234 = vmatprep.subr.mxu0 0.0
        %1235 = vmatpush1.msra.mxu0 0.0
        %1236 = vmatprep.subr.mxu0 0.0
        %1237 = vmatpush1.msra.mxu0 0.0
        %1238 = vmatprep.subr.mxu0 0.0
        %1239 = vmatpush1.msra.mxu0 0.0
        %1240 = vmatprep.subr.mxu0 0.0
        %1241 = vmatpush1.msra.mxu0 0.0
        %1242 = vmatprep.subr.mxu0 0.0
        %1243 = vmatpush1.msra.mxu0 0.0
        %1244 = vmatprep.subr.mxu0 0.0
        %1245 = vmatpush1.msra.mxu0 0.0
        %1246 = vmatprep.subr.mxu0 0.0
        %1247 = vmatpush1.msra.mxu0 0.0
        %1248 = vmatprep.subr.mxu0 0.0
        %1249 = vmatpush1.msra.mxu0 0.0
        %1250 = vmatprep.subr.mxu0 0.0
        %1251 = vmatpush1.msra.mxu0 %v1215
        %1252 = vmatprep.subr.mxu0 0.0
        %1253 = vmatpush2.msra.mxu0 0.0
        %1254 = vmatprep.subr.mxu0 0.0
        %1255 = vmatpush2.msra.mxu0 0.0
        %1256 = vmatprep.subr.mxu0 0.0
        %1257 = vmatpush2.msra.mxu0 0.0
        %1258 = vmatprep.subr.mxu0 0.0
        %1259 = vmatpush2.msra.mxu0 0.0
        %1260 = vmatprep.subr.mxu0 0.0
        %1261 = vmatpush2.msra.mxu0 0.0
        %1262 = vmatprep.subr.mxu0 0.0
        %1263 = vmatpush2.msra.mxu0 0.0
        %1264 = vmatprep.subr.mxu0 0.0
        %1265 = vmatpush2.msra.mxu0 0.0
        %1266 = vmatprep.subr.mxu0 0.0
        %1267 = vmatpush2.msra.mxu0 0.0
        %1268 = vmatprep.subr.mxu0 0.0
        %1269 = vmatpush2.msra.mxu0 0.0
        %1270 = vmatprep.subr.mxu0 0.0
        %1271 = vmatpush2.msra.mxu0 0.0
        %1272 = vmatprep.subr.mxu0 0.0
        %1273 = vmatpush2.msra.mxu0 0.0
        %1274 = vmatprep.subr.mxu0 0.0
        %1275 = vmatpush2.msra.mxu0 0.0
        %1276 = vmatprep.subr.mxu0 0.0
        %1277 = vmatpush2.msra.mxu0 0.0
        %1278 = vmatprep.subr.mxu0 0.0
        %1279 = vmatpush2.msra.mxu0 0.0
        %1280 = vmatprep.subr.mxu0 0.0
        %1281 = vmatpush2.msra.mxu0 0.0
        %1282 = vmatprep.subr.mxu0 0.0
        %1283 = vmatpush2.msra.mxu0 0.0
        %1284 = vmatprep.mubr.f32.mxu0 0.0
        %1285 = vmatmul.mubr.f32.gmra.mxu0 %v1218
        %v1286 = vpop.f32.mrf.mxu0
        %v1287 = vadd.f32 0.0, %v1286
        %v1288 = vpop.f32.mrf.mxu0
        %1289 = vdwg.mxu0
        %v1291 = vsel %vm413, %v1287, 0
        %1293 = vmatprep.subr.mxu0 0.0
        %1294 = vmatpush1.msra.mxu0 0.0
        %1295 = vmatprep.subr.mxu0 0.0
        %1296 = vmatpush1.msra.mxu0 0.0
        %1297 = vmatprep.subr.mxu0 0.0
        %1298 = vmatpush1.msra.mxu0 0.0
        %1299 = vmatprep.subr.mxu0 0.0
        %1300 = vmatpush1.msra.mxu0 0.0
        %1301 = vmatprep.subr.mxu0 0.0
        %1302 = vmatpush1.msra.mxu0 0.0
        %1303 = vmatprep.subr.mxu0 0.0
        %1304 = vmatpush1.msra.mxu0 0.0
        %1305 = vmatprep.subr.mxu0 0.0
        %1306 = vmatpush1.msra.mxu0 0.0
        %1307 = vmatprep.subr.mxu0 0.0
        %1308 = vmatpush1.msra.mxu0 0.0
        %1309 = vmatprep.subr.mxu0 0.0
        %1310 = vmatpush1.msra.mxu0 0.0
        %1311 = vmatprep.subr.mxu0 0.0
        %1312 = vmatpush1.msra.mxu0 0.0
        %1313 = vmatprep.subr.mxu0 0.0
        %1314 = vmatpush1.msra.mxu0 0.0
        %1315 = vmatprep.subr.mxu0 0.0
        %1316 = vmatpush1.msra.mxu0 0.0
        %1317 = vmatprep.subr.mxu0 0.0
        %1318 = vmatpush1.msra.mxu0 0.0
        %1319 = vmatprep.subr.mxu0 0.0
        %1320 = vmatpush1.msra.mxu0 0.0
        %1321 = vmatprep.subr.mxu0 0.0
        %1322 = vmatpush1.msra.mxu0 0.0
        %1323 = vmatprep.subr.mxu0 0.0
        %1324 = vmatpush1.msra.mxu0 %v331
        %1325 = vmatprep.subr.mxu0 0.0
        %1326 = vmatpush2.msra.mxu0 0.0
        %1327 = vmatprep.subr.mxu0 0.0
        %1328 = vmatpush2.msra.mxu0 0.0
        %1329 = vmatprep.subr.mxu0 0.0
        %1330 = vmatpush2.msra.mxu0 0.0
        %1331 = vmatprep.subr.mxu0 0.0
        %1332 = vmatpush2.msra.mxu0 0.0
        %1333 = vmatprep.subr.mxu0 0.0
        %1334 = vmatpush2.msra.mxu0 0.0
        %1335 = vmatprep.subr.mxu0 0.0
        %1336 = vmatpush2.msra.mxu0 0.0
        %1337 = vmatprep.subr.mxu0 0.0
        %1338 = vmatpush2.msra.mxu0 0.0
        %1339 = vmatprep.subr.mxu0 0.0
        %1340 = vmatpush2.msra.mxu0 0.0
        %1341 = vmatprep.subr.mxu0 0.0
        %1342 = vmatpush2.msra.mxu0 0.0
        %1343 = vmatprep.subr.mxu0 0.0
        %1344 = vmatpush2.msra.mxu0 0.0
        %1345 = vmatprep.subr.mxu0 0.0
        %1346 = vmatpush2.msra.mxu0 0.0
        %1347 = vmatprep.subr.mxu0 0.0
        %1348 = vmatpush2.msra.mxu0 0.0
        %1349 = vmatprep.subr.mxu0 0.0
        %1350 = vmatpush2.msra.mxu0 0.0
        %1351 = vmatprep.subr.mxu0 0.0
        %1352 = vmatpush2.msra.mxu0 0.0
        %1353 = vmatprep.subr.mxu0 0.0
        %1354 = vmatpush2.msra.mxu0 0.0
        %1355 = vmatprep.subr.mxu0 0.0
        %1356 = vmatpush2.msra.mxu0 0.0
        %1357 = vmatprep.mubr.f32.mxu0 0.0
        %1358 = vmatmul.mubr.f32.gmra.mxu0 %v1291
        %v1359 = vpop.f32.mrf.mxu0
        %v1360 = vadd.f32 0.0, %v1359
        %v1361 = vpop.f32.mrf.mxu0
        %1362 = vdwg.mxu0
        %v1363 = vadd.f32 %v1124, %v1360
        %v1364 = vlaneseq
        %v1365 = vshrl.u32 %v1364, 7
        %v1366 = vsub.s32 3, %v1365
        %v1367 = vrot.slane %v322, %v1366
        %v1368 = vadd.f32 %v1363, %v1367
        %s1369 = scalar_lea.vmem [#allocation7], 32
        %v1370 = vld [vmem:[%s1369] sm:$0xff]
        %v1371 = vld [vmem:[%s1369 + $0x8] sm:$0xff]
        %v1372 = vld [vmem:[%s1369 + $0x10] sm:$0xff]
        %v1373 = vld [vmem:[%s1369 + $0x18] sm:$0xff]
        %s1374 = scalar_lea.vmem [#allocation8], 32
        %v1375 = vld [vmem:[%s1374] sm:$0xff]
        %v1376 = vld [vmem:[%s1374 + $0x8] sm:$0xff]
        %v1377 = vld [vmem:[%s1374 + $0x10] sm:$0xff]
        %v1378 = vld [vmem:[%s1374 + $0x18] sm:$0xff]
        %v1379 = vlaneseq
        %v1380 = vshrl.u32 %v1379, 7
        %v1381 = vsub.s32 1, %v1380
        %v1382 = vrot.slane %v322, %v1381
        %v1384 = vsel %vm336, %v321, 0
        %1386 = vmatprep.subr.mxu0 0.0
        %1387 = vmatpush1.msra.mxu0 0.0
        %1388 = vmatprep.subr.mxu0 0.0
        %1389 = vmatpush1.msra.mxu0 0.0
        %1390 = vmatprep.subr.mxu0 0.0
        %1391 = vmatpush1.msra.mxu0 0.0
        %1392 = vmatprep.subr.mxu0 0.0
        %1393 = vmatpush1.msra.mxu0 0.0
        %1394 = vmatprep.subr.mxu0 0.0
        %1395 = vmatpush1.msra.mxu0 0.0
        %1396 = vmatprep.subr.mxu0 0.0
        %1397 = vmatpush1.msra.mxu0 0.0
        %1398 = vmatprep.subr.mxu0 0.0
        %1399 = vmatpush1.msra.mxu0 0.0
        %1400 = vmatprep.subr.mxu0 0.0
        %1401 = vmatpush1.msra.mxu0 0.0
        %1402 = vmatprep.subr.mxu0 0.0
        %1403 = vmatpush1.msra.mxu0 0.0
        %1404 = vmatprep.subr.mxu0 0.0
        %1405 = vmatpush1.msra.mxu0 0.0
        %1406 = vmatprep.subr.mxu0 0.0
        %1407 = vmatpush1.msra.mxu0 0.0
        %1408 = vmatprep.subr.mxu0 0.0
        %1409 = vmatpush1.msra.mxu0 0.0
        %1410 = vmatprep.subr.mxu0 0.0
        %1411 = vmatpush1.msra.mxu0 %v1373
        %1412 = vmatprep.subr.mxu0 0.0
        %1413 = vmatpush1.msra.mxu0 %v1372
        %1414 = vmatprep.subr.mxu0 0.0
        %1415 = vmatpush1.msra.mxu0 %v1371
        %1416 = vmatprep.subr.mxu0 0.0
        %1417 = vmatpush1.msra.mxu0 %v1370
        %1418 = vmatprep.subr.mxu0 0.0
        %1419 = vmatpush2.msra.mxu0 0.0
        %1420 = vmatprep.subr.mxu0 0.0
        %1421 = vmatpush2.msra.mxu0 0.0
        %1422 = vmatprep.subr.mxu0 0.0
        %1423 = vmatpush2.msra.mxu0 0.0
        %1424 = vmatprep.subr.mxu0 0.0
        %1425 = vmatpush2.msra.mxu0 0.0
        %1426 = vmatprep.subr.mxu0 0.0
        %1427 = vmatpush2.msra.mxu0 0.0
        %1428 = vmatprep.subr.mxu0 0.0
        %1429 = vmatpush2.msra.mxu0 0.0
        %1430 = vmatprep.subr.mxu0 0.0
        %1431 = vmatpush2.msra.mxu0 0.0
        %1432 = vmatprep.subr.mxu0 0.0
        %1433 = vmatpush2.msra.mxu0 0.0
        %1434 = vmatprep.subr.mxu0 0.0
        %1435 = vmatpush2.msra.mxu0 0.0
        %1436 = vmatprep.subr.mxu0 0.0
        %1437 = vmatpush2.msra.mxu0 0.0
        %1438 = vmatprep.subr.mxu0 0.0
        %1439 = vmatpush2.msra.mxu0 0.0
        %1440 = vmatprep.subr.mxu0 0.0
        %1441 = vmatpush2.msra.mxu0 0.0
        %1442 = vmatprep.subr.mxu0 0.0
        %1443 = vmatpush2.msra.mxu0 0.0
        %1444 = vmatprep.subr.mxu0 0.0
        %1445 = vmatpush2.msra.mxu0 0.0
        %1446 = vmatprep.subr.mxu0 0.0
        %1447 = vmatpush2.msra.mxu0 0.0
        %1448 = vmatprep.subr.mxu0 0.0
        %1449 = vmatpush2.msra.mxu0 0.0
        %1450 = vmatprep.mubr.f32.mxu0 0.0
        %1451 = vmatmul.mubr.f32.gmra.mxu0 %v1384
        %v1452 = vpop.f32.mrf.mxu0
        %v1453 = vadd.f32 %v1382, %v1452
        %v1454 = vpop.f32.mrf.mxu0
        %1455 = vdwg.mxu0
        %1457 = vrot.lane.b32.xlu0 %v1453, 96
        %v1458 = vpop.permute.xlu0 %1457
        %v1459 = vsel %vm413, %v1453, 0
        %v1461 = vsel %vm413, %v1458, 0
        %1463 = vmatprep.subr.mxu0 0.0
        %1464 = vmatpush1.xpose.msra.mxu0 0.0
        %1465 = vmatprep.subr.mxu0 0.0
        %1466 = vmatpush1.xpose.msra.mxu0 0.0
        %1467 = vmatprep.subr.mxu0 0.0
        %1468 = vmatpush1.xpose.msra.mxu0 0.0
        %1469 = vmatprep.subr.mxu0 0.0
        %1470 = vmatpush1.xpose.msra.mxu0 0.0
        %1471 = vmatprep.subr.mxu0 0.0
        %1472 = vmatpush1.xpose.msra.mxu0 0.0
        %1473 = vmatprep.subr.mxu0 0.0
        %1474 = vmatpush1.xpose.msra.mxu0 0.0
        %1475 = vmatprep.subr.mxu0 0.0
        %1476 = vmatpush1.xpose.msra.mxu0 0.0
        %1477 = vmatprep.subr.mxu0 0.0
        %1478 = vmatpush1.xpose.msra.mxu0 0.0
        %1479 = vmatprep.subr.mxu0 0.0
        %1480 = vmatpush1.xpose.msra.mxu0 0.0
        %1481 = vmatprep.subr.mxu0 0.0
        %1482 = vmatpush1.xpose.msra.mxu0 0.0
        %1483 = vmatprep.subr.mxu0 0.0
        %1484 = vmatpush1.xpose.msra.mxu0 0.0
        %1485 = vmatprep.subr.mxu0 0.0
        %1486 = vmatpush1.xpose.msra.mxu0 0.0
        %1487 = vmatprep.subr.mxu0 0.0
        %1488 = vmatpush1.xpose.msra.mxu0 0.0
        %1489 = vmatprep.subr.mxu0 0.0
        %1490 = vmatpush1.xpose.msra.mxu0 0.0
        %1491 = vmatprep.subr.mxu0 0.0
        %1492 = vmatpush1.xpose.msra.mxu0 0.0
        %1493 = vmatprep.subr.mxu0 0.0
        %1494 = vmatpush1.xpose.msra.mxu0 %v1461
        %1495 = vmatprep.subr.mxu0 0.0
        %1496 = vmatpush2.xpose.msra.mxu0 0.0
        %1497 = vmatprep.subr.mxu0 0.0
        %1498 = vmatpush2.xpose.msra.mxu0 0.0
        %1499 = vmatprep.subr.mxu0 0.0
        %1500 = vmatpush2.xpose.msra.mxu0 0.0
        %1501 = vmatprep.subr.mxu0 0.0
        %1502 = vmatpush2.xpose.msra.mxu0 0.0
        %1503 = vmatprep.subr.mxu0 0.0
        %1504 = vmatpush2.xpose.msra.mxu0 0.0
        %1505 = vmatprep.subr.mxu0 0.0
        %1506 = vmatpush2.xpose.msra.mxu0 0.0
        %1507 = vmatprep.subr.mxu0 0.0
        %1508 = vmatpush2.xpose.msra.mxu0 0.0
        %1509 = vmatprep.subr.mxu0 0.0
        %1510 = vmatpush2.xpose.msra.mxu0 0.0
        %1511 = vmatprep.subr.mxu0 0.0
        %1512 = vmatpush2.xpose.msra.mxu0 0.0
        %1513 = vmatprep.subr.mxu0 0.0
        %1514 = vmatpush2.xpose.msra.mxu0 0.0
        %1515 = vmatprep.subr.mxu0 0.0
        %1516 = vmatpush2.xpose.msra.mxu0 0.0
        %1517 = vmatprep.subr.mxu0 0.0
        %1518 = vmatpush2.xpose.msra.mxu0 0.0
        %1519 = vmatprep.subr.mxu0 0.0
        %1520 = vmatpush2.xpose.msra.mxu0 0.0
        %1521 = vmatprep.subr.mxu0 0.0
        %1522 = vmatpush2.xpose.msra.mxu0 0.0
        %1523 = vmatprep.subr.mxu0 0.0
        %1524 = vmatpush2.xpose.msra.mxu0 0.0
        %1525 = vmatprep.subr.mxu0 0.0
        %1526 = vmatpush2.xpose.msra.mxu0 0.0
        %1527 = vmatprep.mubr.f32.mxu0 0.0
        %1528 = vmatmul.mubr.f32.gmra.mxu0 %v1459
        %v1529 = vpop.f32.mrf.mxu0
        %v1530 = vadd.f32 0.0, %v1529
        %v1531 = vpop.f32.mrf.mxu0
        %1532 = vdwg.mxu0
        %v1533 = vsel %vm413, %v1530, -inf
        %1534 = vmax.xlane.f32.xlu0 %v1533
        %v1535 = vpop.xlane.xlu0 %1534
        %v1536 = vsub.f32 %v1530, %v1535
        %v1537 = vmul.f32 %v1536, 1.442695
        %v1538 = vpow.pop %v1537
        %v1539 = vsel %vm413, %v1538, 0.0
        %1540 = vadd.xlane.f32.xlu0 %v1539
        %v1541 = vpop.xlane.xlu0 %1540
        %v1542 = vrcp.pop %v1541
        %v1543 = vmul.f32 %v1538, %v1542
        %1544 = vrot.lane.b32.xlu0 %v1453, 64
        %v1545 = vpop.permute.xlu0 %1544
        %v1548 = vsel %vm413, %v1543, 0
        %1550 = vmatprep.subr.mxu0 0.0
        %1551 = vmatpush1.msra.mxu0 0.0
        %1552 = vmatprep.subr.mxu0 0.0
        %1553 = vmatpush1.msra.mxu0 0.0
        %1554 = vmatprep.subr.mxu0 0.0
        %1555 = vmatpush1.msra.mxu0 0.0
        %1556 = vmatprep.subr.mxu0 0.0
        %1557 = vmatpush1.msra.mxu0 0.0
        %1558 = vmatprep.subr.mxu0 0.0
        %1559 = vmatpush1.msra.mxu0 0.0
        %1560 = vmatprep.subr.mxu0 0.0
        %1561 = vmatpush1.msra.mxu0 0.0
        %1562 = vmatprep.subr.mxu0 0.0
        %1563 = vmatpush1.msra.mxu0 0.0
        %1564 = vmatprep.subr.mxu0 0.0
        %1565 = vmatpush1.msra.mxu0 0.0
        %1566 = vmatprep.subr.mxu0 0.0
        %1567 = vmatpush1.msra.mxu0 0.0
        %1568 = vmatprep.subr.mxu0 0.0
        %1569 = vmatpush1.msra.mxu0 0.0
        %1570 = vmatprep.subr.mxu0 0.0
        %1571 = vmatpush1.msra.mxu0 0.0
        %1572 = vmatprep.subr.mxu0 0.0
        %1573 = vmatpush1.msra.mxu0 0.0
        %1574 = vmatprep.subr.mxu0 0.0
        %1575 = vmatpush1.msra.mxu0 0.0
        %1576 = vmatprep.subr.mxu0 0.0
        %1577 = vmatpush1.msra.mxu0 0.0
        %1578 = vmatprep.subr.mxu0 0.0
        %1579 = vmatpush1.msra.mxu0 0.0
        %1580 = vmatprep.subr.mxu0 0.0
        %1581 = vmatpush1.msra.mxu0 %v1545
        %1582 = vmatprep.subr.mxu0 0.0
        %1583 = vmatpush2.msra.mxu0 0.0
        %1584 = vmatprep.subr.mxu0 0.0
        %1585 = vmatpush2.msra.mxu0 0.0
        %1586 = vmatprep.subr.mxu0 0.0
        %1587 = vmatpush2.msra.mxu0 0.0
        %1588 = vmatprep.subr.mxu0 0.0
        %1589 = vmatpush2.msra.mxu0 0.0
        %1590 = vmatprep.subr.mxu0 0.0
        %1591 = vmatpush2.msra.mxu0 0.0
        %1592 = vmatprep.subr.mxu0 0.0
        %1593 = vmatpush2.msra.mxu0 0.0
        %1594 = vmatprep.subr.mxu0 0.0
        %1595 = vmatpush2.msra.mxu0 0.0
        %1596 = vmatprep.subr.mxu0 0.0
        %1597 = vmatpush2.msra.mxu0 0.0
        %1598 = vmatprep.subr.mxu0 0.0
        %1599 = vmatpush2.msra.mxu0 0.0
        %1600 = vmatprep.subr.mxu0 0.0
        %1601 = vmatpush2.msra.mxu0 0.0
        %1602 = vmatprep.subr.mxu0 0.0
        %1603 = vmatpush2.msra.mxu0 0.0
        %1604 = vmatprep.subr.mxu0 0.0
        %1605 = vmatpush2.msra.mxu0 0.0
        %1606 = vmatprep.subr.mxu0 0.0
        %1607 = vmatpush2.msra.mxu0 0.0
        %1608 = vmatprep.subr.mxu0 0.0
        %1609 = vmatpush2.msra.mxu0 0.0
        %1610 = vmatprep.subr.mxu0 0.0
        %1611 = vmatpush2.msra.mxu0 0.0
        %1612 = vmatprep.subr.mxu0 0.0
        %1613 = vmatpush2.msra.mxu0 0.0
        %1614 = vmatprep.mubr.f32.mxu0 0.0
        %1615 = vmatmul.mubr.f32.gmra.mxu0 %v1548
        %v1616 = vpop.f32.mrf.mxu0
        %v1617 = vadd.f32 0.0, %v1616
        %v1618 = vpop.f32.mrf.mxu0
        %1619 = vdwg.mxu0
        %1620 = vrot.lane.b32.xlu0 %v1453, 120
        %v1621 = vpop.permute.xlu0 %1620
        %1622 = vrot.lane.b32.xlu0 %v1453, 88
        %v1623 = vpop.permute.xlu0 %1622
        %v1624 = vsel %vm413, %v1621, 0
        %v1626 = vsel %vm413, %v1623, 0
        %1628 = vmatprep.subr.mxu0 0.0
        %1629 = vmatpush1.xpose.msra.mxu0 0.0
        %1630 = vmatprep.subr.mxu0 0.0
        %1631 = vmatpush1.xpose.msra.mxu0 0.0
        %1632 = vmatprep.subr.mxu0 0.0
        %1633 = vmatpush1.xpose.msra.mxu0 0.0
        %1634 = vmatprep.subr.mxu0 0.0
        %1635 = vmatpush1.xpose.msra.mxu0 0.0
        %1636 = vmatprep.subr.mxu0 0.0
        %1637 = vmatpush1.xpose.msra.mxu0 0.0
        %1638 = vmatprep.subr.mxu0 0.0
        %1639 = vmatpush1.xpose.msra.mxu0 0.0
        %1640 = vmatprep.subr.mxu0 0.0
        %1641 = vmatpush1.xpose.msra.mxu0 0.0
        %1642 = vmatprep.subr.mxu0 0.0
        %1643 = vmatpush1.xpose.msra.mxu0 0.0
        %1644 = vmatprep.subr.mxu0 0.0
        %1645 = vmatpush1.xpose.msra.mxu0 0.0
        %1646 = vmatprep.subr.mxu0 0.0
        %1647 = vmatpush1.xpose.msra.mxu0 0.0
        %1648 = vmatprep.subr.mxu0 0.0
        %1649 = vmatpush1.xpose.msra.mxu0 0.0
        %1650 = vmatprep.subr.mxu0 0.0
        %1651 = vmatpush1.xpose.msra.mxu0 0.0
        %1652 = vmatprep.subr.mxu0 0.0
        %1653 = vmatpush1.xpose.msra.mxu0 0.0
        %1654 = vmatprep.subr.mxu0 0.0
        %1655 = vmatpush1.xpose.msra.mxu0 0.0
        %1656 = vmatprep.subr.mxu0 0.0
        %1657 = vmatpush1.xpose.msra.mxu0 0.0
        %1658 = vmatprep.subr.mxu0 0.0
        %1659 = vmatpush1.xpose.msra.mxu0 %v1626
        %1660 = vmatprep.subr.mxu0 0.0
        %1661 = vmatpush2.xpose.msra.mxu0 0.0
        %1662 = vmatprep.subr.mxu0 0.0
        %1663 = vmatpush2.xpose.msra.mxu0 0.0
        %1664 = vmatprep.subr.mxu0 0.0
        %1665 = vmatpush2.xpose.msra.mxu0 0.0
        %1666 = vmatprep.subr.mxu0 0.0
        %1667 = vmatpush2.xpose.msra.mxu0 0.0
        %1668 = vmatprep.subr.mxu0 0.0
        %1669 = vmatpush2.xpose.msra.mxu0 0.0
        %1670 = vmatprep.subr.mxu0 0.0
        %1671 = vmatpush2.xpose.msra.mxu0 0.0
        %1672 = vmatprep.subr.mxu0 0.0
        %1673 = vmatpush2.xpose.msra.mxu0 0.0
        %1674 = vmatprep.subr.mxu0 0.0
        %1675 = vmatpush2.xpose.msra.mxu0 0.0
        %1676 = vmatprep.subr.mxu0 0.0
        %1677 = vmatpush2.xpose.msra.mxu0 0.0
        %1678 = vmatprep.subr.mxu0 0.0
        %1679 = vmatpush2.xpose.msra.mxu0 0.0
        %1680 = vmatprep.subr.mxu0 0.0
        %1681 = vmatpush2.xpose.msra.mxu0 0.0
        %1682 = vmatprep.subr.mxu0 0.0
        %1683 = vmatpush2.xpose.msra.mxu0 0.0
        %1684 = vmatprep.subr.mxu0 0.0
        %1685 = vmatpush2.xpose.msra.mxu0 0.0
        %1686 = vmatprep.subr.mxu0 0.0
        %1687 = vmatpush2.xpose.msra.mxu0 0.0
        %1688 = vmatprep.subr.mxu0 0.0
        %1689 = vmatpush2.xpose.msra.mxu0 0.0
        %1690 = vmatprep.subr.mxu0 0.0
        %1691 = vmatpush2.xpose.msra.mxu0 0.0
        %1692 = vmatprep.mubr.f32.mxu0 0.0
        %1693 = vmatmul.mubr.f32.gmra.mxu0 %v1624
        %v1694 = vpop.f32.mrf.mxu0
        %v1695 = vadd.f32 0.0, %v1694
        %v1696 = vpop.f32.mrf.mxu0
        %1697 = vdwg.mxu0
        %v1698 = vsel %vm413, %v1695, -inf
        %1699 = vmax.xlane.f32.xlu0 %v1698
        %v1700 = vpop.xlane.xlu0 %1699
        %v1701 = vsub.f32 %v1695, %v1700
        %v1702 = vmul.f32 %v1701, 1.442695
        %v1703 = vpow.pop %v1702
        %v1704 = vsel %vm413, %v1703, 0.0
        %1705 = vadd.xlane.f32.xlu0 %v1704
        %v1706 = vpop.xlane.xlu0 %1705
        %v1707 = vrcp.pop %v1706
        %v1708 = vmul.f32 %v1703, %v1707
        %1709 = vrot.lane.b32.xlu0 %v1453, 56
        %v1710 = vpop.permute.xlu0 %1709
        %v1713 = vsel %vm413, %v1708, 0
        %1715 = vmatprep.subr.mxu0 0.0
        %1716 = vmatpush1.msra.mxu0 0.0
        %1717 = vmatprep.subr.mxu0 0.0
        %1718 = vmatpush1.msra.mxu0 0.0
        %1719 = vmatprep.subr.mxu0 0.0
        %1720 = vmatpush1.msra.mxu0 0.0
        %1721 = vmatprep.subr.mxu0 0.0
        %1722 = vmatpush1.msra.mxu0 0.0
        %1723 = vmatprep.subr.mxu0 0.0
        %1724 = vmatpush1.msra.mxu0 0.0
        %1725 = vmatprep.subr.mxu0 0.0
        %1726 = vmatpush1.msra.mxu0 0.0
        %1727 = vmatprep.subr.mxu0 0.0
        %1728 = vmatpush1.msra.mxu0 0.0
        %1729 = vmatprep.subr.mxu0 0.0
        %1730 = vmatpush1.msra.mxu0 0.0
        %1731 = vmatprep.subr.mxu0 0.0
        %1732 = vmatpush1.msra.mxu0 0.0
        %1733 = vmatprep.subr.mxu0 0.0
        %1734 = vmatpush1.msra.mxu0 0.0
        %1735 = vmatprep.subr.mxu0 0.0
        %1736 = vmatpush1.msra.mxu0 0.0
        %1737 = vmatprep.subr.mxu0 0.0
        %1738 = vmatpush1.msra.mxu0 0.0
        %1739 = vmatprep.subr.mxu0 0.0
        %1740 = vmatpush1.msra.mxu0 0.0
        %1741 = vmatprep.subr.mxu0 0.0
        %1742 = vmatpush1.msra.mxu0 0.0
        %1743 = vmatprep.subr.mxu0 0.0
        %1744 = vmatpush1.msra.mxu0 0.0
        %1745 = vmatprep.subr.mxu0 0.0
        %1746 = vmatpush1.msra.mxu0 %v1710
        %1747 = vmatprep.subr.mxu0 0.0
        %1748 = vmatpush2.msra.mxu0 0.0
        %1749 = vmatprep.subr.mxu0 0.0
        %1750 = vmatpush2.msra.mxu0 0.0
        %1751 = vmatprep.subr.mxu0 0.0
        %1752 = vmatpush2.msra.mxu0 0.0
        %1753 = vmatprep.subr.mxu0 0.0
        %1754 = vmatpush2.msra.mxu0 0.0
        %1755 = vmatprep.subr.mxu0 0.0
        %1756 = vmatpush2.msra.mxu0 0.0
        %1757 = vmatprep.subr.mxu0 0.0
        %1758 = vmatpush2.msra.mxu0 0.0
        %1759 = vmatprep.subr.mxu0 0.0
        %1760 = vmatpush2.msra.mxu0 0.0
        %1761 = vmatprep.subr.mxu0 0.0
        %1762 = vmatpush2.msra.mxu0 0.0
        %1763 = vmatprep.subr.mxu0 0.0
        %1764 = vmatpush2.msra.mxu0 0.0
        %1765 = vmatprep.subr.mxu0 0.0
        %1766 = vmatpush2.msra.mxu0 0.0
        %1767 = vmatprep.subr.mxu0 0.0
        %1768 = vmatpush2.msra.mxu0 0.0
        %1769 = vmatprep.subr.mxu0 0.0
        %1770 = vmatpush2.msra.mxu0 0.0
        %1771 = vmatprep.subr.mxu0 0.0
        %1772 = vmatpush2.msra.mxu0 0.0
        %1773 = vmatprep.subr.mxu0 0.0
        %1774 = vmatpush2.msra.mxu0 0.0
        %1775 = vmatprep.subr.mxu0 0.0
        %1776 = vmatpush2.msra.mxu0 0.0
        %1777 = vmatprep.subr.mxu0 0.0
        %1778 = vmatpush2.msra.mxu0 0.0
        %1779 = vmatprep.mubr.f32.mxu0 0.0
        %1780 = vmatmul.mubr.f32.gmra.mxu0 %v1713
        %v1781 = vpop.f32.mrf.mxu0
        %v1782 = vadd.f32 0.0, %v1781
        %v1783 = vpop.f32.mrf.mxu0
        %1784 = vdwg.mxu0
        %v1786 = vsel %vm413, %v1782, 0
        %1788 = vmatprep.subr.mxu0 0.0
        %1789 = vmatpush1.msra.mxu0 0.0
        %1790 = vmatprep.subr.mxu0 0.0
        %1791 = vmatpush1.msra.mxu0 0.0
        %1792 = vmatprep.subr.mxu0 0.0
        %1793 = vmatpush1.msra.mxu0 0.0
        %1794 = vmatprep.subr.mxu0 0.0
        %1795 = vmatpush1.msra.mxu0 0.0
        %1796 = vmatprep.subr.mxu0 0.0
        %1797 = vmatpush1.msra.mxu0 0.0
        %1798 = vmatprep.subr.mxu0 0.0
        %1799 = vmatpush1.msra.mxu0 0.0
        %1800 = vmatprep.subr.mxu0 0.0
        %1801 = vmatpush1.msra.mxu0 0.0
        %1802 = vmatprep.subr.mxu0 0.0
        %1803 = vmatpush1.msra.mxu0 0.0
        %1804 = vmatprep.subr.mxu0 0.0
        %1805 = vmatpush1.msra.mxu0 0.0
        %1806 = vmatprep.subr.mxu0 0.0
        %1807 = vmatpush1.msra.mxu0 0.0
        %1808 = vmatprep.subr.mxu0 0.0
        %1809 = vmatpush1.msra.mxu0 0.0
        %1810 = vmatprep.subr.mxu0 0.0
        %1811 = vmatpush1.msra.mxu0 0.0
        %1812 = vmatprep.subr.mxu0 0.0
        %1813 = vmatpush1.msra.mxu0 0.0
        %1814 = vmatprep.subr.mxu0 0.0
        %1815 = vmatpush1.msra.mxu0 0.0
        %1816 = vmatprep.subr.mxu0 0.0
        %1817 = vmatpush1.msra.mxu0 0.0
        %1818 = vmatprep.subr.mxu0 0.0
        %1819 = vmatpush1.msra.mxu0 %v1376
        %1820 = vmatprep.subr.mxu0 0.0
        %1821 = vmatpush2.msra.mxu0 0.0
        %1822 = vmatprep.subr.mxu0 0.0
        %1823 = vmatpush2.msra.mxu0 0.0
        %1824 = vmatprep.subr.mxu0 0.0
        %1825 = vmatpush2.msra.mxu0 0.0
        %1826 = vmatprep.subr.mxu0 0.0
        %1827 = vmatpush2.msra.mxu0 0.0
        %1828 = vmatprep.subr.mxu0 0.0
        %1829 = vmatpush2.msra.mxu0 0.0
        %1830 = vmatprep.subr.mxu0 0.0
        %1831 = vmatpush2.msra.mxu0 0.0
        %1832 = vmatprep.subr.mxu0 0.0
        %1833 = vmatpush2.msra.mxu0 0.0
        %1834 = vmatprep.subr.mxu0 0.0
        %1835 = vmatpush2.msra.mxu0 0.0
        %1836 = vmatprep.subr.mxu0 0.0
        %1837 = vmatpush2.msra.mxu0 0.0
        %1838 = vmatprep.subr.mxu0 0.0
        %1839 = vmatpush2.msra.mxu0 0.0
        %1840 = vmatprep.subr.mxu0 0.0
        %1841 = vmatpush2.msra.mxu0 0.0
        %1842 = vmatprep.subr.mxu0 0.0
        %1843 = vmatpush2.msra.mxu0 0.0
        %1844 = vmatprep.subr.mxu0 0.0
        %1845 = vmatpush2.msra.mxu0 0.0
        %1846 = vmatprep.subr.mxu0 0.0
        %1847 = vmatpush2.msra.mxu0 0.0
        %1848 = vmatprep.subr.mxu0 0.0
        %1849 = vmatpush2.msra.mxu0 0.0
        %1850 = vmatprep.subr.mxu0 0.0
        %1851 = vmatpush2.msra.mxu0 0.0
        %1852 = vmatprep.mubr.f32.mxu0 0.0
        %1853 = vmatmul.mubr.f32.gmra.mxu0 %v1786
        %v1854 = vpop.f32.mrf.mxu0
        %v1855 = vadd.f32 0.0, %v1854
        %v1856 = vpop.f32.mrf.mxu0
        %1857 = vdwg.mxu0
        %v1859 = vsel %vm413, %v1617, 0
        %1861 = vmatprep.subr.mxu0 0.0
        %1862 = vmatpush1.msra.mxu0 0.0
        %1863 = vmatprep.subr.mxu0 0.0
        %1864 = vmatpush1.msra.mxu0 0.0
        %1865 = vmatprep.subr.mxu0 0.0
        %1866 = vmatpush1.msra.mxu0 0.0
        %1867 = vmatprep.subr.mxu0 0.0
        %1868 = vmatpush1.msra.mxu0 0.0
        %1869 = vmatprep.subr.mxu0 0.0
        %1870 = vmatpush1.msra.mxu0 0.0
        %1871 = vmatprep.subr.mxu0 0.0
        %1872 = vmatpush1.msra.mxu0 0.0
        %1873 = vmatprep.subr.mxu0 0.0
        %1874 = vmatpush1.msra.mxu0 0.0
        %1875 = vmatprep.subr.mxu0 0.0
        %1876 = vmatpush1.msra.mxu0 0.0
        %1877 = vmatprep.subr.mxu0 0.0
        %1878 = vmatpush1.msra.mxu0 0.0
        %1879 = vmatprep.subr.mxu0 0.0
        %1880 = vmatpush1.msra.mxu0 0.0
        %1881 = vmatprep.subr.mxu0 0.0
        %1882 = vmatpush1.msra.mxu0 0.0
        %1883 = vmatprep.subr.mxu0 0.0
        %1884 = vmatpush1.msra.mxu0 0.0
        %1885 = vmatprep.subr.mxu0 0.0
        %1886 = vmatpush1.msra.mxu0 0.0
        %1887 = vmatprep.subr.mxu0 0.0
        %1888 = vmatpush1.msra.mxu0 0.0
        %1889 = vmatprep.subr.mxu0 0.0
        %1890 = vmatpush1.msra.mxu0 0.0
        %1891 = vmatprep.subr.mxu0 0.0
        %1892 = vmatpush1.msra.mxu0 %v1375
        %1893 = vmatprep.subr.mxu0 0.0
        %1894 = vmatpush2.msra.mxu0 0.0
        %1895 = vmatprep.subr.mxu0 0.0
        %1896 = vmatpush2.msra.mxu0 0.0
        %1897 = vmatprep.subr.mxu0 0.0
        %1898 = vmatpush2.msra.mxu0 0.0
        %1899 = vmatprep.subr.mxu0 0.0
        %1900 = vmatpush2.msra.mxu0 0.0
        %1901 = vmatprep.subr.mxu0 0.0
        %1902 = vmatpush2.msra.mxu0 0.0
        %1903 = vmatprep.subr.mxu0 0.0
        %1904 = vmatpush2.msra.mxu0 0.0
        %1905 = vmatprep.subr.mxu0 0.0
        %1906 = vmatpush2.msra.mxu0 0.0
        %1907 = vmatprep.subr.mxu0 0.0
        %1908 = vmatpush2.msra.mxu0 0.0
        %1909 = vmatprep.subr.mxu0 0.0
        %1910 = vmatpush2.msra.mxu0 0.0
        %1911 = vmatprep.subr.mxu0 0.0
        %1912 = vmatpush2.msra.mxu0 0.0
        %1913 = vmatprep.subr.mxu0 0.0
        %1914 = vmatpush2.msra.mxu0 0.0
        %1915 = vmatprep.subr.mxu0 0.0
        %1916 = vmatpush2.msra.mxu0 0.0
        %1917 = vmatprep.subr.mxu0 0.0
        %1918 = vmatpush2.msra.mxu0 0.0
        %1919 = vmatprep.subr.mxu0 0.0
        %1920 = vmatpush2.msra.mxu0 0.0
        %1921 = vmatprep.subr.mxu0 0.0
        %1922 = vmatpush2.msra.mxu0 0.0
        %1923 = vmatprep.subr.mxu0 0.0
        %1924 = vmatpush2.msra.mxu0 0.0
        %1925 = vmatprep.mubr.f32.mxu0 0.0
        %1926 = vmatmul.mubr.f32.gmra.mxu0 %v1859
        %v1927 = vpop.f32.mrf.mxu0
        %v1928 = vadd.f32 %v1855, %v1927
        %v1929 = vpop.f32.mrf.mxu0
        %1930 = vdwg.mxu0
        %1931 = vrot.lane.b32.xlu0 %v1453, 112
        %v1932 = vpop.permute.xlu0 %1931
        %1933 = vrot.lane.b32.xlu0 %v1453, 80
        %v1934 = vpop.permute.xlu0 %1933
        %v1935 = vsel %vm413, %v1932, 0
        %v1937 = vsel %vm413, %v1934, 0
        %1939 = vmatprep.subr.mxu0 0.0
        %1940 = vmatpush1.xpose.msra.mxu0 0.0
        %1941 = vmatprep.subr.mxu0 0.0
        %1942 = vmatpush1.xpose.msra.mxu0 0.0
        %1943 = vmatprep.subr.mxu0 0.0
        %1944 = vmatpush1.xpose.msra.mxu0 0.0
        %1945 = vmatprep.subr.mxu0 0.0
        %1946 = vmatpush1.xpose.msra.mxu0 0.0
        %1947 = vmatprep.subr.mxu0 0.0
        %1948 = vmatpush1.xpose.msra.mxu0 0.0
        %1949 = vmatprep.subr.mxu0 0.0
        %1950 = vmatpush1.xpose.msra.mxu0 0.0
        %1951 = vmatprep.subr.mxu0 0.0
        %1952 = vmatpush1.xpose.msra.mxu0 0.0
        %1953 = vmatprep.subr.mxu0 0.0
        %1954 = vmatpush1.xpose.msra.mxu0 0.0
        %1955 = vmatprep.subr.mxu0 0.0
        %1956 = vmatpush1.xpose.msra.mxu0 0.0
        %1957 = vmatprep.subr.mxu0 0.0
        %1958 = vmatpush1.xpose.msra.mxu0 0.0
        %1959 = vmatprep.subr.mxu0 0.0
        %1960 = vmatpush1.xpose.msra.mxu0 0.0
        %1961 = vmatprep.subr.mxu0 0.0
        %1962 = vmatpush1.xpose.msra.mxu0 0.0
        %1963 = vmatprep.subr.mxu0 0.0
        %1964 = vmatpush1.xpose.msra.mxu0 0.0
        %1965 = vmatprep.subr.mxu0 0.0
        %1966 = vmatpush1.xpose.msra.mxu0 0.0
        %1967 = vmatprep.subr.mxu0 0.0
        %1968 = vmatpush1.xpose.msra.mxu0 0.0
        %1969 = vmatprep.subr.mxu0 0.0
        %1970 = vmatpush1.xpose.msra.mxu0 %v1937
        %1971 = vmatprep.subr.mxu0 0.0
        %1972 = vmatpush2.xpose.msra.mxu0 0.0
        %1973 = vmatprep.subr.mxu0 0.0
        %1974 = vmatpush2.xpose.msra.mxu0 0.0
        %1975 = vmatprep.subr.mxu0 0.0
        %1976 = vmatpush2.xpose.msra.mxu0 0.0
        %1977 = vmatprep.subr.mxu0 0.0
        %1978 = vmatpush2.xpose.msra.mxu0 0.0
        %1979 = vmatprep.subr.mxu0 0.0
        %1980 = vmatpush2.xpose.msra.mxu0 0.0
        %1981 = vmatprep.subr.mxu0 0.0
        %1982 = vmatpush2.xpose.msra.mxu0 0.0
        %1983 = vmatprep.subr.mxu0 0.0
        %1984 = vmatpush2.xpose.msra.mxu0 0.0
        %1985 = vmatprep.subr.mxu0 0.0
        %1986 = vmatpush2.xpose.msra.mxu0 0.0
        %1987 = vmatprep.subr.mxu0 0.0
        %1988 = vmatpush2.xpose.msra.mxu0 0.0
        %1989 = vmatprep.subr.mxu0 0.0
        %1990 = vmatpush2.xpose.msra.mxu0 0.0
        %1991 = vmatprep.subr.mxu0 0.0
        %1992 = vmatpush2.xpose.msra.mxu0 0.0
        %1993 = vmatprep.subr.mxu0 0.0
        %1994 = vmatpush2.xpose.msra.mxu0 0.0
        %1995 = vmatprep.subr.mxu0 0.0
        %1996 = vmatpush2.xpose.msra.mxu0 0.0
        %1997 = vmatprep.subr.mxu0 0.0
        %1998 = vmatpush2.xpose.msra.mxu0 0.0
        %1999 = vmatprep.subr.mxu0 0.0
        %2000 = vmatpush2.xpose.msra.mxu0 0.0
        %2001 = vmatprep.subr.mxu0 0.0
        %2002 = vmatpush2.xpose.msra.mxu0 0.0
        %2003 = vmatprep.mubr.f32.mxu0 0.0
        %2004 = vmatmul.mubr.f32.gmra.mxu0 %v1935
        %v2005 = vpop.f32.mrf.mxu0
        %v2006 = vadd.f32 0.0, %v2005
        %v2007 = vpop.f32.mrf.mxu0
        %2008 = vdwg.mxu0
        %v2009 = vsel %vm413, %v2006, -inf
        %2010 = vmax.xlane.f32.xlu0 %v2009
        %v2011 = vpop.xlane.xlu0 %2010
        %v2012 = vsub.f32 %v2006, %v2011
        %v2013 = vmul.f32 %v2012, 1.442695
        %v2014 = vpow.pop %v2013
        %v2015 = vsel %vm413, %v2014, 0.0
        %2016 = vadd.xlane.f32.xlu0 %v2015
        %v2017 = vpop.xlane.xlu0 %2016
        %v2018 = vrcp.pop %v2017
        %v2019 = vmul.f32 %v2014, %v2018
        %2020 = vrot.lane.b32.xlu0 %v1453, 48
        %v2021 = vpop.permute.xlu0 %2020
        %v2024 = vsel %vm413, %v2019, 0
        %2026 = vmatprep.subr.mxu0 0.0
        %2027 = vmatpush1.msra.mxu0 0.0
        %2028 = vmatprep.subr.mxu0 0.0
        %2029 = vmatpush1.msra.mxu0 0.0
        %2030 = vmatprep.subr.mxu0 0.0
        %2031 = vmatpush1.msra.mxu0 0.0
        %2032 = vmatprep.subr.mxu0 0.0
        %2033 = vmatpush1.msra.mxu0 0.0
        %2034 = vmatprep.subr.mxu0 0.0
        %2035 = vmatpush1.msra.mxu0 0.0
        %2036 = vmatprep.subr.mxu0 0.0
        %2037 = vmatpush1.msra.mxu0 0.0
        %2038 = vmatprep.subr.mxu0 0.0
        %2039 = vmatpush1.msra.mxu0 0.0
        %2040 = vmatprep.subr.mxu0 0.0
        %2041 = vmatpush1.msra.mxu0 0.0
        %2042 = vmatprep.subr.mxu0 0.0
        %2043 = vmatpush1.msra.mxu0 0.0
        %2044 = vmatprep.subr.mxu0 0.0
        %2045 = vmatpush1.msra.mxu0 0.0
        %2046 = vmatprep.subr.mxu0 0.0
        %2047 = vmatpush1.msra.mxu0 0.0
        %2048 = vmatprep.subr.mxu0 0.0
        %2049 = vmatpush1.msra.mxu0 0.0
        %2050 = vmatprep.subr.mxu0 0.0
        %2051 = vmatpush1.msra.mxu0 0.0
        %2052 = vmatprep.subr.mxu0 0.0
        %2053 = vmatpush1.msra.mxu0 0.0
        %2054 = vmatprep.subr.mxu0 0.0
        %2055 = vmatpush1.msra.mxu0 0.0
        %2056 = vmatprep.subr.mxu0 0.0
        %2057 = vmatpush1.msra.mxu0 %v2021
        %2058 = vmatprep.subr.mxu0 0.0
        %2059 = vmatpush2.msra.mxu0 0.0
        %2060 = vmatprep.subr.mxu0 0.0
        %2061 = vmatpush2.msra.mxu0 0.0
        %2062 = vmatprep.subr.mxu0 0.0
        %2063 = vmatpush2.msra.mxu0 0.0
        %2064 = vmatprep.subr.mxu0 0.0
        %2065 = vmatpush2.msra.mxu0 0.0
        %2066 = vmatprep.subr.mxu0 0.0
        %2067 = vmatpush2.msra.mxu0 0.0
        %2068 = vmatprep.subr.mxu0 0.0
        %2069 = vmatpush2.msra.mxu0 0.0
        %2070 = vmatprep.subr.mxu0 0.0
        %2071 = vmatpush2.msra.mxu0 0.0
        %2072 = vmatprep.subr.mxu0 0.0
        %2073 = vmatpush2.msra.mxu0 0.0
        %2074 = vmatprep.subr.mxu0 0.0
        %2075 = vmatpush2.msra.mxu0 0.0
        %2076 = vmatprep.subr.mxu0 0.0
        %2077 = vmatpush2.msra.mxu0 0.0
        %2078 = vmatprep.subr.mxu0 0.0
        %2079 = vmatpush2.msra.mxu0 0.0
        %2080 = vmatprep.subr.mxu0 0.0
        %2081 = vmatpush2.msra.mxu0 0.0
        %2082 = vmatprep.subr.mxu0 0.0
        %2083 = vmatpush2.msra.mxu0 0.0
        %2084 = vmatprep.subr.mxu0 0.0
        %2085 = vmatpush2.msra.mxu0 0.0
        %2086 = vmatprep.subr.mxu0 0.0
        %2087 = vmatpush2.msra.mxu0 0.0
        %2088 = vmatprep.subr.mxu0 0.0
        %2089 = vmatpush2.msra.mxu0 0.0
        %2090 = vmatprep.mubr.f32.mxu0 0.0
        %2091 = vmatmul.mubr.f32.gmra.mxu0 %v2024
        %v2092 = vpop.f32.mrf.mxu0
        %v2093 = vadd.f32 0.0, %v2092
        %v2094 = vpop.f32.mrf.mxu0
        %2095 = vdwg.mxu0
        %v2097 = vsel %vm413, %v2093, 0
        %2099 = vmatprep.subr.mxu0 0.0
        %2100 = vmatpush1.msra.mxu0 0.0
        %2101 = vmatprep.subr.mxu0 0.0
        %2102 = vmatpush1.msra.mxu0 0.0
        %2103 = vmatprep.subr.mxu0 0.0
        %2104 = vmatpush1.msra.mxu0 0.0
        %2105 = vmatprep.subr.mxu0 0.0
        %2106 = vmatpush1.msra.mxu0 0.0
        %2107 = vmatprep.subr.mxu0 0.0
        %2108 = vmatpush1.msra.mxu0 0.0
        %2109 = vmatprep.subr.mxu0 0.0
        %2110 = vmatpush1.msra.mxu0 0.0
        %2111 = vmatprep.subr.mxu0 0.0
        %2112 = vmatpush1.msra.mxu0 0.0
        %2113 = vmatprep.subr.mxu0 0.0
        %2114 = vmatpush1.msra.mxu0 0.0
        %2115 = vmatprep.subr.mxu0 0.0
        %2116 = vmatpush1.msra.mxu0 0.0
        %2117 = vmatprep.subr.mxu0 0.0
        %2118 = vmatpush1.msra.mxu0 0.0
        %2119 = vmatprep.subr.mxu0 0.0
        %2120 = vmatpush1.msra.mxu0 0.0
        %2121 = vmatprep.subr.mxu0 0.0
        %2122 = vmatpush1.msra.mxu0 0.0
        %2123 = vmatprep.subr.mxu0 0.0
        %2124 = vmatpush1.msra.mxu0 0.0
        %2125 = vmatprep.subr.mxu0 0.0
        %2126 = vmatpush1.msra.mxu0 0.0
        %2127 = vmatprep.subr.mxu0 0.0
        %2128 = vmatpush1.msra.mxu0 0.0
        %2129 = vmatprep.subr.mxu0 0.0
        %2130 = vmatpush1.msra.mxu0 %v1377
        %2131 = vmatprep.subr.mxu0 0.0
        %2132 = vmatpush2.msra.mxu0 0.0
        %2133 = vmatprep.subr.mxu0 0.0
        %2134 = vmatpush2.msra.mxu0 0.0
        %2135 = vmatprep.subr.mxu0 0.0
        %2136 = vmatpush2.msra.mxu0 0.0
        %2137 = vmatprep.subr.mxu0 0.0
        %2138 = vmatpush2.msra.mxu0 0.0
        %2139 = vmatprep.subr.mxu0 0.0
        %2140 = vmatpush2.msra.mxu0 0.0
        %2141 = vmatprep.subr.mxu0 0.0
        %2142 = vmatpush2.msra.mxu0 0.0
        %2143 = vmatprep.subr.mxu0 0.0
        %2144 = vmatpush2.msra.mxu0 0.0
        %2145 = vmatprep.subr.mxu0 0.0
        %2146 = vmatpush2.msra.mxu0 0.0
        %2147 = vmatprep.subr.mxu0 0.0
        %2148 = vmatpush2.msra.mxu0 0.0
        %2149 = vmatprep.subr.mxu0 0.0
        %2150 = vmatpush2.msra.mxu0 0.0
        %2151 = vmatprep.subr.mxu0 0.0
        %2152 = vmatpush2.msra.mxu0 0.0
        %2153 = vmatprep.subr.mxu0 0.0
        %2154 = vmatpush2.msra.mxu0 0.0
        %2155 = vmatprep.subr.mxu0 0.0
        %2156 = vmatpush2.msra.mxu0 0.0
        %2157 = vmatprep.subr.mxu0 0.0
        %2158 = vmatpush2.msra.mxu0 0.0
        %2159 = vmatprep.subr.mxu0 0.0
        %2160 = vmatpush2.msra.mxu0 0.0
        %2161 = vmatprep.subr.mxu0 0.0
        %2162 = vmatpush2.msra.mxu0 0.0
        %2163 = vmatprep.mubr.f32.mxu0 0.0
        %2164 = vmatmul.mubr.f32.gmra.mxu0 %v2097
        %v2165 = vpop.f32.mrf.mxu0
        %v2166 = vadd.f32 0.0, %v2165
        %v2167 = vpop.f32.mrf.mxu0
        %2168 = vdwg.mxu0
        %v2169 = vadd.f32 %v1928, %v2166
        %2170 = vrot.lane.b32.xlu0 %v1453, 104
        %v2171 = vpop.permute.xlu0 %2170
        %2172 = vrot.lane.b32.xlu0 %v1453, 72
        %v2173 = vpop.permute.xlu0 %2172
        %v2174 = vsel %vm413, %v2171, 0
        %v2176 = vsel %vm413, %v2173, 0
        %2178 = vmatprep.subr.mxu0 0.0
        %2179 = vmatpush1.xpose.msra.mxu0 0.0
        %2180 = vmatprep.subr.mxu0 0.0
        %2181 = vmatpush1.xpose.msra.mxu0 0.0
        %2182 = vmatprep.subr.mxu0 0.0
        %2183 = vmatpush1.xpose.msra.mxu0 0.0
        %2184 = vmatprep.subr.mxu0 0.0
        %2185 = vmatpush1.xpose.msra.mxu0 0.0
        %2186 = vmatprep.subr.mxu0 0.0
        %2187 = vmatpush1.xpose.msra.mxu0 0.0
        %2188 = vmatprep.subr.mxu0 0.0
        %2189 = vmatpush1.xpose.msra.mxu0 0.0
        %2190 = vmatprep.subr.mxu0 0.0
        %2191 = vmatpush1.xpose.msra.mxu0 0.0
        %2192 = vmatprep.subr.mxu0 0.0
        %2193 = vmatpush1.xpose.msra.mxu0 0.0
        %2194 = vmatprep.subr.mxu0 0.0
        %2195 = vmatpush1.xpose.msra.mxu0 0.0
        %2196 = vmatprep.subr.mxu0 0.0
        %2197 = vmatpush1.xpose.msra.mxu0 0.0
        %2198 = vmatprep.subr.mxu0 0.0
        %2199 = vmatpush1.xpose.msra.mxu0 0.0
        %2200 = vmatprep.subr.mxu0 0.0
        %2201 = vmatpush1.xpose.msra.mxu0 0.0
        %2202 = vmatprep.subr.mxu0 0.0
        %2203 = vmatpush1.xpose.msra.mxu0 0.0
        %2204 = vmatprep.subr.mxu0 0.0
        %2205 = vmatpush1.xpose.msra.mxu0 0.0
        %2206 = vmatprep.subr.mxu0 0.0
        %2207 = vmatpush1.xpose.msra.mxu0 0.0
        %2208 = vmatprep.subr.mxu0 0.0
        %2209 = vmatpush1.xpose.msra.mxu0 %v2176
        %2210 = vmatprep.subr.mxu0 0.0
        %2211 = vmatpush2.xpose.msra.mxu0 0.0
        %2212 = vmatprep.subr.mxu0 0.0
        %2213 = vmatpush2.xpose.msra.mxu0 0.0
        %2214 = vmatprep.subr.mxu0 0.0
        %2215 = vmatpush2.xpose.msra.mxu0 0.0
        %2216 = vmatprep.subr.mxu0 0.0
        %2217 = vmatpush2.xpose.msra.mxu0 0.0
        %2218 = vmatprep.subr.mxu0 0.0
        %2219 = vmatpush2.xpose.msra.mxu0 0.0
        %2220 = vmatprep.subr.mxu0 0.0
        %2221 = vmatpush2.xpose.msra.mxu0 0.0
        %2222 = vmatprep.subr.mxu0 0.0
        %2223 = vmatpush2.xpose.msra.mxu0 0.0
        %2224 = vmatprep.subr.mxu0 0.0
        %2225 = vmatpush2.xpose.msra.mxu0 0.0
        %2226 = vmatprep.subr.mxu0 0.0
        %2227 = vmatpush2.xpose.msra.mxu0 0.0
        %2228 = vmatprep.subr.mxu0 0.0
        %2229 = vmatpush2.xpose.msra.mxu0 0.0
        %2230 = vmatprep.subr.mxu0 0.0
        %2231 = vmatpush2.xpose.msra.mxu0 0.0
        %2232 = vmatprep.subr.mxu0 0.0
        %2233 = vmatpush2.xpose.msra.mxu0 0.0
        %2234 = vmatprep.subr.mxu0 0.0
        %2235 = vmatpush2.xpose.msra.mxu0 0.0
        %2236 = vmatprep.subr.mxu0 0.0
        %2237 = vmatpush2.xpose.msra.mxu0 0.0
        %2238 = vmatprep.subr.mxu0 0.0
        %2239 = vmatpush2.xpose.msra.mxu0 0.0
        %2240 = vmatprep.subr.mxu0 0.0
        %2241 = vmatpush2.xpose.msra.mxu0 0.0
        %2242 = vmatprep.mubr.f32.mxu0 0.0
        %2243 = vmatmul.mubr.f32.gmra.mxu0 %v2174
        %v2244 = vpop.f32.mrf.mxu0
        %v2245 = vadd.f32 0.0, %v2244
        %v2246 = vpop.f32.mrf.mxu0
        %2247 = vdwg.mxu0
        %v2248 = vsel %vm413, %v2245, -inf
        %2249 = vmax.xlane.f32.xlu0 %v2248
        %v2250 = vpop.xlane.xlu0 %2249
        %v2251 = vsub.f32 %v2245, %v2250
        %v2252 = vmul.f32 %v2251, 1.442695
        %v2253 = vpow.pop %v2252
        %v2254 = vsel %vm413, %v2253, 0.0
        %2255 = vadd.xlane.f32.xlu0 %v2254
        %v2256 = vpop.xlane.xlu0 %2255
        %v2257 = vrcp.pop %v2256
        %v2258 = vmul.f32 %v2253, %v2257
        %2259 = vrot.lane.b32.xlu0 %v1453, 40
        %v2260 = vpop.permute.xlu0 %2259
        %v2263 = vsel %vm413, %v2258, 0
        %2265 = vmatprep.subr.mxu0 0.0
        %2266 = vmatpush1.msra.mxu0 0.0
        %2267 = vmatprep.subr.mxu0 0.0
        %2268 = vmatpush1.msra.mxu0 0.0
        %2269 = vmatprep.subr.mxu0 0.0
        %2270 = vmatpush1.msra.mxu0 0.0
        %2271 = vmatprep.subr.mxu0 0.0
        %2272 = vmatpush1.msra.mxu0 0.0
        %2273 = vmatprep.subr.mxu0 0.0
        %2274 = vmatpush1.msra.mxu0 0.0
        %2275 = vmatprep.subr.mxu0 0.0
        %2276 = vmatpush1.msra.mxu0 0.0
        %2277 = vmatprep.subr.mxu0 0.0
        %2278 = vmatpush1.msra.mxu0 0.0
        %2279 = vmatprep.subr.mxu0 0.0
        %2280 = vmatpush1.msra.mxu0 0.0
        %2281 = vmatprep.subr.mxu0 0.0
        %2282 = vmatpush1.msra.mxu0 0.0
        %2283 = vmatprep.subr.mxu0 0.0
        %2284 = vmatpush1.msra.mxu0 0.0
        %2285 = vmatprep.subr.mxu0 0.0
        %2286 = vmatpush1.msra.mxu0 0.0
        %2287 = vmatprep.subr.mxu0 0.0
        %2288 = vmatpush1.msra.mxu0 0.0
        %2289 = vmatprep.subr.mxu0 0.0
        %2290 = vmatpush1.msra.mxu0 0.0
        %2291 = vmatprep.subr.mxu0 0.0
        %2292 = vmatpush1.msra.mxu0 0.0
        %2293 = vmatprep.subr.mxu0 0.0
        %2294 = vmatpush1.msra.mxu0 0.0
        %2295 = vmatprep.subr.mxu0 0.0
        %2296 = vmatpush1.msra.mxu0 %v2260
        %2297 = vmatprep.subr.mxu0 0.0
        %2298 = vmatpush2.msra.mxu0 0.0
        %2299 = vmatprep.subr.mxu0 0.0
        %2300 = vmatpush2.msra.mxu0 0.0
        %2301 = vmatprep.subr.mxu0 0.0
        %2302 = vmatpush2.msra.mxu0 0.0
        %2303 = vmatprep.subr.mxu0 0.0
        %2304 = vmatpush2.msra.mxu0 0.0
        %2305 = vmatprep.subr.mxu0 0.0
        %2306 = vmatpush2.msra.mxu0 0.0
        %2307 = vmatprep.subr.mxu0 0.0
        %2308 = vmatpush2.msra.mxu0 0.0
        %2309 = vmatprep.subr.mxu0 0.0
        %2310 = vmatpush2.msra.mxu0 0.0
        %2311 = vmatprep.subr.mxu0 0.0
        %2312 = vmatpush2.msra.mxu0 0.0
        %2313 = vmatprep.subr.mxu0 0.0
        %2314 = vmatpush2.msra.mxu0 0.0
        %2315 = vmatprep.subr.mxu0 0.0
        %2316 = vmatpush2.msra.mxu0 0.0
        %2317 = vmatprep.subr.mxu0 0.0
        %2318 = vmatpush2.msra.mxu0 0.0
        %2319 = vmatprep.subr.mxu0 0.0
        %2320 = vmatpush2.msra.mxu0 0.0
        %2321 = vmatprep.subr.mxu0 0.0
        %2322 = vmatpush2.msra.mxu0 0.0
        %2323 = vmatprep.subr.mxu0 0.0
        %2324 = vmatpush2.msra.mxu0 0.0
        %2325 = vmatprep.subr.mxu0 0.0
        %2326 = vmatpush2.msra.mxu0 0.0
        %2327 = vmatprep.subr.mxu0 0.0
        %2328 = vmatpush2.msra.mxu0 0.0
        %2329 = vmatprep.mubr.f32.mxu0 0.0
        %2330 = vmatmul.mubr.f32.gmra.mxu0 %v2263
        %v2331 = vpop.f32.mrf.mxu0
        %v2332 = vadd.f32 0.0, %v2331
        %v2333 = vpop.f32.mrf.mxu0
        %2334 = vdwg.mxu0
        %v2336 = vsel %vm413, %v2332, 0
        %2338 = vmatprep.subr.mxu0 0.0
        %2339 = vmatpush1.msra.mxu0 0.0
        %2340 = vmatprep.subr.mxu0 0.0
        %2341 = vmatpush1.msra.mxu0 0.0
        %2342 = vmatprep.subr.mxu0 0.0
        %2343 = vmatpush1.msra.mxu0 0.0
        %2344 = vmatprep.subr.mxu0 0.0
        %2345 = vmatpush1.msra.mxu0 0.0
        %2346 = vmatprep.subr.mxu0 0.0
        %2347 = vmatpush1.msra.mxu0 0.0
        %2348 = vmatprep.subr.mxu0 0.0
        %2349 = vmatpush1.msra.mxu0 0.0
        %2350 = vmatprep.subr.mxu0 0.0
        %2351 = vmatpush1.msra.mxu0 0.0
        %2352 = vmatprep.subr.mxu0 0.0
        %2353 = vmatpush1.msra.mxu0 0.0
        %2354 = vmatprep.subr.mxu0 0.0
        %2355 = vmatpush1.msra.mxu0 0.0
        %2356 = vmatprep.subr.mxu0 0.0
        %2357 = vmatpush1.msra.mxu0 0.0
        %2358 = vmatprep.subr.mxu0 0.0
        %2359 = vmatpush1.msra.mxu0 0.0
        %2360 = vmatprep.subr.mxu0 0.0
        %2361 = vmatpush1.msra.mxu0 0.0
        %2362 = vmatprep.subr.mxu0 0.0
        %2363 = vmatpush1.msra.mxu0 0.0
        %2364 = vmatprep.subr.mxu0 0.0
        %2365 = vmatpush1.msra.mxu0 0.0
        %2366 = vmatprep.subr.mxu0 0.0
        %2367 = vmatpush1.msra.mxu0 0.0
        %2368 = vmatprep.subr.mxu0 0.0
        %2369 = vmatpush1.msra.mxu0 %v1378
        %2370 = vmatprep.subr.mxu0 0.0
        %2371 = vmatpush2.msra.mxu0 0.0
        %2372 = vmatprep.subr.mxu0 0.0
        %2373 = vmatpush2.msra.mxu0 0.0
        %2374 = vmatprep.subr.mxu0 0.0
        %2375 = vmatpush2.msra.mxu0 0.0
        %2376 = vmatprep.subr.mxu0 0.0
        %2377 = vmatpush2.msra.mxu0 0.0
        %2378 = vmatprep.subr.mxu0 0.0
        %2379 = vmatpush2.msra.mxu0 0.0
        %2380 = vmatprep.subr.mxu0 0.0
        %2381 = vmatpush2.msra.mxu0 0.0
        %2382 = vmatprep.subr.mxu0 0.0
        %2383 = vmatpush2.msra.mxu0 0.0
        %2384 = vmatprep.subr.mxu0 0.0
        %2385 = vmatpush2.msra.mxu0 0.0
        %2386 = vmatprep.subr.mxu0 0.0
        %2387 = vmatpush2.msra.mxu0 0.0
        %2388 = vmatprep.subr.mxu0 0.0
        %2389 = vmatpush2.msra.mxu0 0.0
        %2390 = vmatprep.subr.mxu0 0.0
        %2391 = vmatpush2.msra.mxu0 0.0
        %2392 = vmatprep.subr.mxu0 0.0
        %2393 = vmatpush2.msra.mxu0 0.0
        %2394 = vmatprep.subr.mxu0 0.0
        %2395 = vmatpush2.msra.mxu0 0.0
        %2396 = vmatprep.subr.mxu0 0.0
        %2397 = vmatpush2.msra.mxu0 0.0
        %2398 = vmatprep.subr.mxu0 0.0
        %2399 = vmatpush2.msra.mxu0 0.0
        %2400 = vmatprep.subr.mxu0 0.0
        %2401 = vmatpush2.msra.mxu0 0.0
        %2402 = vmatprep.mubr.f32.mxu0 0.0
        %2403 = vmatmul.mubr.f32.gmra.mxu0 %v2336
        %v2404 = vpop.f32.mrf.mxu0
        %v2405 = vadd.f32 0.0, %v2404
        %v2406 = vpop.f32.mrf.mxu0
        %2407 = vdwg.mxu0
        %v2408 = vadd.f32 %v2169, %v2405
        %v2409 = vlaneseq
        %v2410 = vshrl.u32 %v2409, 7
        %v2411 = vsub.s32 4, %v2410
        %v2412 = vrot.slane %v322, %v2411
        %v2413 = vadd.f32 %v2408, %v2412
        %s2414 = scalar_lea.vmem [#allocation7], 64
        %v2415 = vld [vmem:[%s2414] sm:$0xff]
        %v2416 = vld [vmem:[%s2414 + $0x8] sm:$0xff]
        %v2417 = vld [vmem:[%s2414 + $0x10] sm:$0xff]
        %v2418 = vld [vmem:[%s2414 + $0x18] sm:$0xff]
        %s2419 = scalar_lea.vmem [#allocation8], 64
        %v2420 = vld [vmem:[%s2419] sm:$0xff]
        %v2421 = vld [vmem:[%s2419 + $0x8] sm:$0xff]
        %v2422 = vld [vmem:[%s2419 + $0x10] sm:$0xff]
        %v2423 = vld [vmem:[%s2419 + $0x18] sm:$0xff]
        %v2424 = vlaneseq
        %v2425 = vshrl.u32 %v2424, 7
        %v2426 = vsub.s32 2, %v2425
        %v2427 = vrot.slane %v322, %v2426
        %v2429 = vsel %vm336, %v1368, 0
        %2431 = vmatprep.subr.mxu0 0.0
        %2432 = vmatpush1.msra.mxu0 0.0
        %2433 = vmatprep.subr.mxu0 0.0
        %2434 = vmatpush1.msra.mxu0 0.0
        %2435 = vmatprep.subr.mxu0 0.0
        %2436 = vmatpush1.msra.mxu0 0.0
        %2437 = vmatprep.subr.mxu0 0.0
        %2438 = vmatpush1.msra.mxu0 0.0
        %2439 = vmatprep.subr.mxu0 0.0
        %2440 = vmatpush1.msra.mxu0 0.0
        %2441 = vmatprep.subr.mxu0 0.0
        %2442 = vmatpush1.msra.mxu0 0.0
        %2443 = vmatprep.subr.mxu0 0.0
        %2444 = vmatpush1.msra.mxu0 0.0
        %2445 = vmatprep.subr.mxu0 0.0
        %2446 = vmatpush1.msra.mxu0 0.0
        %2447 = vmatprep.subr.mxu0 0.0
        %2448 = vmatpush1.msra.mxu0 0.0
        %2449 = vmatprep.subr.mxu0 0.0
        %2450 = vmatpush1.msra.mxu0 0.0
        %2451 = vmatprep.subr.mxu0 0.0
        %2452 = vmatpush1.msra.mxu0 0.0
        %2453 = vmatprep.subr.mxu0 0.0
        %2454 = vmatpush1.msra.mxu0 0.0
        %2455 = vmatprep.subr.mxu0 0.0
        %2456 = vmatpush1.msra.mxu0 %v2418
        %2457 = vmatprep.subr.mxu0 0.0
        %2458 = vmatpush1.msra.mxu0 %v2417
        %2459 = vmatprep.subr.mxu0 0.0
        %2460 = vmatpush1.msra.mxu0 %v2416
        %2461 = vmatprep.subr.mxu0 0.0
        %2462 = vmatpush1.msra.mxu0 %v2415
        %2463 = vmatprep.subr.mxu0 0.0
        %2464 = vmatpush2.msra.mxu0 0.0
        %2465 = vmatprep.subr.mxu0 0.0
        %2466 = vmatpush2.msra.mxu0 0.0
        %2467 = vmatprep.subr.mxu0 0.0
        %2468 = vmatpush2.msra.mxu0 0.0
        %2469 = vmatprep.subr.mxu0 0.0
        %2470 = vmatpush2.msra.mxu0 0.0
        %2471 = vmatprep.subr.mxu0 0.0
        %2472 = vmatpush2.msra.mxu0 0.0
        %2473 = vmatprep.subr.mxu0 0.0
        %2474 = vmatpush2.msra.mxu0 0.0
        %2475 = vmatprep.subr.mxu0 0.0
        %2476 = vmatpush2.msra.mxu0 0.0
        %2477 = vmatprep.subr.mxu0 0.0
        %2478 = vmatpush2.msra.mxu0 0.0
        %2479 = vmatprep.subr.mxu0 0.0
        %2480 = vmatpush2.msra.mxu0 0.0
        %2481 = vmatprep.subr.mxu0 0.0
        %2482 = vmatpush2.msra.mxu0 0.0
        %2483 = vmatprep.subr.mxu0 0.0
        %2484 = vmatpush2.msra.mxu0 0.0
        %2485 = vmatprep.subr.mxu0 0.0
        %2486 = vmatpush2.msra.mxu0 0.0
        %2487 = vmatprep.subr.mxu0 0.0
        %2488 = vmatpush2.msra.mxu0 0.0
        %2489 = vmatprep.subr.mxu0 0.0
        %2490 = vmatpush2.msra.mxu0 0.0
        %2491 = vmatprep.subr.mxu0 0.0
        %2492 = vmatpush2.msra.mxu0 0.0
        %2493 = vmatprep.subr.mxu0 0.0
        %2494 = vmatpush2.msra.mxu0 0.0
        %2495 = vmatprep.mubr.f32.mxu0 0.0
        %2496 = vmatmul.mubr.f32.gmra.mxu0 %v2429
        %v2497 = vpop.f32.mrf.mxu0
        %v2498 = vadd.f32 %v2427, %v2497
        %v2499 = vpop.f32.mrf.mxu0
        %2500 = vdwg.mxu0
        %2505 = vrot.lane.b32.xlu0 %v2415, 96
        %v2506 = vpop.permute.xlu0 %2505
        %2507 = vrot.lane.b32.xlu0 %v2416, 96
        %v2508 = vpop.permute.xlu0 %2507
        %2509 = vrot.lane.b32.xlu0 %v2417, 96
        %v2510 = vpop.permute.xlu0 %2509
        %2511 = vrot.lane.b32.xlu0 %v2418, 96
        %v2512 = vpop.permute.xlu0 %2511
        %2518 = vrot.lane.b32.xlu0 %v2427, 96
        %v2519 = vpop.permute.xlu0 %2518
        %v2522 = vsel %vm336, %v2413, 0
        %2524 = vmatprep.subr.mxu0 0.0
        %2525 = vmatpush1.msra.mxu0 0.0
        %2526 = vmatprep.subr.mxu0 0.0
        %2527 = vmatpush1.msra.mxu0 0.0
        %2528 = vmatprep.subr.mxu0 0.0
        %2529 = vmatpush1.msra.mxu0 0.0
        %2530 = vmatprep.subr.mxu0 0.0
        %2531 = vmatpush1.msra.mxu0 0.0
        %2532 = vmatprep.subr.mxu0 0.0
        %2533 = vmatpush1.msra.mxu0 0.0
        %2534 = vmatprep.subr.mxu0 0.0
        %2535 = vmatpush1.msra.mxu0 0.0
        %2536 = vmatprep.subr.mxu0 0.0
        %2537 = vmatpush1.msra.mxu0 0.0
        %2538 = vmatprep.subr.mxu0 0.0
        %2539 = vmatpush1.msra.mxu0 0.0
        %2540 = vmatprep.subr.mxu0 0.0
        %2541 = vmatpush1.msra.mxu0 0.0
        %2542 = vmatprep.subr.mxu0 0.0
        %2543 = vmatpush1.msra.mxu0 0.0
        %2544 = vmatprep.subr.mxu0 0.0
        %2545 = vmatpush1.msra.mxu0 0.0
        %2546 = vmatprep.subr.mxu0 0.0
        %2547 = vmatpush1.msra.mxu0 0.0
        %2548 = vmatprep.subr.mxu0 0.0
        %2549 = vmatpush1.msra.mxu0 %v2512
        %2550 = vmatprep.subr.mxu0 0.0
        %2551 = vmatpush1.msra.mxu0 %v2510
        %2552 = vmatprep.subr.mxu0 0.0
        %2553 = vmatpush1.msra.mxu0 %v2508
        %2554 = vmatprep.subr.mxu0 0.0
        %2555 = vmatpush1.msra.mxu0 %v2506
        %2556 = vmatprep.subr.mxu0 0.0
        %2557 = vmatpush2.msra.mxu0 0.0
        %2558 = vmatprep.subr.mxu0 0.0
        %2559 = vmatpush2.msra.mxu0 0.0
        %2560 = vmatprep.subr.mxu0 0.0
        %2561 = vmatpush2.msra.mxu0 0.0
        %2562 = vmatprep.subr.mxu0 0.0
        %2563 = vmatpush2.msra.mxu0 0.0
        %2564 = vmatprep.subr.mxu0 0.0
        %2565 = vmatpush2.msra.mxu0 0.0
        %2566 = vmatprep.subr.mxu0 0.0
        %2567 = vmatpush2.msra.mxu0 0.0
        %2568 = vmatprep.subr.mxu0 0.0
        %2569 = vmatpush2.msra.mxu0 0.0
        %2570 = vmatprep.subr.mxu0 0.0
        %2571 = vmatpush2.msra.mxu0 0.0
        %2572 = vmatprep.subr.mxu0 0.0
        %2573 = vmatpush2.msra.mxu0 0.0
        %2574 = vmatprep.subr.mxu0 0.0
        %2575 = vmatpush2.msra.mxu0 0.0
        %2576 = vmatprep.subr.mxu0 0.0
        %2577 = vmatpush2.msra.mxu0 0.0
        %2578 = vmatprep.subr.mxu0 0.0
        %2579 = vmatpush2.msra.mxu0 0.0
        %2580 = vmatprep.subr.mxu0 0.0
        %2581 = vmatpush2.msra.mxu0 0.0
        %2582 = vmatprep.subr.mxu0 0.0
        %2583 = vmatpush2.msra.mxu0 0.0
        %2584 = vmatprep.subr.mxu0 0.0
        %2585 = vmatpush2.msra.mxu0 0.0
        %2586 = vmatprep.subr.mxu0 0.0
        %2587 = vmatpush2.msra.mxu0 0.0
        %2588 = vmatprep.mubr.f32.mxu0 0.0
        %2589 = vmatmul.mubr.f32.gmra.mxu0 %v2522
        %v2590 = vpop.f32.mrf.mxu0
        %v2591 = vadd.f32 %v2519, %v2590
        %v2592 = vpop.f32.mrf.mxu0
        %2593 = vdwg.mxu0
        %v2595 = vsel %vm413, %v2498, 0
        %v2598 = vsel %vm413, %v2591, 0
        %2600 = vmatprep.subr.mxu0 0.0
        %2601 = vmatpush1.xpose.msra.mxu0 0.0
        %2602 = vmatprep.subr.mxu0 0.0
        %2603 = vmatpush1.xpose.msra.mxu0 0.0
        %2604 = vmatprep.subr.mxu0 0.0
        %2605 = vmatpush1.xpose.msra.mxu0 0.0
        %2606 = vmatprep.subr.mxu0 0.0
        %2607 = vmatpush1.xpose.msra.mxu0 0.0
        %2608 = vmatprep.subr.mxu0 0.0
        %2609 = vmatpush1.xpose.msra.mxu0 0.0
        %2610 = vmatprep.subr.mxu0 0.0
        %2611 = vmatpush1.xpose.msra.mxu0 0.0
        %2612 = vmatprep.subr.mxu0 0.0
        %2613 = vmatpush1.xpose.msra.mxu0 0.0
        %2614 = vmatprep.subr.mxu0 0.0
        %2615 = vmatpush1.xpose.msra.mxu0 0.0
        %2616 = vmatprep.subr.mxu0 0.0
        %2617 = vmatpush1.xpose.msra.mxu0 0.0
        %2618 = vmatprep.subr.mxu0 0.0
        %2619 = vmatpush1.xpose.msra.mxu0 0.0
        %2620 = vmatprep.subr.mxu0 0.0
        %2621 = vmatpush1.xpose.msra.mxu0 0.0
        %2622 = vmatprep.subr.mxu0 0.0
        %2623 = vmatpush1.xpose.msra.mxu0 0.0
        %2624 = vmatprep.subr.mxu0 0.0
        %2625 = vmatpush1.xpose.msra.mxu0 0.0
        %2626 = vmatprep.subr.mxu0 0.0
        %2627 = vmatpush1.xpose.msra.mxu0 0.0
        %2628 = vmatprep.subr.mxu0 0.0
        %2629 = vmatpush1.xpose.msra.mxu0 0.0
        %2630 = vmatprep.subr.mxu0 0.0
        %2631 = vmatpush1.xpose.msra.mxu0 %v2598
        %2632 = vmatprep.subr.mxu0 0.0
        %2633 = vmatpush2.xpose.msra.mxu0 0.0
        %2634 = vmatprep.subr.mxu0 0.0
        %2635 = vmatpush2.xpose.msra.mxu0 0.0
        %2636 = vmatprep.subr.mxu0 0.0
        %2637 = vmatpush2.xpose.msra.mxu0 0.0
        %2638 = vmatprep.subr.mxu0 0.0
        %2639 = vmatpush2.xpose.msra.mxu0 0.0
        %2640 = vmatprep.subr.mxu0 0.0
        %2641 = vmatpush2.xpose.msra.mxu0 0.0
        %2642 = vmatprep.subr.mxu0 0.0
        %2643 = vmatpush2.xpose.msra.mxu0 0.0
        %2644 = vmatprep.subr.mxu0 0.0
        %2645 = vmatpush2.xpose.msra.mxu0 0.0
        %2646 = vmatprep.subr.mxu0 0.0
        %2647 = vmatpush2.xpose.msra.mxu0 0.0
        %2648 = vmatprep.subr.mxu0 0.0
        %2649 = vmatpush2.xpose.msra.mxu0 0.0
        %2650 = vmatprep.subr.mxu0 0.0
        %2651 = vmatpush2.xpose.msra.mxu0 0.0
        %2652 = vmatprep.subr.mxu0 0.0
        %2653 = vmatpush2.xpose.msra.mxu0 0.0
        %2654 = vmatprep.subr.mxu0 0.0
        %2655 = vmatpush2.xpose.msra.mxu0 0.0
        %2656 = vmatprep.subr.mxu0 0.0
        %2657 = vmatpush2.xpose.msra.mxu0 0.0
        %2658 = vmatprep.subr.mxu0 0.0
        %2659 = vmatpush2.xpose.msra.mxu0 0.0
        %2660 = vmatprep.subr.mxu0 0.0
        %2661 = vmatpush2.xpose.msra.mxu0 0.0
        %2662 = vmatprep.subr.mxu0 0.0
        %2663 = vmatpush2.xpose.msra.mxu0 0.0
        %2664 = vmatprep.mubr.f32.mxu0 0.0
        %2665 = vmatmul.mubr.f32.gmra.mxu0 %v2595
        %v2666 = vpop.f32.mrf.mxu0
        %v2667 = vadd.f32 0.0, %v2666
        %v2668 = vpop.f32.mrf.mxu0
        %2669 = vdwg.mxu0
        %v2670 = vsel %vm413, %v2667, -inf
        %2671 = vmax.xlane.f32.xlu0 %v2670
        %v2672 = vpop.xlane.xlu0 %2671
        %v2673 = vsub.f32 %v2667, %v2672
        %v2674 = vmul.f32 %v2673, 1.442695
        %v2675 = vpow.pop %v2674
        %v2676 = vsel %vm413, %v2675, 0.0
        %2677 = vadd.xlane.f32.xlu0 %v2676
        %v2678 = vpop.xlane.xlu0 %2677
        %v2679 = vrcp.pop %v2678
        %v2680 = vmul.f32 %v2675, %v2679
        %2681 = vrot.lane.b32.xlu0 %v2591, 96
        %v2682 = vpop.permute.xlu0 %2681
        %v2685 = vsel %vm413, %v2680, 0
        %2687 = vmatprep.subr.mxu0 0.0
        %2688 = vmatpush1.msra.mxu0 0.0
        %2689 = vmatprep.subr.mxu0 0.0
        %2690 = vmatpush1.msra.mxu0 0.0
        %2691 = vmatprep.subr.mxu0 0.0
        %2692 = vmatpush1.msra.mxu0 0.0
        %2693 = vmatprep.subr.mxu0 0.0
        %2694 = vmatpush1.msra.mxu0 0.0
        %2695 = vmatprep.subr.mxu0 0.0
        %2696 = vmatpush1.msra.mxu0 0.0
        %2697 = vmatprep.subr.mxu0 0.0
        %2698 = vmatpush1.msra.mxu0 0.0
        %2699 = vmatprep.subr.mxu0 0.0
        %2700 = vmatpush1.msra.mxu0 0.0
        %2701 = vmatprep.subr.mxu0 0.0
        %2702 = vmatpush1.msra.mxu0 0.0
        %2703 = vmatprep.subr.mxu0 0.0
        %2704 = vmatpush1.msra.mxu0 0.0
        %2705 = vmatprep.subr.mxu0 0.0
        %2706 = vmatpush1.msra.mxu0 0.0
        %2707 = vmatprep.subr.mxu0 0.0
        %2708 = vmatpush1.msra.mxu0 0.0
        %2709 = vmatprep.subr.mxu0 0.0
        %2710 = vmatpush1.msra.mxu0 0.0
        %2711 = vmatprep.subr.mxu0 0.0
        %2712 = vmatpush1.msra.mxu0 0.0
        %2713 = vmatprep.subr.mxu0 0.0
        %2714 = vmatpush1.msra.mxu0 0.0
        %2715 = vmatprep.subr.mxu0 0.0
        %2716 = vmatpush1.msra.mxu0 0.0
        %2717 = vmatprep.subr.mxu0 0.0
        %2718 = vmatpush1.msra.mxu0 %v2682
        %2719 = vmatprep.subr.mxu0 0.0
        %2720 = vmatpush2.msra.mxu0 0.0
        %2721 = vmatprep.subr.mxu0 0.0
        %2722 = vmatpush2.msra.mxu0 0.0
        %2723 = vmatprep.subr.mxu0 0.0
        %2724 = vmatpush2.msra.mxu0 0.0
        %2725 = vmatprep.subr.mxu0 0.0
        %2726 = vmatpush2.msra.mxu0 0.0
        %2727 = vmatprep.subr.mxu0 0.0
        %2728 = vmatpush2.msra.mxu0 0.0
        %2729 = vmatprep.subr.mxu0 0.0
        %2730 = vmatpush2.msra.mxu0 0.0
        %2731 = vmatprep.subr.mxu0 0.0
        %2732 = vmatpush2.msra.mxu0 0.0
        %2733 = vmatprep.subr.mxu0 0.0
        %2734 = vmatpush2.msra.mxu0 0.0
        %2735 = vmatprep.subr.mxu0 0.0
        %2736 = vmatpush2.msra.mxu0 0.0
        %2737 = vmatprep.subr.mxu0 0.0
        %2738 = vmatpush2.msra.mxu0 0.0
        %2739 = vmatprep.subr.mxu0 0.0
        %2740 = vmatpush2.msra.mxu0 0.0
        %2741 = vmatprep.subr.mxu0 0.0
        %2742 = vmatpush2.msra.mxu0 0.0
        %2743 = vmatprep.subr.mxu0 0.0
        %2744 = vmatpush2.msra.mxu0 0.0
        %2745 = vmatprep.subr.mxu0 0.0
        %2746 = vmatpush2.msra.mxu0 0.0
        %2747 = vmatprep.subr.mxu0 0.0
        %2748 = vmatpush2.msra.mxu0 0.0
        %2749 = vmatprep.subr.mxu0 0.0
        %2750 = vmatpush2.msra.mxu0 0.0
        %2751 = vmatprep.mubr.f32.mxu0 0.0
        %2752 = vmatmul.mubr.f32.gmra.mxu0 %v2685
        %v2753 = vpop.f32.mrf.mxu0
        %v2754 = vadd.f32 0.0, %v2753
        %v2755 = vpop.f32.mrf.mxu0
        %2756 = vdwg.mxu0
        %2757 = vrot.lane.b32.xlu0 %v2498, 120
        %v2758 = vpop.permute.xlu0 %2757
        %2759 = vrot.lane.b32.xlu0 %v2591, 120
        %v2760 = vpop.permute.xlu0 %2759
        %v2761 = vsel %vm413, %v2758, 0
        %v2763 = vsel %vm413, %v2760, 0
        %2765 = vmatprep.subr.mxu0 0.0
        %2766 = vmatpush1.xpose.msra.mxu0 0.0
        %2767 = vmatprep.subr.mxu0 0.0
        %2768 = vmatpush1.xpose.msra.mxu0 0.0
        %2769 = vmatprep.subr.mxu0 0.0
        %2770 = vmatpush1.xpose.msra.mxu0 0.0
        %2771 = vmatprep.subr.mxu0 0.0
        %2772 = vmatpush1.xpose.msra.mxu0 0.0
        %2773 = vmatprep.subr.mxu0 0.0
        %2774 = vmatpush1.xpose.msra.mxu0 0.0
        %2775 = vmatprep.subr.mxu0 0.0
        %2776 = vmatpush1.xpose.msra.mxu0 0.0
        %2777 = vmatprep.subr.mxu0 0.0
        %2778 = vmatpush1.xpose.msra.mxu0 0.0
        %2779 = vmatprep.subr.mxu0 0.0
        %2780 = vmatpush1.xpose.msra.mxu0 0.0
        %2781 = vmatprep.subr.mxu0 0.0
        %2782 = vmatpush1.xpose.msra.mxu0 0.0
        %2783 = vmatprep.subr.mxu0 0.0
        %2784 = vmatpush1.xpose.msra.mxu0 0.0
        %2785 = vmatprep.subr.mxu0 0.0
        %2786 = vmatpush1.xpose.msra.mxu0 0.0
        %2787 = vmatprep.subr.mxu0 0.0
        %2788 = vmatpush1.xpose.msra.mxu0 0.0
        %2789 = vmatprep.subr.mxu0 0.0
        %2790 = vmatpush1.xpose.msra.mxu0 0.0
        %2791 = vmatprep.subr.mxu0 0.0
        %2792 = vmatpush1.xpose.msra.mxu0 0.0
        %2793 = vmatprep.subr.mxu0 0.0
        %2794 = vmatpush1.xpose.msra.mxu0 0.0
        %2795 = vmatprep.subr.mxu0 0.0
        %2796 = vmatpush1.xpose.msra.mxu0 %v2763
        %2797 = vmatprep.subr.mxu0 0.0
        %2798 = vmatpush2.xpose.msra.mxu0 0.0
        %2799 = vmatprep.subr.mxu0 0.0
        %2800 = vmatpush2.xpose.msra.mxu0 0.0
        %2801 = vmatprep.subr.mxu0 0.0
        %2802 = vmatpush2.xpose.msra.mxu0 0.0
        %2803 = vmatprep.subr.mxu0 0.0
        %2804 = vmatpush2.xpose.msra.mxu0 0.0
        %2805 = vmatprep.subr.mxu0 0.0
        %2806 = vmatpush2.xpose.msra.mxu0 0.0
        %2807 = vmatprep.subr.mxu0 0.0
        %2808 = vmatpush2.xpose.msra.mxu0 0.0
        %2809 = vmatprep.subr.mxu0 0.0
        %2810 = vmatpush2.xpose.msra.mxu0 0.0
        %2811 = vmatprep.subr.mxu0 0.0
        %2812 = vmatpush2.xpose.msra.mxu0 0.0
        %2813 = vmatprep.subr.mxu0 0.0
        %2814 = vmatpush2.xpose.msra.mxu0 0.0
        %2815 = vmatprep.subr.mxu0 0.0
        %2816 = vmatpush2.xpose.msra.mxu0 0.0
        %2817 = vmatprep.subr.mxu0 0.0
        %2818 = vmatpush2.xpose.msra.mxu0 0.0
        %2819 = vmatprep.subr.mxu0 0.0
        %2820 = vmatpush2.xpose.msra.mxu0 0.0
        %2821 = vmatprep.subr.mxu0 0.0
        %2822 = vmatpush2.xpose.msra.mxu0 0.0
        %2823 = vmatprep.subr.mxu0 0.0
        %2824 = vmatpush2.xpose.msra.mxu0 0.0
        %2825 = vmatprep.subr.mxu0 0.0
        %2826 = vmatpush2.xpose.msra.mxu0 0.0
        %2827 = vmatprep.subr.mxu0 0.0
        %2828 = vmatpush2.xpose.msra.mxu0 0.0
        %2829 = vmatprep.mubr.f32.mxu0 0.0
        %2830 = vmatmul.mubr.f32.gmra.mxu0 %v2761
        %v2831 = vpop.f32.mrf.mxu0
        %v2832 = vadd.f32 0.0, %v2831
        %v2833 = vpop.f32.mrf.mxu0
        %2834 = vdwg.mxu0
        %v2835 = vsel %vm413, %v2832, -inf
        %2836 = vmax.xlane.f32.xlu0 %v2835
        %v2837 = vpop.xlane.xlu0 %2836
        %v2838 = vsub.f32 %v2832, %v2837
        %v2839 = vmul.f32 %v2838, 1.442695
        %v2840 = vpow.pop %v2839
        %v2841 = vsel %vm413, %v2840, 0.0
        %2842 = vadd.xlane.f32.xlu0 %v2841
        %v2843 = vpop.xlane.xlu0 %2842
        %v2844 = vrcp.pop %v2843
        %v2845 = vmul.f32 %v2840, %v2844
        %2846 = vrot.lane.b32.xlu0 %v2591, 88
        %v2847 = vpop.permute.xlu0 %2846
        %v2850 = vsel %vm413, %v2845, 0
        %2852 = vmatprep.subr.mxu0 0.0
        %2853 = vmatpush1.msra.mxu0 0.0
        %2854 = vmatprep.subr.mxu0 0.0
        %2855 = vmatpush1.msra.mxu0 0.0
        %2856 = vmatprep.subr.mxu0 0.0
        %2857 = vmatpush1.msra.mxu0 0.0
        %2858 = vmatprep.subr.mxu0 0.0
        %2859 = vmatpush1.msra.mxu0 0.0
        %2860 = vmatprep.subr.mxu0 0.0
        %2861 = vmatpush1.msra.mxu0 0.0
        %2862 = vmatprep.subr.mxu0 0.0
        %2863 = vmatpush1.msra.mxu0 0.0
        %2864 = vmatprep.subr.mxu0 0.0
        %2865 = vmatpush1.msra.mxu0 0.0
        %2866 = vmatprep.subr.mxu0 0.0
        %2867 = vmatpush1.msra.mxu0 0.0
        %2868 = vmatprep.subr.mxu0 0.0
        %2869 = vmatpush1.msra.mxu0 0.0
        %2870 = vmatprep.subr.mxu0 0.0
        %2871 = vmatpush1.msra.mxu0 0.0
        %2872 = vmatprep.subr.mxu0 0.0
        %2873 = vmatpush1.msra.mxu0 0.0
        %2874 = vmatprep.subr.mxu0 0.0
        %2875 = vmatpush1.msra.mxu0 0.0
        %2876 = vmatprep.subr.mxu0 0.0
        %2877 = vmatpush1.msra.mxu0 0.0
        %2878 = vmatprep.subr.mxu0 0.0
        %2879 = vmatpush1.msra.mxu0 0.0
        %2880 = vmatprep.subr.mxu0 0.0
        %2881 = vmatpush1.msra.mxu0 0.0
        %2882 = vmatprep.subr.mxu0 0.0
        %2883 = vmatpush1.msra.mxu0 %v2847
        %2884 = vmatprep.subr.mxu0 0.0
        %2885 = vmatpush2.msra.mxu0 0.0
        %2886 = vmatprep.subr.mxu0 0.0
        %2887 = vmatpush2.msra.mxu0 0.0
        %2888 = vmatprep.subr.mxu0 0.0
        %2889 = vmatpush2.msra.mxu0 0.0
        %2890 = vmatprep.subr.mxu0 0.0
        %2891 = vmatpush2.msra.mxu0 0.0
        %2892 = vmatprep.subr.mxu0 0.0
        %2893 = vmatpush2.msra.mxu0 0.0
        %2894 = vmatprep.subr.mxu0 0.0
        %2895 = vmatpush2.msra.mxu0 0.0
        %2896 = vmatprep.subr.mxu0 0.0
        %2897 = vmatpush2.msra.mxu0 0.0
        %2898 = vmatprep.subr.mxu0 0.0
        %2899 = vmatpush2.msra.mxu0 0.0
        %2900 = vmatprep.subr.mxu0 0.0
        %2901 = vmatpush2.msra.mxu0 0.0
        %2902 = vmatprep.subr.mxu0 0.0
        %2903 = vmatpush2.msra.mxu0 0.0
        %2904 = vmatprep.subr.mxu0 0.0
        %2905 = vmatpush2.msra.mxu0 0.0
        %2906 = vmatprep.subr.mxu0 0.0
        %2907 = vmatpush2.msra.mxu0 0.0
        %2908 = vmatprep.subr.mxu0 0.0
        %2909 = vmatpush2.msra.mxu0 0.0
        %2910 = vmatprep.subr.mxu0 0.0
        %2911 = vmatpush2.msra.mxu0 0.0
        %2912 = vmatprep.subr.mxu0 0.0
        %2913 = vmatpush2.msra.mxu0 0.0
        %2914 = vmatprep.subr.mxu0 0.0
        %2915 = vmatpush2.msra.mxu0 0.0
        %2916 = vmatprep.mubr.f32.mxu0 0.0
        %2917 = vmatmul.mubr.f32.gmra.mxu0 %v2850
        %v2918 = vpop.f32.mrf.mxu0
        %v2919 = vadd.f32 0.0, %v2918
        %v2920 = vpop.f32.mrf.mxu0
        %2921 = vdwg.mxu0
        %v2923 = vsel %vm413, %v2919, 0
        %2925 = vmatprep.subr.mxu0 0.0
        %2926 = vmatpush1.msra.mxu0 0.0
        %2927 = vmatprep.subr.mxu0 0.0
        %2928 = vmatpush1.msra.mxu0 0.0
        %2929 = vmatprep.subr.mxu0 0.0
        %2930 = vmatpush1.msra.mxu0 0.0
        %2931 = vmatprep.subr.mxu0 0.0
        %2932 = vmatpush1.msra.mxu0 0.0
        %2933 = vmatprep.subr.mxu0 0.0
        %2934 = vmatpush1.msra.mxu0 0.0
        %2935 = vmatprep.subr.mxu0 0.0
        %2936 = vmatpush1.msra.mxu0 0.0
        %2937 = vmatprep.subr.mxu0 0.0
        %2938 = vmatpush1.msra.mxu0 0.0
        %2939 = vmatprep.subr.mxu0 0.0
        %2940 = vmatpush1.msra.mxu0 0.0
        %2941 = vmatprep.subr.mxu0 0.0
        %2942 = vmatpush1.msra.mxu0 0.0
        %2943 = vmatprep.subr.mxu0 0.0
        %2944 = vmatpush1.msra.mxu0 0.0
        %2945 = vmatprep.subr.mxu0 0.0
        %2946 = vmatpush1.msra.mxu0 0.0
        %2947 = vmatprep.subr.mxu0 0.0
        %2948 = vmatpush1.msra.mxu0 0.0
        %2949 = vmatprep.subr.mxu0 0.0
        %2950 = vmatpush1.msra.mxu0 0.0
        %2951 = vmatprep.subr.mxu0 0.0
        %2952 = vmatpush1.msra.mxu0 0.0
        %2953 = vmatprep.subr.mxu0 0.0
        %2954 = vmatpush1.msra.mxu0 0.0
        %2955 = vmatprep.subr.mxu0 0.0
        %2956 = vmatpush1.msra.mxu0 %v2421
        %2957 = vmatprep.subr.mxu0 0.0
        %2958 = vmatpush2.msra.mxu0 0.0
        %2959 = vmatprep.subr.mxu0 0.0
        %2960 = vmatpush2.msra.mxu0 0.0
        %2961 = vmatprep.subr.mxu0 0.0
        %2962 = vmatpush2.msra.mxu0 0.0
        %2963 = vmatprep.subr.mxu0 0.0
        %2964 = vmatpush2.msra.mxu0 0.0
        %2965 = vmatprep.subr.mxu0 0.0
        %2966 = vmatpush2.msra.mxu0 0.0
        %2967 = vmatprep.subr.mxu0 0.0
        %2968 = vmatpush2.msra.mxu0 0.0
        %2969 = vmatprep.subr.mxu0 0.0
        %2970 = vmatpush2.msra.mxu0 0.0
        %2971 = vmatprep.subr.mxu0 0.0
        %2972 = vmatpush2.msra.mxu0 0.0
        %2973 = vmatprep.subr.mxu0 0.0
        %2974 = vmatpush2.msra.mxu0 0.0
        %2975 = vmatprep.subr.mxu0 0.0
        %2976 = vmatpush2.msra.mxu0 0.0
        %2977 = vmatprep.subr.mxu0 0.0
        %2978 = vmatpush2.msra.mxu0 0.0
        %2979 = vmatprep.subr.mxu0 0.0
        %2980 = vmatpush2.msra.mxu0 0.0
        %2981 = vmatprep.subr.mxu0 0.0
        %2982 = vmatpush2.msra.mxu0 0.0
        %2983 = vmatprep.subr.mxu0 0.0
        %2984 = vmatpush2.msra.mxu0 0.0
        %2985 = vmatprep.subr.mxu0 0.0
        %2986 = vmatpush2.msra.mxu0 0.0
        %2987 = vmatprep.subr.mxu0 0.0
        %2988 = vmatpush2.msra.mxu0 0.0
        %2989 = vmatprep.mubr.f32.mxu0 0.0
        %2990 = vmatmul.mubr.f32.gmra.mxu0 %v2923
        %v2991 = vpop.f32.mrf.mxu0
        %v2992 = vadd.f32 0.0, %v2991
        %v2993 = vpop.f32.mrf.mxu0
        %2994 = vdwg.mxu0
        %v2996 = vsel %vm413, %v2754, 0
        %2998 = vmatprep.subr.mxu0 0.0
        %2999 = vmatpush1.msra.mxu0 0.0
        %3000 = vmatprep.subr.mxu0 0.0
        %3001 = vmatpush1.msra.mxu0 0.0
        %3002 = vmatprep.subr.mxu0 0.0
        %3003 = vmatpush1.msra.mxu0 0.0
        %3004 = vmatprep.subr.mxu0 0.0
        %3005 = vmatpush1.msra.mxu0 0.0
        %3006 = vmatprep.subr.mxu0 0.0
        %3007 = vmatpush1.msra.mxu0 0.0
        %3008 = vmatprep.subr.mxu0 0.0
        %3009 = vmatpush1.msra.mxu0 0.0
        %3010 = vmatprep.subr.mxu0 0.0
        %3011 = vmatpush1.msra.mxu0 0.0
        %3012 = vmatprep.subr.mxu0 0.0
        %3013 = vmatpush1.msra.mxu0 0.0
        %3014 = vmatprep.subr.mxu0 0.0
        %3015 = vmatpush1.msra.mxu0 0.0
        %3016 = vmatprep.subr.mxu0 0.0
        %3017 = vmatpush1.msra.mxu0 0.0
        %3018 = vmatprep.subr.mxu0 0.0
        %3019 = vmatpush1.msra.mxu0 0.0
        %3020 = vmatprep.subr.mxu0 0.0
        %3021 = vmatpush1.msra.mxu0 0.0
        %3022 = vmatprep.subr.mxu0 0.0
        %3023 = vmatpush1.msra.mxu0 0.0
        %3024 = vmatprep.subr.mxu0 0.0
        %3025 = vmatpush1.msra.mxu0 0.0
        %3026 = vmatprep.subr.mxu0 0.0
        %3027 = vmatpush1.msra.mxu0 0.0
        %3028 = vmatprep.subr.mxu0 0.0
        %3029 = vmatpush1.msra.mxu0 %v2420
        %3030 = vmatprep.subr.mxu0 0.0
        %3031 = vmatpush2.msra.mxu0 0.0
        %3032 = vmatprep.subr.mxu0 0.0
        %3033 = vmatpush2.msra.mxu0 0.0
        %3034 = vmatprep.subr.mxu0 0.0
        %3035 = vmatpush2.msra.mxu0 0.0
        %3036 = vmatprep.subr.mxu0 0.0
        %3037 = vmatpush2.msra.mxu0 0.0
        %3038 = vmatprep.subr.mxu0 0.0
        %3039 = vmatpush2.msra.mxu0 0.0
        %3040 = vmatprep.subr.mxu0 0.0
        %3041 = vmatpush2.msra.mxu0 0.0
        %3042 = vmatprep.subr.mxu0 0.0
        %3043 = vmatpush2.msra.mxu0 0.0
        %3044 = vmatprep.subr.mxu0 0.0
        %3045 = vmatpush2.msra.mxu0 0.0
        %3046 = vmatprep.subr.mxu0 0.0
        %3047 = vmatpush2.msra.mxu0 0.0
        %3048 = vmatprep.subr.mxu0 0.0
        %3049 = vmatpush2.msra.mxu0 0.0
        %3050 = vmatprep.subr.mxu0 0.0
        %3051 = vmatpush2.msra.mxu0 0.0
        %3052 = vmatprep.subr.mxu0 0.0
        %3053 = vmatpush2.msra.mxu0 0.0
        %3054 = vmatprep.subr.mxu0 0.0
        %3055 = vmatpush2.msra.mxu0 0.0
        %3056 = vmatprep.subr.mxu0 0.0
        %3057 = vmatpush2.msra.mxu0 0.0
        %3058 = vmatprep.subr.mxu0 0.0
        %3059 = vmatpush2.msra.mxu0 0.0
        %3060 = vmatprep.subr.mxu0 0.0
        %3061 = vmatpush2.msra.mxu0 0.0
        %3062 = vmatprep.mubr.f32.mxu0 0.0
        %3063 = vmatmul.mubr.f32.gmra.mxu0 %v2996
        %v3064 = vpop.f32.mrf.mxu0
        %v3065 = vadd.f32 %v2992, %v3064
        %v3066 = vpop.f32.mrf.mxu0
        %3067 = vdwg.mxu0
        %3068 = vrot.lane.b32.xlu0 %v2498, 112
        %v3069 = vpop.permute.xlu0 %3068
        %3070 = vrot.lane.b32.xlu0 %v2591, 112
        %v3071 = vpop.permute.xlu0 %3070
        %v3072 = vsel %vm413, %v3069, 0
        %v3074 = vsel %vm413, %v3071, 0
        %3076 = vmatprep.subr.mxu0 0.0
        %3077 = vmatpush1.xpose.msra.mxu0 0.0
        %3078 = vmatprep.subr.mxu0 0.0
        %3079 = vmatpush1.xpose.msra.mxu0 0.0
        %3080 = vmatprep.subr.mxu0 0.0
        %3081 = vmatpush1.xpose.msra.mxu0 0.0
        %3082 = vmatprep.subr.mxu0 0.0
        %3083 = vmatpush1.xpose.msra.mxu0 0.0
        %3084 = vmatprep.subr.mxu0 0.0
        %3085 = vmatpush1.xpose.msra.mxu0 0.0
        %3086 = vmatprep.subr.mxu0 0.0
        %3087 = vmatpush1.xpose.msra.mxu0 0.0
        %3088 = vmatprep.subr.mxu0 0.0
        %3089 = vmatpush1.xpose.msra.mxu0 0.0
        %3090 = vmatprep.subr.mxu0 0.0
        %3091 = vmatpush1.xpose.msra.mxu0 0.0
        %3092 = vmatprep.subr.mxu0 0.0
        %3093 = vmatpush1.xpose.msra.mxu0 0.0
        %3094 = vmatprep.subr.mxu0 0.0
        %3095 = vmatpush1.xpose.msra.mxu0 0.0
        %3096 = vmatprep.subr.mxu0 0.0
        %3097 = vmatpush1.xpose.msra.mxu0 0.0
        %3098 = vmatprep.subr.mxu0 0.0
        %3099 = vmatpush1.xpose.msra.mxu0 0.0
        %3100 = vmatprep.subr.mxu0 0.0
        %3101 = vmatpush1.xpose.msra.mxu0 0.0
        %3102 = vmatprep.subr.mxu0 0.0
        %3103 = vmatpush1.xpose.msra.mxu0 0.0
        %3104 = vmatprep.subr.mxu0 0.0
        %3105 = vmatpush1.xpose.msra.mxu0 0.0
        %3106 = vmatprep.subr.mxu0 0.0
        %3107 = vmatpush1.xpose.msra.mxu0 %v3074
        %3108 = vmatprep.subr.mxu0 0.0
        %3109 = vmatpush2.xpose.msra.mxu0 0.0
        %3110 = vmatprep.subr.mxu0 0.0
        %3111 = vmatpush2.xpose.msra.mxu0 0.0
        %3112 = vmatprep.subr.mxu0 0.0
        %3113 = vmatpush2.xpose.msra.mxu0 0.0
        %3114 = vmatprep.subr.mxu0 0.0
        %3115 = vmatpush2.xpose.msra.mxu0 0.0
        %3116 = vmatprep.subr.mxu0 0.0
        %3117 = vmatpush2.xpose.msra.mxu0 0.0
        %3118 = vmatprep.subr.mxu0 0.0
        %3119 = vmatpush2.xpose.msra.mxu0 0.0
        %3120 = vmatprep.subr.mxu0 0.0
        %3121 = vmatpush2.xpose.msra.mxu0 0.0
        %3122 = vmatprep.subr.mxu0 0.0
        %3123 = vmatpush2.xpose.msra.mxu0 0.0
        %3124 = vmatprep.subr.mxu0 0.0
        %3125 = vmatpush2.xpose.msra.mxu0 0.0
        %3126 = vmatprep.subr.mxu0 0.0
        %3127 = vmatpush2.xpose.msra.mxu0 0.0
        %3128 = vmatprep.subr.mxu0 0.0
        %3129 = vmatpush2.xpose.msra.mxu0 0.0
        %3130 = vmatprep.subr.mxu0 0.0
        %3131 = vmatpush2.xpose.msra.mxu0 0.0
        %3132 = vmatprep.subr.mxu0 0.0
        %3133 = vmatpush2.xpose.msra.mxu0 0.0
        %3134 = vmatprep.subr.mxu0 0.0
        %3135 = vmatpush2.xpose.msra.mxu0 0.0
        %3136 = vmatprep.subr.mxu0 0.0
        %3137 = vmatpush2.xpose.msra.mxu0 0.0
        %3138 = vmatprep.subr.mxu0 0.0
        %3139 = vmatpush2.xpose.msra.mxu0 0.0
        %3140 = vmatprep.mubr.f32.mxu0 0.0
        %3141 = vmatmul.mubr.f32.gmra.mxu0 %v3072
        %v3142 = vpop.f32.mrf.mxu0
        %v3143 = vadd.f32 0.0, %v3142
        %v3144 = vpop.f32.mrf.mxu0
        %3145 = vdwg.mxu0
        %v3146 = vsel %vm413, %v3143, -inf
        %3147 = vmax.xlane.f32.xlu0 %v3146
        %v3148 = vpop.xlane.xlu0 %3147
        %v3149 = vsub.f32 %v3143, %v3148
        %v3150 = vmul.f32 %v3149, 1.442695
        %v3151 = vpow.pop %v3150
        %v3152 = vsel %vm413, %v3151, 0.0
        %3153 = vadd.xlane.f32.xlu0 %v3152
        %v3154 = vpop.xlane.xlu0 %3153
        %v3155 = vrcp.pop %v3154
        %v3156 = vmul.f32 %v3151, %v3155
        %3157 = vrot.lane.b32.xlu0 %v2591, 80
        %v3158 = vpop.permute.xlu0 %3157
        %v3161 = vsel %vm413, %v3156, 0
        %3163 = vmatprep.subr.mxu0 0.0
        %3164 = vmatpush1.msra.mxu0 0.0
        %3165 = vmatprep.subr.mxu0 0.0
        %3166 = vmatpush1.msra.mxu0 0.0
        %3167 = vmatprep.subr.mxu0 0.0
        %3168 = vmatpush1.msra.mxu0 0.0
        %3169 = vmatprep.subr.mxu0 0.0
        %3170 = vmatpush1.msra.mxu0 0.0
        %3171 = vmatprep.subr.mxu0 0.0
        %3172 = vmatpush1.msra.mxu0 0.0
        %3173 = vmatprep.subr.mxu0 0.0
        %3174 = vmatpush1.msra.mxu0 0.0
        %3175 = vmatprep.subr.mxu0 0.0
        %3176 = vmatpush1.msra.mxu0 0.0
        %3177 = vmatprep.subr.mxu0 0.0
        %3178 = vmatpush1.msra.mxu0 0.0
        %3179 = vmatprep.subr.mxu0 0.0
        %3180 = vmatpush1.msra.mxu0 0.0
        %3181 = vmatprep.subr.mxu0 0.0
        %3182 = vmatpush1.msra.mxu0 0.0
        %3183 = vmatprep.subr.mxu0 0.0
        %3184 = vmatpush1.msra.mxu0 0.0
        %3185 = vmatprep.subr.mxu0 0.0
        %3186 = vmatpush1.msra.mxu0 0.0
        %3187 = vmatprep.subr.mxu0 0.0
        %3188 = vmatpush1.msra.mxu0 0.0
        %3189 = vmatprep.subr.mxu0 0.0
        %3190 = vmatpush1.msra.mxu0 0.0
        %3191 = vmatprep.subr.mxu0 0.0
        %3192 = vmatpush1.msra.mxu0 0.0
        %3193 = vmatprep.subr.mxu0 0.0
        %3194 = vmatpush1.msra.mxu0 %v3158
        %3195 = vmatprep.subr.mxu0 0.0
        %3196 = vmatpush2.msra.mxu0 0.0
        %3197 = vmatprep.subr.mxu0 0.0
        %3198 = vmatpush2.msra.mxu0 0.0
        %3199 = vmatprep.subr.mxu0 0.0
        %3200 = vmatpush2.msra.mxu0 0.0
        %3201 = vmatprep.subr.mxu0 0.0
        %3202 = vmatpush2.msra.mxu0 0.0
        %3203 = vmatprep.subr.mxu0 0.0
        %3204 = vmatpush2.msra.mxu0 0.0
        %3205 = vmatprep.subr.mxu0 0.0
        %3206 = vmatpush2.msra.mxu0 0.0
        %3207 = vmatprep.subr.mxu0 0.0
        %3208 = vmatpush2.msra.mxu0 0.0
        %3209 = vmatprep.subr.mxu0 0.0
        %3210 = vmatpush2.msra.mxu0 0.0
        %3211 = vmatprep.subr.mxu0 0.0
        %3212 = vmatpush2.msra.mxu0 0.0
        %3213 = vmatprep.subr.mxu0 0.0
        %3214 = vmatpush2.msra.mxu0 0.0
        %3215 = vmatprep.subr.mxu0 0.0
        %3216 = vmatpush2.msra.mxu0 0.0
        %3217 = vmatprep.subr.mxu0 0.0
        %3218 = vmatpush2.msra.mxu0 0.0
        %3219 = vmatprep.subr.mxu0 0.0
        %3220 = vmatpush2.msra.mxu0 0.0
        %3221 = vmatprep.subr.mxu0 0.0
        %3222 = vmatpush2.msra.mxu0 0.0
        %3223 = vmatprep.subr.mxu0 0.0
        %3224 = vmatpush2.msra.mxu0 0.0
        %3225 = vmatprep.subr.mxu0 0.0
        %3226 = vmatpush2.msra.mxu0 0.0
        %3227 = vmatprep.mubr.f32.mxu0 0.0
        %3228 = vmatmul.mubr.f32.gmra.mxu0 %v3161
        %v3229 = vpop.f32.mrf.mxu0
        %v3230 = vadd.f32 0.0, %v3229
        %v3231 = vpop.f32.mrf.mxu0
        %3232 = vdwg.mxu0
        %v3234 = vsel %vm413, %v3230, 0
        %3236 = vmatprep.subr.mxu0 0.0
        %3237 = vmatpush1.msra.mxu0 0.0
        %3238 = vmatprep.subr.mxu0 0.0
        %3239 = vmatpush1.msra.mxu0 0.0
        %3240 = vmatprep.subr.mxu0 0.0
        %3241 = vmatpush1.msra.mxu0 0.0
        %3242 = vmatprep.subr.mxu0 0.0
        %3243 = vmatpush1.msra.mxu0 0.0
        %3244 = vmatprep.subr.mxu0 0.0
        %3245 = vmatpush1.msra.mxu0 0.0
        %3246 = vmatprep.subr.mxu0 0.0
        %3247 = vmatpush1.msra.mxu0 0.0
        %3248 = vmatprep.subr.mxu0 0.0
        %3249 = vmatpush1.msra.mxu0 0.0
        %3250 = vmatprep.subr.mxu0 0.0
        %3251 = vmatpush1.msra.mxu0 0.0
        %3252 = vmatprep.subr.mxu0 0.0
        %3253 = vmatpush1.msra.mxu0 0.0
        %3254 = vmatprep.subr.mxu0 0.0
        %3255 = vmatpush1.msra.mxu0 0.0
        %3256 = vmatprep.subr.mxu0 0.0
        %3257 = vmatpush1.msra.mxu0 0.0
        %3258 = vmatprep.subr.mxu0 0.0
        %3259 = vmatpush1.msra.mxu0 0.0
        %3260 = vmatprep.subr.mxu0 0.0
        %3261 = vmatpush1.msra.mxu0 0.0
        %3262 = vmatprep.subr.mxu0 0.0
        %3263 = vmatpush1.msra.mxu0 0.0
        %3264 = vmatprep.subr.mxu0 0.0
        %3265 = vmatpush1.msra.mxu0 0.0
        %3266 = vmatprep.subr.mxu0 0.0
        %3267 = vmatpush1.msra.mxu0 %v2422
        %3268 = vmatprep.subr.mxu0 0.0
        %3269 = vmatpush2.msra.mxu0 0.0
        %3270 = vmatprep.subr.mxu0 0.0
        %3271 = vmatpush2.msra.mxu0 0.0
        %3272 = vmatprep.subr.mxu0 0.0
        %3273 = vmatpush2.msra.mxu0 0.0
        %3274 = vmatprep.subr.mxu0 0.0
        %3275 = vmatpush2.msra.mxu0 0.0
        %3276 = vmatprep.subr.mxu0 0.0
        %3277 = vmatpush2.msra.mxu0 0.0
        %3278 = vmatprep.subr.mxu0 0.0
        %3279 = vmatpush2.msra.mxu0 0.0
        %3280 = vmatprep.subr.mxu0 0.0
        %3281 = vmatpush2.msra.mxu0 0.0
        %3282 = vmatprep.subr.mxu0 0.0
        %3283 = vmatpush2.msra.mxu0 0.0
        %3284 = vmatprep.subr.mxu0 0.0
        %3285 = vmatpush2.msra.mxu0 0.0
        %3286 = vmatprep.subr.mxu0 0.0
        %3287 = vmatpush2.msra.mxu0 0.0
        %3288 = vmatprep.subr.mxu0 0.0
        %3289 = vmatpush2.msra.mxu0 0.0
        %3290 = vmatprep.subr.mxu0 0.0
        %3291 = vmatpush2.msra.mxu0 0.0
        %3292 = vmatprep.subr.mxu0 0.0
        %3293 = vmatpush2.msra.mxu0 0.0
        %3294 = vmatprep.subr.mxu0 0.0
        %3295 = vmatpush2.msra.mxu0 0.0
        %3296 = vmatprep.subr.mxu0 0.0
        %3297 = vmatpush2.msra.mxu0 0.0
        %3298 = vmatprep.subr.mxu0 0.0
        %3299 = vmatpush2.msra.mxu0 0.0
        %3300 = vmatprep.mubr.f32.mxu0 0.0
        %3301 = vmatmul.mubr.f32.gmra.mxu0 %v3234
        %v3302 = vpop.f32.mrf.mxu0
        %v3303 = vadd.f32 0.0, %v3302
        %v3304 = vpop.f32.mrf.mxu0
        %3305 = vdwg.mxu0
        %v3306 = vadd.f32 %v3065, %v3303
        %3307 = vrot.lane.b32.xlu0 %v2498, 104
        %v3308 = vpop.permute.xlu0 %3307
        %3309 = vrot.lane.b32.xlu0 %v2591, 104
        %v3310 = vpop.permute.xlu0 %3309
        %v3311 = vsel %vm413, %v3308, 0
        %v3313 = vsel %vm413, %v3310, 0
        %3315 = vmatprep.subr.mxu0 0.0
        %3316 = vmatpush1.xpose.msra.mxu0 0.0
        %3317 = vmatprep.subr.mxu0 0.0
        %3318 = vmatpush1.xpose.msra.mxu0 0.0
        %3319 = vmatprep.subr.mxu0 0.0
        %3320 = vmatpush1.xpose.msra.mxu0 0.0
        %3321 = vmatprep.subr.mxu0 0.0
        %3322 = vmatpush1.xpose.msra.mxu0 0.0
        %3323 = vmatprep.subr.mxu0 0.0
        %3324 = vmatpush1.xpose.msra.mxu0 0.0
        %3325 = vmatprep.subr.mxu0 0.0
        %3326 = vmatpush1.xpose.msra.mxu0 0.0
        %3327 = vmatprep.subr.mxu0 0.0
        %3328 = vmatpush1.xpose.msra.mxu0 0.0
        %3329 = vmatprep.subr.mxu0 0.0
        %3330 = vmatpush1.xpose.msra.mxu0 0.0
        %3331 = vmatprep.subr.mxu0 0.0
        %3332 = vmatpush1.xpose.msra.mxu0 0.0
        %3333 = vmatprep.subr.mxu0 0.0
        %3334 = vmatpush1.xpose.msra.mxu0 0.0
        %3335 = vmatprep.subr.mxu0 0.0
        %3336 = vmatpush1.xpose.msra.mxu0 0.0
        %3337 = vmatprep.subr.mxu0 0.0
        %3338 = vmatpush1.xpose.msra.mxu0 0.0
        %3339 = vmatprep.subr.mxu0 0.0
        %3340 = vmatpush1.xpose.msra.mxu0 0.0
        %3341 = vmatprep.subr.mxu0 0.0
        %3342 = vmatpush1.xpose.msra.mxu0 0.0
        %3343 = vmatprep.subr.mxu0 0.0
        %3344 = vmatpush1.xpose.msra.mxu0 0.0
        %3345 = vmatprep.subr.mxu0 0.0
        %3346 = vmatpush1.xpose.msra.mxu0 %v3313
        %3347 = vmatprep.subr.mxu0 0.0
        %3348 = vmatpush2.xpose.msra.mxu0 0.0
        %3349 = vmatprep.subr.mxu0 0.0
        %3350 = vmatpush2.xpose.msra.mxu0 0.0
        %3351 = vmatprep.subr.mxu0 0.0
        %3352 = vmatpush2.xpose.msra.mxu0 0.0
        %3353 = vmatprep.subr.mxu0 0.0
        %3354 = vmatpush2.xpose.msra.mxu0 0.0
        %3355 = vmatprep.subr.mxu0 0.0
        %3356 = vmatpush2.xpose.msra.mxu0 0.0
        %3357 = vmatprep.subr.mxu0 0.0
        %3358 = vmatpush2.xpose.msra.mxu0 0.0
        %3359 = vmatprep.subr.mxu0 0.0
        %3360 = vmatpush2.xpose.msra.mxu0 0.0
        %3361 = vmatprep.subr.mxu0 0.0
        %3362 = vmatpush2.xpose.msra.mxu0 0.0
        %3363 = vmatprep.subr.mxu0 0.0
        %3364 = vmatpush2.xpose.msra.mxu0 0.0
        %3365 = vmatprep.subr.mxu0 0.0
        %3366 = vmatpush2.xpose.msra.mxu0 0.0
        %3367 = vmatprep.subr.mxu0 0.0
        %3368 = vmatpush2.xpose.msra.mxu0 0.0
        %3369 = vmatprep.subr.mxu0 0.0
        %3370 = vmatpush2.xpose.msra.mxu0 0.0
        %3371 = vmatprep.subr.mxu0 0.0
        %3372 = vmatpush2.xpose.msra.mxu0 0.0
        %3373 = vmatprep.subr.mxu0 0.0
        %3374 = vmatpush2.xpose.msra.mxu0 0.0
        %3375 = vmatprep.subr.mxu0 0.0
        %3376 = vmatpush2.xpose.msra.mxu0 0.0
        %3377 = vmatprep.subr.mxu0 0.0
        %3378 = vmatpush2.xpose.msra.mxu0 0.0
        %3379 = vmatprep.mubr.f32.mxu0 0.0
        %3380 = vmatmul.mubr.f32.gmra.mxu0 %v3311
        %v3381 = vpop.f32.mrf.mxu0
        %v3382 = vadd.f32 0.0, %v3381
        %v3383 = vpop.f32.mrf.mxu0
        %3384 = vdwg.mxu0
        %v3385 = vsel %vm413, %v3382, -inf
        %3386 = vmax.xlane.f32.xlu0 %v3385
        %v3387 = vpop.xlane.xlu0 %3386
        %v3388 = vsub.f32 %v3382, %v3387
        %v3389 = vmul.f32 %v3388, 1.442695
        %v3390 = vpow.pop %v3389
        %v3391 = vsel %vm413, %v3390, 0.0
        %3392 = vadd.xlane.f32.xlu0 %v3391
        %v3393 = vpop.xlane.xlu0 %3392
        %v3394 = vrcp.pop %v3393
        %v3395 = vmul.f32 %v3390, %v3394
        %3396 = vrot.lane.b32.xlu0 %v2591, 72
        %v3397 = vpop.permute.xlu0 %3396
        %v3400 = vsel %vm413, %v3395, 0
        %3402 = vmatprep.subr.mxu0 0.0
        %3403 = vmatpush1.msra.mxu0 0.0
        %3404 = vmatprep.subr.mxu0 0.0
        %3405 = vmatpush1.msra.mxu0 0.0
        %3406 = vmatprep.subr.mxu0 0.0
        %3407 = vmatpush1.msra.mxu0 0.0
        %3408 = vmatprep.subr.mxu0 0.0
        %3409 = vmatpush1.msra.mxu0 0.0
        %3410 = vmatprep.subr.mxu0 0.0
        %3411 = vmatpush1.msra.mxu0 0.0
        %3412 = vmatprep.subr.mxu0 0.0
        %3413 = vmatpush1.msra.mxu0 0.0
        %3414 = vmatprep.subr.mxu0 0.0
        %3415 = vmatpush1.msra.mxu0 0.0
        %3416 = vmatprep.subr.mxu0 0.0
        %3417 = vmatpush1.msra.mxu0 0.0
        %3418 = vmatprep.subr.mxu0 0.0
        %3419 = vmatpush1.msra.mxu0 0.0
        %3420 = vmatprep.subr.mxu0 0.0
        %3421 = vmatpush1.msra.mxu0 0.0
        %3422 = vmatprep.subr.mxu0 0.0
        %3423 = vmatpush1.msra.mxu0 0.0
        %3424 = vmatprep.subr.mxu0 0.0
        %3425 = vmatpush1.msra.mxu0 0.0
        %3426 = vmatprep.subr.mxu0 0.0
        %3427 = vmatpush1.msra.mxu0 0.0
        %3428 = vmatprep.subr.mxu0 0.0
        %3429 = vmatpush1.msra.mxu0 0.0
        %3430 = vmatprep.subr.mxu0 0.0
        %3431 = vmatpush1.msra.mxu0 0.0
        %3432 = vmatprep.subr.mxu0 0.0
        %3433 = vmatpush1.msra.mxu0 %v3397
        %3434 = vmatprep.subr.mxu0 0.0
        %3435 = vmatpush2.msra.mxu0 0.0
        %3436 = vmatprep.subr.mxu0 0.0
        %3437 = vmatpush2.msra.mxu0 0.0
        %3438 = vmatprep.subr.mxu0 0.0
        %3439 = vmatpush2.msra.mxu0 0.0
        %3440 = vmatprep.subr.mxu0 0.0
        %3441 = vmatpush2.msra.mxu0 0.0
        %3442 = vmatprep.subr.mxu0 0.0
        %3443 = vmatpush2.msra.mxu0 0.0
        %3444 = vmatprep.subr.mxu0 0.0
        %3445 = vmatpush2.msra.mxu0 0.0
        %3446 = vmatprep.subr.mxu0 0.0
        %3447 = vmatpush2.msra.mxu0 0.0
        %3448 = vmatprep.subr.mxu0 0.0
        %3449 = vmatpush2.msra.mxu0 0.0
        %3450 = vmatprep.subr.mxu0 0.0
        %3451 = vmatpush2.msra.mxu0 0.0
        %3452 = vmatprep.subr.mxu0 0.0
        %3453 = vmatpush2.msra.mxu0 0.0
        %3454 = vmatprep.subr.mxu0 0.0
        %3455 = vmatpush2.msra.mxu0 0.0
        %3456 = vmatprep.subr.mxu0 0.0
        %3457 = vmatpush2.msra.mxu0 0.0
        %3458 = vmatprep.subr.mxu0 0.0
        %3459 = vmatpush2.msra.mxu0 0.0
        %3460 = vmatprep.subr.mxu0 0.0
        %3461 = vmatpush2.msra.mxu0 0.0
        %3462 = vmatprep.subr.mxu0 0.0
        %3463 = vmatpush2.msra.mxu0 0.0
        %3464 = vmatprep.subr.mxu0 0.0
        %3465 = vmatpush2.msra.mxu0 0.0
        %3466 = vmatprep.mubr.f32.mxu0 0.0
        %3467 = vmatmul.mubr.f32.gmra.mxu0 %v3400
        %v3468 = vpop.f32.mrf.mxu0
        %v3469 = vadd.f32 0.0, %v3468
        %v3470 = vpop.f32.mrf.mxu0
        %3471 = vdwg.mxu0
        %v3473 = vsel %vm413, %v3469, 0
        %3475 = vmatprep.subr.mxu0 0.0
        %3476 = vmatpush1.msra.mxu0 0.0
        %3477 = vmatprep.subr.mxu0 0.0
        %3478 = vmatpush1.msra.mxu0 0.0
        %3479 = vmatprep.subr.mxu0 0.0
        %3480 = vmatpush1.msra.mxu0 0.0
        %3481 = vmatprep.subr.mxu0 0.0
        %3482 = vmatpush1.msra.mxu0 0.0
        %3483 = vmatprep.subr.mxu0 0.0
        %3484 = vmatpush1.msra.mxu0 0.0
        %3485 = vmatprep.subr.mxu0 0.0
        %3486 = vmatpush1.msra.mxu0 0.0
        %3487 = vmatprep.subr.mxu0 0.0
        %3488 = vmatpush1.msra.mxu0 0.0
        %3489 = vmatprep.subr.mxu0 0.0
        %3490 = vmatpush1.msra.mxu0 0.0
        %3491 = vmatprep.subr.mxu0 0.0
        %3492 = vmatpush1.msra.mxu0 0.0
        %3493 = vmatprep.subr.mxu0 0.0
        %3494 = vmatpush1.msra.mxu0 0.0
        %3495 = vmatprep.subr.mxu0 0.0
        %3496 = vmatpush1.msra.mxu0 0.0
        %3497 = vmatprep.subr.mxu0 0.0
        %3498 = vmatpush1.msra.mxu0 0.0
        %3499 = vmatprep.subr.mxu0 0.0
        %3500 = vmatpush1.msra.mxu0 0.0
        %3501 = vmatprep.subr.mxu0 0.0
        %3502 = vmatpush1.msra.mxu0 0.0
        %3503 = vmatprep.subr.mxu0 0.0
        %3504 = vmatpush1.msra.mxu0 0.0
        %3505 = vmatprep.subr.mxu0 0.0
        %3506 = vmatpush1.msra.mxu0 %v2423
        %3507 = vmatprep.subr.mxu0 0.0
        %3508 = vmatpush2.msra.mxu0 0.0
        %3509 = vmatprep.subr.mxu0 0.0
        %3510 = vmatpush2.msra.mxu0 0.0
        %3511 = vmatprep.subr.mxu0 0.0
        %3512 = vmatpush2.msra.mxu0 0.0
        %3513 = vmatprep.subr.mxu0 0.0
        %3514 = vmatpush2.msra.mxu0 0.0
        %3515 = vmatprep.subr.mxu0 0.0
        %3516 = vmatpush2.msra.mxu0 0.0
        %3517 = vmatprep.subr.mxu0 0.0
        %3518 = vmatpush2.msra.mxu0 0.0
        %3519 = vmatprep.subr.mxu0 0.0
        %3520 = vmatpush2.msra.mxu0 0.0
        %3521 = vmatprep.subr.mxu0 0.0
        %3522 = vmatpush2.msra.mxu0 0.0
        %3523 = vmatprep.subr.mxu0 0.0
        %3524 = vmatpush2.msra.mxu0 0.0
        %3525 = vmatprep.subr.mxu0 0.0
        %3526 = vmatpush2.msra.mxu0 0.0
        %3527 = vmatprep.subr.mxu0 0.0
        %3528 = vmatpush2.msra.mxu0 0.0
        %3529 = vmatprep.subr.mxu0 0.0
        %3530 = vmatpush2.msra.mxu0 0.0
        %3531 = vmatprep.subr.mxu0 0.0
        %3532 = vmatpush2.msra.mxu0 0.0
        %3533 = vmatprep.subr.mxu0 0.0
        %3534 = vmatpush2.msra.mxu0 0.0
        %3535 = vmatprep.subr.mxu0 0.0
        %3536 = vmatpush2.msra.mxu0 0.0
        %3537 = vmatprep.subr.mxu0 0.0
        %3538 = vmatpush2.msra.mxu0 0.0
        %3539 = vmatprep.mubr.f32.mxu0 0.0
        %3540 = vmatmul.mubr.f32.gmra.mxu0 %v3473
        %v3541 = vpop.f32.mrf.mxu0
        %v3542 = vadd.f32 0.0, %v3541
        %v3543 = vpop.f32.mrf.mxu0
        %3544 = vdwg.mxu0
        %v3545 = vadd.f32 %v3306, %v3542
        %v3546 = vlaneseq
        %v3547 = vshrl.u32 %v3546, 7
        %v3548 = vsub.s32 5, %v3547
        %v3549 = vrot.slane %v322, %v3548
        %v3550 = vadd.f32 %v3545, %v3549
        %s3551 = scalar_lea.vmem [#allocation8], 96
        %v3552 = vld [vmem:[%s3551] sm:$0xff]
        %v3553 = vld [vmem:[%s3551 + $0x8] sm:$0xff]
        %v3554 = vld [vmem:[%s3551 + $0x10] sm:$0xff]
        %v3555 = vld [vmem:[%s3551 + $0x18] sm:$0xff]
        %s3556 = scalar_lea.vmem [#allocation8], 128
        %v3557 = vld [vmem:[%s3556] sm:$0xff]
        %v3558 = vld [vmem:[%s3556 + $0x8] sm:$0xff]
        %v3559 = vld [vmem:[%s3556 + $0x10] sm:$0xff]
        %v3560 = vld [vmem:[%s3556 + $0x18] sm:$0xff]
        %3561 = vmatprep.subr.mxu0 0.0
        %3562 = vmatpush1.msra.mxu0 0.0
        %3563 = vmatprep.subr.mxu0 0.0
        %3564 = vmatpush1.msra.mxu0 0.0
        %3565 = vmatprep.subr.mxu0 0.0
        %3566 = vmatpush1.msra.mxu0 0.0
        %3567 = vmatprep.subr.mxu0 0.0
        %3568 = vmatpush1.msra.mxu0 0.0
        %3569 = vmatprep.subr.mxu0 0.0
        %3570 = vmatpush1.msra.mxu0 0.0
        %3571 = vmatprep.subr.mxu0 0.0
        %3572 = vmatpush1.msra.mxu0 0.0
        %3573 = vmatprep.subr.mxu0 0.0
        %3574 = vmatpush1.msra.mxu0 0.0
        %3575 = vmatprep.subr.mxu0 0.0
        %3576 = vmatpush1.msra.mxu0 0.0
        %3577 = vmatprep.subr.mxu0 0.0
        %3578 = vmatpush1.msra.mxu0 0.0
        %3579 = vmatprep.subr.mxu0 0.0
        %3580 = vmatpush1.msra.mxu0 0.0
        %3581 = vmatprep.subr.mxu0 0.0
        %3582 = vmatpush1.msra.mxu0 0.0
        %3583 = vmatprep.subr.mxu0 0.0
        %3584 = vmatpush1.msra.mxu0 0.0
        %3585 = vmatprep.subr.mxu0 0.0
        %3586 = vmatpush1.msra.mxu0 %v3560
        %3587 = vmatprep.subr.mxu0 0.0
        %3588 = vmatpush1.msra.mxu0 %v3559
        %3589 = vmatprep.subr.mxu0 0.0
        %3590 = vmatpush1.msra.mxu0 %v3558
        %3591 = vmatprep.subr.mxu0 0.0
        %3592 = vmatpush1.msra.mxu0 %v3557
        %3593 = vmatprep.subr.mxu0 0.0
        %3594 = vmatpush2.msra.mxu0 0.0
        %3595 = vmatprep.subr.mxu0 0.0
        %3596 = vmatpush2.msra.mxu0 0.0
        %3597 = vmatprep.subr.mxu0 0.0
        %3598 = vmatpush2.msra.mxu0 0.0
        %3599 = vmatprep.subr.mxu0 0.0
        %3600 = vmatpush2.msra.mxu0 0.0
        %3601 = vmatprep.subr.mxu0 0.0
        %3602 = vmatpush2.msra.mxu0 0.0
        %3603 = vmatprep.subr.mxu0 0.0
        %3604 = vmatpush2.msra.mxu0 0.0
        %3605 = vmatprep.subr.mxu0 0.0
        %3606 = vmatpush2.msra.mxu0 0.0
        %3607 = vmatprep.subr.mxu0 0.0
        %3608 = vmatpush2.msra.mxu0 0.0
        %3609 = vmatprep.subr.mxu0 0.0
        %3610 = vmatpush2.msra.mxu0 0.0
        %3611 = vmatprep.subr.mxu0 0.0
        %3612 = vmatpush2.msra.mxu0 0.0
        %3613 = vmatprep.subr.mxu0 0.0
        %3614 = vmatpush2.msra.mxu0 0.0
        %3615 = vmatprep.subr.mxu0 0.0
        %3616 = vmatpush2.msra.mxu0 0.0
        %3617 = vmatprep.subr.mxu0 0.0
        %3618 = vmatpush2.msra.mxu0 0.0
        %3619 = vmatprep.subr.mxu0 0.0
        %3620 = vmatpush2.msra.mxu0 0.0
        %3621 = vmatprep.subr.mxu0 0.0
        %3622 = vmatpush2.msra.mxu0 0.0
        %3623 = vmatprep.subr.mxu0 0.0
        %3624 = vmatpush2.msra.mxu0 0.0
        %3625 = vmatprep.mubr.f32.mxu0 0.0
        %3626 = vmatmul.mubr.f32.gmra.mxu0 %v2522
        %v3627 = vpop.f32.mrf.mxu0
        %v3628 = vadd.f32 0.0, %v3627
        %v3629 = vpop.f32.mrf.mxu0
        %3630 = vdwg.mxu0
        %v3632 = vsel %vm336, %v3550, 0
        %3634 = vmatprep.subr.mxu0 0.0
        %3635 = vmatpush1.msra.mxu0 0.0
        %3636 = vmatprep.subr.mxu0 0.0
        %3637 = vmatpush1.msra.mxu0 0.0
        %3638 = vmatprep.subr.mxu0 0.0
        %3639 = vmatpush1.msra.mxu0 0.0
        %3640 = vmatprep.subr.mxu0 0.0
        %3641 = vmatpush1.msra.mxu0 0.0
        %3642 = vmatprep.subr.mxu0 0.0
        %3643 = vmatpush1.msra.mxu0 0.0
        %3644 = vmatprep.subr.mxu0 0.0
        %3645 = vmatpush1.msra.mxu0 0.0
        %3646 = vmatprep.subr.mxu0 0.0
        %3647 = vmatpush1.msra.mxu0 0.0
        %3648 = vmatprep.subr.mxu0 0.0
        %3649 = vmatpush1.msra.mxu0 0.0
        %3650 = vmatprep.subr.mxu0 0.0
        %3651 = vmatpush1.msra.mxu0 0.0
        %3652 = vmatprep.subr.mxu0 0.0
        %3653 = vmatpush1.msra.mxu0 0.0
        %3654 = vmatprep.subr.mxu0 0.0
        %3655 = vmatpush1.msra.mxu0 0.0
        %3656 = vmatprep.subr.mxu0 0.0
        %3657 = vmatpush1.msra.mxu0 0.0
        %3658 = vmatprep.subr.mxu0 0.0
        %3659 = vmatpush1.msra.mxu0 %v3555
        %3660 = vmatprep.subr.mxu0 0.0
        %3661 = vmatpush1.msra.mxu0 %v3554
        %3662 = vmatprep.subr.mxu0 0.0
        %3663 = vmatpush1.msra.mxu0 %v3553
        %3664 = vmatprep.subr.mxu0 0.0
        %3665 = vmatpush1.msra.mxu0 %v3552
        %3666 = vmatprep.subr.mxu0 0.0
        %3667 = vmatpush2.msra.mxu0 0.0
        %3668 = vmatprep.subr.mxu0 0.0
        %3669 = vmatpush2.msra.mxu0 0.0
        %3670 = vmatprep.subr.mxu0 0.0
        %3671 = vmatpush2.msra.mxu0 0.0
        %3672 = vmatprep.subr.mxu0 0.0
        %3673 = vmatpush2.msra.mxu0 0.0
        %3674 = vmatprep.subr.mxu0 0.0
        %3675 = vmatpush2.msra.mxu0 0.0
        %3676 = vmatprep.subr.mxu0 0.0
        %3677 = vmatpush2.msra.mxu0 0.0
        %3678 = vmatprep.subr.mxu0 0.0
        %3679 = vmatpush2.msra.mxu0 0.0
        %3680 = vmatprep.subr.mxu0 0.0
        %3681 = vmatpush2.msra.mxu0 0.0
        %3682 = vmatprep.subr.mxu0 0.0
        %3683 = vmatpush2.msra.mxu0 0.0
        %3684 = vmatprep.subr.mxu0 0.0
        %3685 = vmatpush2.msra.mxu0 0.0
        %3686 = vmatprep.subr.mxu0 0.0
        %3687 = vmatpush2.msra.mxu0 0.0
        %3688 = vmatprep.subr.mxu0 0.0
        %3689 = vmatpush2.msra.mxu0 0.0
        %3690 = vmatprep.subr.mxu0 0.0
        %3691 = vmatpush2.msra.mxu0 0.0
        %3692 = vmatprep.subr.mxu0 0.0
        %3693 = vmatpush2.msra.mxu0 0.0
        %3694 = vmatprep.subr.mxu0 0.0
        %3695 = vmatpush2.msra.mxu0 0.0
        %3696 = vmatprep.subr.mxu0 0.0
        %3697 = vmatpush2.msra.mxu0 0.0
        %3698 = vmatprep.mubr.f32.mxu0 0.0
        %3699 = vmatmul.mubr.f32.gmra.mxu0 %v3632
        %v3700 = vpop.f32.mrf.mxu0
        %v3701 = vadd.f32 %v3628, %v3700
        %v3702 = vpop.f32.mrf.mxu0
        %3703 = vdwg.mxu0
        %v3704 = vlaneseq
        %v3705 = vshrl.u32 %v3704, 7
        %v3706 = vsub.s32 6, %v3705
        %v3707 = vrot.slane %v322, %v3706
        %v3708 = vadd.f32 %v3701, %v3707
        %s3709 = scalar_lea.vmem [#allocation8], 160
        %v3710 = vld [vmem:[%s3709] sm:$0xff]
        %v3711 = vld [vmem:[%s3709 + $0x8] sm:$0xff]
        %v3712 = vld [vmem:[%s3709 + $0x10] sm:$0xff]
        %v3713 = vld [vmem:[%s3709 + $0x18] sm:$0xff]
        %v3714 = vlaneseq
        %v3715 = vshrl.u32 %v3714, 7
        %v3716 = vsub.s32 7, %v3715
        %v3717 = vrot.slane %v322, %v3716
        %3718 = vmatprep.subr.mxu0 0.0
        %3719 = vmatpush1.msra.mxu0 0.0
        %3720 = vmatprep.subr.mxu0 0.0
        %3721 = vmatpush1.msra.mxu0 0.0
        %3722 = vmatprep.subr.mxu0 0.0
        %3723 = vmatpush1.msra.mxu0 0.0
        %3724 = vmatprep.subr.mxu0 0.0
        %3725 = vmatpush1.msra.mxu0 0.0
        %3726 = vmatprep.subr.mxu0 0.0
        %3727 = vmatpush1.msra.mxu0 0.0
        %3728 = vmatprep.subr.mxu0 0.0
        %3729 = vmatpush1.msra.mxu0 0.0
        %3730 = vmatprep.subr.mxu0 0.0
        %3731 = vmatpush1.msra.mxu0 0.0
        %3732 = vmatprep.subr.mxu0 0.0
        %3733 = vmatpush1.msra.mxu0 0.0
        %3734 = vmatprep.subr.mxu0 0.0
        %3735 = vmatpush1.msra.mxu0 0.0
        %3736 = vmatprep.subr.mxu0 0.0
        %3737 = vmatpush1.msra.mxu0 0.0
        %3738 = vmatprep.subr.mxu0 0.0
        %3739 = vmatpush1.msra.mxu0 0.0
        %3740 = vmatprep.subr.mxu0 0.0
        %3741 = vmatpush1.msra.mxu0 0.0
        %3742 = vmatprep.subr.mxu0 0.0
        %3743 = vmatpush1.msra.mxu0 %v3713
        %3744 = vmatprep.subr.mxu0 0.0
        %3745 = vmatpush1.msra.mxu0 %v3712
        %3746 = vmatprep.subr.mxu0 0.0
        %3747 = vmatpush1.msra.mxu0 %v3711
        %3748 = vmatprep.subr.mxu0 0.0
        %3749 = vmatpush1.msra.mxu0 %v3710
        %3750 = vmatprep.subr.mxu0 0.0
        %3751 = vmatpush2.msra.mxu0 0.0
        %3752 = vmatprep.subr.mxu0 0.0
        %3753 = vmatpush2.msra.mxu0 0.0
        %3754 = vmatprep.subr.mxu0 0.0
        %3755 = vmatpush2.msra.mxu0 0.0
        %3756 = vmatprep.subr.mxu0 0.0
        %3757 = vmatpush2.msra.mxu0 0.0
        %3758 = vmatprep.subr.mxu0 0.0
        %3759 = vmatpush2.msra.mxu0 0.0
        %3760 = vmatprep.subr.mxu0 0.0
        %3761 = vmatpush2.msra.mxu0 0.0
        %3762 = vmatprep.subr.mxu0 0.0
        %3763 = vmatpush2.msra.mxu0 0.0
        %3764 = vmatprep.subr.mxu0 0.0
        %3765 = vmatpush2.msra.mxu0 0.0
        %3766 = vmatprep.subr.mxu0 0.0
        %3767 = vmatpush2.msra.mxu0 0.0
        %3768 = vmatprep.subr.mxu0 0.0
        %3769 = vmatpush2.msra.mxu0 0.0
        %3770 = vmatprep.subr.mxu0 0.0
        %3771 = vmatpush2.msra.mxu0 0.0
        %3772 = vmatprep.subr.mxu0 0.0
        %3773 = vmatpush2.msra.mxu0 0.0
        %3774 = vmatprep.subr.mxu0 0.0
        %3775 = vmatpush2.msra.mxu0 0.0
        %3776 = vmatprep.subr.mxu0 0.0
        %3777 = vmatpush2.msra.mxu0 0.0
        %3778 = vmatprep.subr.mxu0 0.0
        %3779 = vmatpush2.msra.mxu0 0.0
        %3780 = vmatprep.subr.mxu0 0.0
        %3781 = vmatpush2.msra.mxu0 0.0
        %3782 = vmatprep.mubr.f32.mxu0 0.0
        %3783 = vmatmul.mubr.f32.gmra.mxu0 %v338
        %v3784 = vpop.f32.mrf.mxu0
        %v3785 = vadd.f32 %v3717, %v3784
        %v3786 = vpop.f32.mrf.mxu0
        %3787 = vdwg.mxu0
        %v3788 = vmax.f32 %v3785, 0.0
        %v3789 = vlaneseq
        %v3790 = vshrl.u32 %v3789, 7
        %v3791 = vsub.s32 1, %v3790
        %v3792 = vrot.slane %v323, %v3791
        %v3793 = vmul.f32 %v3788, %v3792
        %v3794 = vsel %vm336, %v3793, 0.0
        %3795 = vadd.xlane.f32.xlu0 %v3794
        %v3796 = vpop.xlane.xlu0 %3795
        %v3797 = vlaneseq
        %v3798 = vshrl.u32 %v3797, 7
        %v3799 = vsub.s32 3, %v3798
        %v3800 = vrot.slane %v323, %v3799
        %v3801 = vadd.f32 %v3796, %v3800
        %v3802 = vxor.u32 %v3801, 2147483648
        %v3803 = vmul.f32 %v3802, 1.442695
        %v3804 = vpow.pop %v3803
        %v3805 = vadd.f32 %v3804, 1.0
        %v3806 = vrcp.pop %v3805
        %v3807 = vmul.f32 1.0, %v3806
        %s3808 = scalar_lea.vmem [#allocation8], 192
        %v3809 = vld [vmem:[%s3808] sm:$0xff]
        %v3810 = vld [vmem:[%s3808 + $0x8] sm:$0xff]
        %v3811 = vld [vmem:[%s3808 + $0x10] sm:$0xff]
        %v3812 = vld [vmem:[%s3808 + $0x18] sm:$0xff]
        %v3813 = vlaneseq
        %v3814 = vshrl.u32 %v3813, 7
        %v3815 = vsub.s32 0, %v3814
        %v3816 = vrot.slane %v323, %v3815
        %3817 = vmatprep.subr.mxu0 0.0
        %3818 = vmatpush1.msra.mxu0 0.0
        %3819 = vmatprep.subr.mxu0 0.0
        %3820 = vmatpush1.msra.mxu0 0.0
        %3821 = vmatprep.subr.mxu0 0.0
        %3822 = vmatpush1.msra.mxu0 0.0
        %3823 = vmatprep.subr.mxu0 0.0
        %3824 = vmatpush1.msra.mxu0 0.0
        %3825 = vmatprep.subr.mxu0 0.0
        %3826 = vmatpush1.msra.mxu0 0.0
        %3827 = vmatprep.subr.mxu0 0.0
        %3828 = vmatpush1.msra.mxu0 0.0
        %3829 = vmatprep.subr.mxu0 0.0
        %3830 = vmatpush1.msra.mxu0 0.0
        %3831 = vmatprep.subr.mxu0 0.0
        %3832 = vmatpush1.msra.mxu0 0.0
        %3833 = vmatprep.subr.mxu0 0.0
        %3834 = vmatpush1.msra.mxu0 0.0
        %3835 = vmatprep.subr.mxu0 0.0
        %3836 = vmatpush1.msra.mxu0 0.0
        %3837 = vmatprep.subr.mxu0 0.0
        %3838 = vmatpush1.msra.mxu0 0.0
        %3839 = vmatprep.subr.mxu0 0.0
        %3840 = vmatpush1.msra.mxu0 0.0
        %3841 = vmatprep.subr.mxu0 0.0
        %3842 = vmatpush1.msra.mxu0 %v3812
        %3843 = vmatprep.subr.mxu0 0.0
        %3844 = vmatpush1.msra.mxu0 %v3811
        %3845 = vmatprep.subr.mxu0 0.0
        %3846 = vmatpush1.msra.mxu0 %v3810
        %3847 = vmatprep.subr.mxu0 0.0
        %3848 = vmatpush1.msra.mxu0 %v3809
        %3849 = vmatprep.subr.mxu0 0.0
        %3850 = vmatpush2.msra.mxu0 0.0
        %3851 = vmatprep.subr.mxu0 0.0
        %3852 = vmatpush2.msra.mxu0 0.0
        %3853 = vmatprep.subr.mxu0 0.0
        %3854 = vmatpush2.msra.mxu0 0.0
        %3855 = vmatprep.subr.mxu0 0.0
        %3856 = vmatpush2.msra.mxu0 0.0
        %3857 = vmatprep.subr.mxu0 0.0
        %3858 = vmatpush2.msra.mxu0 0.0
        %3859 = vmatprep.subr.mxu0 0.0
        %3860 = vmatpush2.msra.mxu0 0.0
        %3861 = vmatprep.subr.mxu0 0.0
        %3862 = vmatpush2.msra.mxu0 0.0
        %3863 = vmatprep.subr.mxu0 0.0
        %3864 = vmatpush2.msra.mxu0 0.0
        %3865 = vmatprep.subr.mxu0 0.0
        %3866 = vmatpush2.msra.mxu0 0.0
        %3867 = vmatprep.subr.mxu0 0.0
        %3868 = vmatpush2.msra.mxu0 0.0
        %3869 = vmatprep.subr.mxu0 0.0
        %3870 = vmatpush2.msra.mxu0 0.0
        %3871 = vmatprep.subr.mxu0 0.0
        %3872 = vmatpush2.msra.mxu0 0.0
        %3873 = vmatprep.subr.mxu0 0.0
        %3874 = vmatpush2.msra.mxu0 0.0
        %3875 = vmatprep.subr.mxu0 0.0
        %3876 = vmatpush2.msra.mxu0 0.0
        %3877 = vmatprep.subr.mxu0 0.0
        %3878 = vmatpush2.msra.mxu0 0.0
        %3879 = vmatprep.subr.mxu0 0.0
        %3880 = vmatpush2.msra.mxu0 0.0
        %3881 = vmatprep.mubr.f32.mxu0 0.0
        %3882 = vmatmul.mubr.f32.gmra.mxu0 %v1384
        %v3883 = vpop.f32.mrf.mxu0
        %v3884 = vadd.f32 %v3816, %v3883
        %v3885 = vpop.f32.mrf.mxu0
        %3886 = vdwg.mxu0
        %v3887 = vmax.f32 %v3884, 0.0
        %v3888 = vlaneseq
        %v3889 = vshrl.u32 %v3888, 7
        %v3890 = vsub.s32 2, %v3889
        %v3891 = vrot.slane %v323, %v3890
        %v3892 = vmul.f32 %v3887, %v3891
        %v3893 = vsel %vm336, %v3892, 0.0
        %3894 = vadd.xlane.f32.xlu0 %v3893
        %v3895 = vpop.xlane.xlu0 %3894
        %v3896 = vlaneseq
        %v3897 = vshrl.u32 %v3896, 7
        %v3898 = vsub.s32 4, %v3897
        %v3899 = vrot.slane %v323, %v3898
        %v3900 = vadd.f32 %v3895, %v3899
        %v3901 = vxor.u32 %v3900, 2147483648
        %v3902 = vmul.f32 %v3901, 1.442695
        %v3903 = vpow.pop %v3902
        %v3904 = vadd.f32 %v3903, 1.0
        %v3905 = vrcp.pop %v3904
        %v3906 = vmul.f32 1.0, %v3905
        %3908 = vset.pattern.permute.xlu0 0
        %3909 = vperm.xlu0 %3908, %v3807
        %v3910 = vpop.permute.xlu0 %3909
        %v3912 = vmul.f32 %v3910, %v320
        %v3913 = vadd.f32 %v3708, %v3912
        %3915 = vset.pattern.permute.xlu0 0
        %3916 = vperm.xlu0 %3915, %v3906
        %v3917 = vpop.permute.xlu0 %3916
        %v3919 = vmul.f32 %v3917, %v321
        %v3920 = vadd.f32 %v3913, %v3919
        %3921 = vst.msk [vmem:[%s319] sm:$0xff] %vm336, %v3920
        %s3922 = sand.u32 %s149, 1
        %s3923 = scalar_lea.sflag [#allocation4], %s3922
        %s3924 = sand.u32 %s149, 1
        %s3925 = smul.addr %s3924, 8
        %s3926 = scalar_lea.vmem [#allocation11], %s3925
        // Predicated region
        $region61: #{tpu_custom_call.1} parent=39 // pred_check
          %p3927 = pneg %p159
        $region62: #{tpu_custom_call.1} parent=39 // pred_check_branch
          %3929 = sbr.rel (%p3927) target = $region64
        $region63: #{tpu_custom_call.1} parent=39 // pred_region
          %s3931 = ssub.s32 128, 128
          %3932 = vsyncadd %s3923, %s3931
          %s3933 = smul.addr %s26, 128
          %s3934 = scalar_lea.hbm %s5, %s3933
          %s3936 = sshll.u32 %s3926, 4
          %s3937 = int_to_ptr.vmem [resolvable:$true] %s3936
          %3939 = dma.vmem_to_hbm [thread:$0]  %s3937, 128, %s3934, %s3923
        $region64: #{tpu_custom_call.1} parent=39 // pred_fallthru
          _
      $region40: #{tpu_custom_call.1} parent=5 // pred_fallthru
        _
      %p3940 = scmp.le.s32.totalorder 2, %s21
      // Predicated region
      $region65: #{tpu_custom_call.1} parent=5 // pred_check
        %p3941 = pneg %p3940
      $region66: #{tpu_custom_call.1} parent=5 // pred_check_branch
        %3943 = sbr.rel (%p3941) target = $region68
      $region67: #{tpu_custom_call.1} parent=5 // pred_region
        %s3944 = ssub.s32 %s21, 2
        // Predicated region
        $region69: #{tpu_custom_call.1} parent=67 // pred_check
          %p3945 = pneg %p165
        $region70: #{tpu_custom_call.1} parent=67 // pred_check_branch
          %3947 = sbr.rel (%p3945) target = $region72
        $region71: #{tpu_custom_call.1} parent=67 // pred_region
          %s3948 = sand.u32 %s150, 1
          %s3949 = scalar_lea.sflag [#allocation4], %s3948
          %s3950 = sand.u32 %s150, 1
          %s3951 = smul.addr %s3950, 8
          %s3952 = scalar_lea.vmem [#allocation11], %s3951
          %3953 = dma.done %s3949, 128
        $region72: #{tpu_custom_call.1} parent=67 // pred_fallthru
          _
      $region68: #{tpu_custom_call.1} parent=5 // pred_fallthru
        _
    $region6: #{tpu_custom_call.1} parent=1 // loop_footer
      %s25 = sadd.s32 1, %s21
    $region7: #{tpu_custom_call.1} parent=1 // loop_footer_branch
      %20 = sbr.rel target = $region3
    $region8: #{tpu_custom_call.1} parent=1 // loop_exit
      _
    %3954 = vsyncpa [#allocation3], 1
    %s3955 = scalar_lea.sflag [#allocation3], 1
    %3956 = vsyncpa %s3955, 1
    %3957 = vsyncpa [#allocation6], 1
    %s3958 = scalar_lea.sflag [#allocation6], 1
    %3959 = vsyncpa %s3958, 1
    %3960 = vsyncpa [#allocation9], 1
    %3961 = vsyncpa [#allocation4], 1
    %s3962 = scalar_lea.sflag [#allocation4], 1
    %3963 = vsyncpa %s3962, 1

</llo_original>
